<compile_context>
chip_gen: v7x
topology: tpu7x:2x2x1
jax: 0.10.0
libtpu: 0.0.40
codegen_flags: <defaults>
</compile_context>

<pallas_src>
import math
from functools import partial

import jax
import jax.numpy as jnp
from jax.experimental import pallas as pl
from jax.experimental.pallas import tpu as pltpu

EPS = 1e-6                       # nn.LayerNorm(eps=1e-06)
_SQRT_HALF = 0.7071067811865476  # 1/sqrt(2)


# ----------------------------------------------------------------------------
# In-kernel math helpers
# ----------------------------------------------------------------------------
def _erf_poly(x):
    """Abramowitz & Stegun 7.1.26 erf approximation (|abs err| <= 1.5e-7).

    Built only from exp / mul / add / where so it does not depend on a native
    erf lowering inside Mosaic; numerically indistinguishable from exact erf
    at the tolerances used here.
    """
    a1, a2, a3, a4, a5 = (0.254829592, -0.284496736, 1.421413741,
                          -1.453152027, 1.061405429)
    ax = jnp.abs(x)
    t = 1.0 / (1.0 + 0.3275911 * ax)
    poly = ((((a5 * t + a4) * t + a3) * t + a2) * t + a1) * t
    e = 1.0 - poly * jnp.exp(-ax * ax)
    return jnp.where(x >= 0, e, -e)


def _gelu_exact(x):
    # nn.GELU default = exact erf formulation (kept for PyTorch parity).
    return 0.5 * x * (1.0 + _erf_poly(x * _SQRT_HALF))


def _layer_norm_cols(x, gamma, beta, inv_c):
    """LayerNorm over the channel axis (axis 0) of a channel-major (C, N) slab."""
    mu = jnp.sum(x, axis=0, keepdims=True) * inv_c          # (1, N)
    xc = x - mu
    var = jnp.sum(xc * xc, axis=0, keepdims=True) * inv_c   # (1, N)
    return xc * jax.lax.rsqrt(var + EPS) * gamma + beta     # gamma/beta: (C, 1)


# ----------------------------------------------------------------------------
# Fused encoder kernel: one grid step = (batch element b, layer l)
# ----------------------------------------------------------------------------
def _encoder_kernel(num_heads,
                    x_ref,       # (1, C, N)            channel-major tokens
                    slab_ref,    # (1, rows, 8)  f32    packed small params
                    qkvb_ref,    # (1, 3H, D, 1) f32    qkv bias (q pre-scaled)
                    wqkv_ref,    # (1, 3H, D, C) bf16   qkv weight (q pre-scaled)
                    wproj_ref,   # (1, H, C, D)  bf16   proj weight per head
                    wfc1_ref,    # (1, hidden, C) bf16
                    wfc2_ref,    # (1, C, hidden) bf16
                    out_ref,     # (1, C, N)
                    x_scr):      # (C, N) f32 VMEM residual accumulator
    l = pl.program_id(1)
    last = pl.num_programs(1) - 1

    @pl.when(l == 0)
    def _():
        x_scr[...] = x_ref[0].astype(jnp.float32)

    _, C, N = x_ref.shape
    H = num_heads
    D = C // H
    hidden = wfc1_ref.shape[1]
    inv_c = 1.0 / C

    x = x_scr[...]                                # (C, N) f32 residual stream

    # --- unpack per-layer parameters (loaded once per layer step) ---
    slab = slab_ref[0]                            # (rows, 8) f32
    g1, b1 = slab[0:C, 0:1], slab[0:C, 1:2]
    g2, b2 = slab[0:C, 2:3], slab[0:C, 3:4]
    b_proj = slab[0:C, 4:5]
    b_fc2 = slab[0:C, 5:6]
    b_fc1 = slab[0:hidden, 6:7]
    b_qkv = qkvb_ref[0]                           # (3H, D, 1) f32
    w_qkv = wqkv_ref[0]                           # (3H, D, C) bf16
    w_proj = wproj_ref[0]                         # (H, C, D)  bf16
    w_fc1 = wfc1_ref[0]                           # (hidden, C) bf16
    w_fc2 = wfc2_ref[0]                           # (C, hidden) bf16
    cdt = w_qkv.dtype                             # MXU operand dtype (bf16)

    # ---- global attention branch: x + proj(softmax(q k^T / sqrt(d)) v) ----
    h = _layer_norm_cols(x, g1, b1, inv_c)                         # (C, N) f32
    hb = h.astype(cdt)
    xb = jnp.broadcast_to(hb[None], (3 * H, C, N))                 # (3H, C, N)

    # qkv[h, d, n] = sum_c W[h, d, c] * h[c, n]   (scale folded into q weights)
    qkv = jax.lax.dot_general(
        w_qkv, xb, (((2,), (1,)), ((0,), (0,))),
        preferred_element_type=jnp.float32) + b_qkv                # (3H, D, N)
    q = qkv[0:H].astype(cdt)                                       # (H, D, N)
    k = qkv[H:2 * H].astype(cdt)
    v = qkv[2 * H:3 * H].astype(cdt)

    # s[h, n, m] = sum_d q[h, d, n] * k[h, d, m]
    s = jax.lax.dot_general(q, k, (((1,), (1,)), ((0,), (0,))),
                            preferred_element_type=jnp.float32)    # (H, N, N)
    s = s - jnp.max(s, axis=-1, keepdims=True)
    p = jnp.exp(s).astype(cdt)                                     # (H, N, N)

    # Un-normalized output and softmax denominators.  The denominator matvec
    # (ones row) lands directly in (H, 1, N) lane-major layout, so the
    # normalization is applied to the small (H, D, N) tensor, not to p.
    o = jax.lax.dot_general(v, p, (((2,), (2,)), ((0,), (0,))),
                            preferred_element_type=jnp.float32)    # (H, D, N)
    ones_row = jnp.ones((H, 1, N), cdt)
    denom = jax.lax.dot_general(ones_row, p, (((2,), (2,)), ((0,), (0,))),
                                preferred_element_type=jnp.float32)  # (H, 1, N)
    o = o * pl.reciprocal(denom, approx=True)

    # Head concat folded into a batched projection + leading-axis sum:
    # oc[h, c, n] = sum_d Wp[h, c, d] * o[h, d, n]
    oc = jax.lax.dot_general(w_proj, o.astype(cdt),
                             (((2,), (1,)), ((0,), (0,))),
                             preferred_element_type=jnp.float32)   # (H, C, N)
    x = x + jnp.sum(oc, axis=0) + b_proj          # ls1 / drop_path1 = Identity

    # ---- MLP branch: x + fc2(gelu(fc1(LN(x)))) ----
    h2 = _layer_norm_cols(x, g2, b2, inv_c)
    y = jnp.dot(w_fc1, h2.astype(cdt),
                preferred_element_type=jnp.float32) + b_fc1        # (hidden, N)
    y = _gelu_exact(y)
    y = jnp.dot(w_fc2, y.astype(cdt),
                preferred_element_type=jnp.float32) + b_fc2        # (C, N)
    x = x + y                                     # ls2 / drop_path2 = Identity

    x_scr[...] = x

    # Output block index only depends on b, so the HBM writeback happens after
    # the last layer of each batch element (standard accumulator pattern).
    @pl.when(l == last)
    def _():
        out_ref[0] = x.astype(out_ref.dtype)


# ----------------------------------------------------------------------------
# Host-side parameter packing (PyTorch (out, in) weights -> kernel operands)
# ----------------------------------------------------------------------------
def pack_params(params, num_heads, matmul_dtype=jnp.bfloat16):
    qkv_w = params["qkv_w"]                       # (depth, 3C, C)
    depth, _, C = qkv_w.shape
    H = num_heads
    D = C // H
    hidden = params["fc1_w"].shape[1]
    scale = 1.0 / math.sqrt(D)

    # qkv weight/bias split per head; attention scale folded into the q block.
    w = qkv_w.reshape(depth, 3, H, D, C)
    w = w.at[:, 0].multiply(scale)
    w_qkv_h = w.reshape(depth, 3 * H, D, C).astype(matmul_dtype)
    b = params["qkv_b"].reshape(depth, 3, H, D)
    b = b.at[:, 0].multiply(scale)
    qkv_b_h = b.reshape(depth, 3 * H, D)[..., None].astype(jnp.float32)

    # proj weight as (depth, H, C, D): column block h*D:(h+1)*D per head.
    w_p_h = (params["proj_w"].reshape(depth, C, H, D)
             .transpose(0, 2, 1, 3).astype(matmul_dtype))

    w_fc1 = params["fc1_w"].astype(matmul_dtype)  # (depth, hidden, C)
    w_fc2 = params["fc2_w"].astype(matmul_dtype)  # (depth, C, hidden)

    # Pack all remaining small f32 params into one per-layer slab (columns).
    rows = max(hidden, C)
    slab = jnp.zeros((depth, rows, 8), jnp.float32)
    slab = slab.at[:, :C, 0].set(params["ln1_w"])
    slab = slab.at[:, :C, 1].set(params["ln1_b"])
    slab = slab.at[:, :C, 2].set(params["ln2_w"])
    slab = slab.at[:, :C, 3].set(params["ln2_b"])
    slab = slab.at[:, :C, 4].set(params["proj_b"])
    slab = slab.at[:, :C, 5].set(params["fc2_b"])
    slab = slab.at[:, :hidden, 6].set(params["fc1_b"])

    return dict(slab=slab, qkv_b=qkv_b_h, qkv_w=w_qkv_h, proj_w=w_p_h,
                fc1_w=w_fc1, fc2_w=w_fc2)


# ----------------------------------------------------------------------------
# Public wrapper
# ----------------------------------------------------------------------------
def point_transformer_encoder(x, pos, params, num_heads=4, k=10,
                              matmul_dtype=jnp.bfloat16, compute_knn_idx=False):
    """x: (B, N, C) f32 tokens; pos: (B, N, 3) f32 coordinates.

    params: dict of depth-stacked PyTorch-orientation weights (see init_params).
    """
    B, N, C = x.shape
    assert C % num_heads == 0
    depth = params["qkv_w"].shape[0]
    H = num_heads
    D = C // H

    if compute_knn_idx:
        # TransformerEncoder.forward computes idx = knn_point(k, pos, pos); for
        # pure-'attn' blocks it is never consumed, so it is off by default.
        sq = jnp.sum(pos * pos, axis=-1)
        d2 = sq[:, :, None] + sq[:, None, :] - 2.0 * jnp.einsum(
            'bnd,bmd->bnm', pos, pos)
        _ = jax.lax.top_k(-d2, k)[1]
        # TODO(synk): feed idx into a 'deform'/'graph' local-attention block if
        # that class is ever provided.

    pk = pack_params(params, num_heads, matmul_dtype)
    hidden = pk["fc1_w"].shape[1]
    rows = pk["slab"].shape[1]

    # Channel-major layout inside the kernel (lane dim = N).
    xt = jnp.transpose(x, (0, 2, 1))                  # (B, C, N)

    in_specs = [
        pl.BlockSpec((1, C, N), lambda b, l: (b, 0, 0)),
        pl.BlockSpec((1, rows, 8), lambda b, l: (l, 0, 0)),
        pl.BlockSpec((1, 3 * H, D, 1), lambda b, l: (l, 0, 0, 0)),
        pl.BlockSpec((1, 3 * H, D, C), lambda b, l: (l, 0, 0, 0)),
        pl.BlockSpec((1, H, C, D), lambda b, l: (l, 0, 0, 0)),
        pl.BlockSpec((1, hidden, C), lambda b, l: (l, 0, 0)),
        pl.BlockSpec((1, C, hidden), lambda b, l: (l, 0, 0)),
    ]

    out_t = pl.pallas_call(
        partial(_encoder_kernel, num_heads),
        out_shape=jax.ShapeDtypeStruct((B, C, N), x.dtype),
        # depth MUST stay the last ('arbitrary') axis: the VMEM residual
        # scratch carries state across it.
        grid=(B, depth),
        in_specs=in_specs,
        out_specs=pl.BlockSpec((1, C, N), lambda b, l: (b, 0, 0)),
        scratch_shapes=[pltpu.VMEM((C, N), jnp.float32)],
        compiler_params=pltpu.CompilerParams(
            dimension_semantics=("parallel", "arbitrary"),
            vmem_limit_bytes=32 * 1024 * 1024),
    )(xt, pk["slab"], pk["qkv_b"], pk["qkv_w"], pk["proj_w"],
      pk["fc1_w"], pk["fc2_w"])

    return jnp.transpose(out_t, (0, 2, 1))            # back to (B, N, C)


# ----------------------------------------------------------------------------
# Parameter init (PyTorch orientation: nn.Linear weight = (out, in))
# ----------------------------------------------------------------------------
def init_params(key, depth, dim, mlp_ratio=4.0):
    hidden = int(dim * mlp_ratio)

    def tn(kk, shape):
        return 0.02 * jax.random.truncated_normal(kk, -2.0, 2.0, shape,
                                                  jnp.float32)

    layers = []
    for i in range(depth):
        ks = jax.random.split(jax.random.fold_in(key, i), 4)
        layers.append(dict(
            ln1_w=jnp.ones((dim,), jnp.float32),
            ln1_b=jnp.zeros((dim,), jnp.float32),
            qkv_w=tn(ks[0], (3 * dim, dim)),
            qkv_b=jnp.zeros((3 * dim,), jnp.float32),
            proj_w=tn(ks[1], (dim, dim)),
            proj_b=jnp.zeros((dim,), jnp.float32),
            ln2_w=jnp.ones((dim,), jnp.float32),
            ln2_b=jnp.zeros((dim,), jnp.float32),
            fc1_w=tn(ks[2], (hidden, dim)),
            fc1_b=jnp.zeros((hidden,), jnp.float32),
            fc2_w=tn(ks[3], (dim, hidden)),
            fc2_b=jnp.zeros((dim,), jnp.float32),
        ))
    return {name: jnp.stack([lyr[name] for lyr in layers], axis=0)
            for name in layers[0]}


# ----------------------------------------------------------------------------
# Pure-JAX f32 reference of the same forward pass (for validation)
# ----------------------------------------------------------------------------
def _reference_encoder(x, params, num_heads):
    depth = params["qkv_w"].shape[0]
    B, N, C = x.shape
    H, D = num_heads, C // num_heads
    scale = 1.0 / math.sqrt(D)

    def ln(a, w, b):
        mu = a.mean(-1, keepdims=True)
        xc = a - mu
        var = (xc * xc).mean(-1, keepdims=True)
        return xc * jax.lax.rsqrt(var + EPS) * w + b

    for i in range(depth):
        h = ln(x, params["ln1_w"][i], params["ln1_b"][i])
        qkv = h @ params["qkv_w"][i].T + params["qkv_b"][i]       # (B, N, 3C)
        qkv = qkv.reshape(B, N, 3, H, D).transpose(2, 0, 3, 1, 4)
        q, kk, v = qkv[0], qkv[1], qkv[2]
        s = jnp.einsum('bhnd,bhmd->bhnm', q, kk) * scale
        p = jax.nn.softmax(s, axis=-1)
        o = jnp.einsum('bhnm,bhmd->bhnd', p, v).transpose(0, 2, 1, 3)
        o = o.reshape(B, N, C)
        x = x + o @ params["proj_w"][i].T + params["proj_b"][i]
        h2 = ln(x, params["ln2_w"][i], params["ln2_b"][i])
        y = h2 @ params["fc1_w"][i].T + params["fc1_b"][i]
        y = 0.5 * y * (1.0 + jax.lax.erf(y * _SQRT_HALF))          # exact GELU
        x = x + y @ params["fc2_w"][i].T + params["fc2_b"][i]
    return x  # final self.norm is NOT applied in PointTransformerEncoder.forward


if __name__ == "__main__":
    B, N, C = 2, 128, 32
    depth, num_heads, k = 2, 4, 10

    key = jax.random.PRNGKey(0)
    kx, kp, kw, kb = jax.random.split(key, 4)
    x = jax.random.normal(kx, (B, N, C), jnp.float32)
    pos = jax.random.normal(kp, (B, N, 3), jnp.float32)
    params = init_params(kw, depth, C, mlp_ratio=4.0)

    # Perturb all parameters slightly so the bias / LayerNorm-affine paths are
    # actually exercised by the numerical check (PyTorch inits them to 0 / 1).
    leaves, treedef = jax.tree_util.tree_flatten(params)
    pkeys = jax.random.split(kb, len(leaves))
    leaves = [p + 0.02 * jax.random.normal(kk_, p.shape, jnp.float32)
              for p, kk_ in zip(leaves, pkeys)]
    params = jax.tree_util.tree_unflatten(treedef, leaves)

    out = point_transformer_encoder(x, pos, params, num_heads=num_heads, k=k)
    out = jax.block_until_ready(out)

    ref = _reference_encoder(x, params, num_heads)
    assert out.shape == (B, N, C)
    assert bool(jnp.all(jnp.isfinite(out)))
    # bf16 matmul operands + approx-reciprocal softmax -> loose tolerance.
    max_err = float(jnp.max(jnp.abs(out - ref)))
    assert bool(jnp.allclose(out, ref, atol=5e-2, rtol=5e-2)), max_err
    print("KERNEL_OK")
</pallas_src>

<mosaic_0001>
module attributes {stable_mosaic.version = 11 : i64} {
  func.func @_encoder_kernel(%arg0: i32, %arg1: i32, %arg2: memref<1x32x128xf32, #tpu.memory_space<vmem>>, %arg3: memref<1x128x8xf32, #tpu.memory_space<vmem>>, %arg4: memref<1x12x8x1xf32, #tpu.memory_space<vmem>>, %arg5: memref<1x12x8x32xbf16, #tpu.memory_space<vmem>>, %arg6: memref<1x4x32x8xbf16, #tpu.memory_space<vmem>>, %arg7: memref<1x128x32xbf16, #tpu.memory_space<vmem>>, %arg8: memref<1x32x128xbf16, #tpu.memory_space<vmem>>, %arg9: memref<1x32x128xf32, #tpu.memory_space<vmem>>, %arg10: memref<32x128xf32, #tpu.memory_space<vmem>>) attributes {dimension_semantics = [#tpu.dimension_semantics<parallel>, #tpu.dimension_semantics<arbitrary>], iteration_bounds = array<i64: 2, 2>, scalar_prefetch = 0 : i64, scratch_operands = 1 : i64, tpu.core_type = #tpu.core_type<tc>, window_params = [{transform_indices = @transform_0, window_bounds = array<i64: 1, 32, 128>}, {transform_indices = @transform_1, window_bounds = array<i64: 1, 128, 8>}, {transform_indices = @transform_2, window_bounds = array<i64: 1, 12, 8, 1>}, {transform_indices = @transform_3, window_bounds = array<i64: 1, 12, 8, 32>}, {transform_indices = @transform_4, window_bounds = array<i64: 1, 4, 32, 8>}, {transform_indices = @transform_5, window_bounds = array<i64: 1, 128, 32>}, {transform_indices = @transform_6, window_bounds = array<i64: 1, 32, 128>}, {transform_indices = @transform_7, window_bounds = array<i64: 1, 32, 128>}]} {
    %c0_i32 = arith.constant 0 : i32
    %0 = arith.cmpi eq, %arg1, %c0_i32 : i32
    %1 = arith.extui %0 : i1 to i32
    %c0_i32_0 = arith.constant 0 : i32
    %2 = arith.cmpi ne, %1, %c0_i32_0 : i32
    scf.if %2 {
      %c0_60 = arith.constant 0 : index
      %c0_61 = arith.constant 0 : index
      %c0_62 = arith.constant 0 : index
      %148 = vector.load %arg2[%c0_60, %c0_61, %c0_62] : memref<1x32x128xf32, #tpu.memory_space<vmem>>, vector<1x32x128xf32>
      %149 = vector.shape_cast %148 : vector<1x32x128xf32> to vector<32x128xf32>
      %c0_63 = arith.constant 0 : index
      %c0_64 = arith.constant 0 : index
      %150 = vector.load %arg10[%c0_63, %c0_64] : memref<32x128xf32, #tpu.memory_space<vmem>>, vector<32x128xf32>
      tpu.vector_store %arg10[%c0_63, %c0_64], %149 {strides = array<i32>} : memref<32x128xf32, #tpu.memory_space<vmem>>, vector<32x128xf32>,
    } else {
    }
    %c0 = arith.constant 0 : index
    %c0_1 = arith.constant 0 : index
    %3 = vector.load %arg10[%c0, %c0_1] : memref<32x128xf32, #tpu.memory_space<vmem>>, vector<32x128xf32>
    %c0_2 = arith.constant 0 : index
    %c0_3 = arith.constant 0 : index
    %c0_4 = arith.constant 0 : index
    %4 = vector.load %arg3[%c0_2, %c0_3, %c0_4] : memref<1x128x8xf32, #tpu.memory_space<vmem>>, vector<1x128x8xf32>
    %5 = vector.shape_cast %4 : vector<1x128x8xf32> to vector<128x8xf32>
    %6 = vector.extract_strided_slice %5 {offsets = [0, 0], sizes = [32, 1], strides = [1, 1]} : vector<128x8xf32> to vector<32x1xf32>
    %7 = vector.extract_strided_slice %5 {offsets = [0, 1], sizes = [32, 1], strides = [1, 1]} : vector<128x8xf32> to vector<32x1xf32>
    %8 = vector.extract_strided_slice %5 {offsets = [0, 2], sizes = [32, 1], strides = [1, 1]} : vector<128x8xf32> to vector<32x1xf32>
    %9 = vector.extract_strided_slice %5 {offsets = [0, 3], sizes = [32, 1], strides = [1, 1]} : vector<128x8xf32> to vector<32x1xf32>
    %10 = vector.extract_strided_slice %5 {offsets = [0, 4], sizes = [32, 1], strides = [1, 1]} : vector<128x8xf32> to vector<32x1xf32>
    %11 = vector.extract_strided_slice %5 {offsets = [0, 5], sizes = [32, 1], strides = [1, 1]} : vector<128x8xf32> to vector<32x1xf32>
    %12 = vector.extract_strided_slice %5 {offsets = [0, 6], sizes = [128, 1], strides = [1, 1]} : vector<128x8xf32> to vector<128x1xf32>
    %c0_5 = arith.constant 0 : index
    %c0_6 = arith.constant 0 : index
    %c0_7 = arith.constant 0 : index
    %c0_8 = arith.constant 0 : index
    %13 = vector.load %arg4[%c0_5, %c0_6, %c0_7, %c0_8] : memref<1x12x8x1xf32, #tpu.memory_space<vmem>>, vector<1x12x8x1xf32>
    %14 = vector.shape_cast %13 : vector<1x12x8x1xf32> to vector<12x8x1xf32>
    %c0_9 = arith.constant 0 : index
    %c0_10 = arith.constant 0 : index
    %c0_11 = arith.constant 0 : index
    %c0_12 = arith.constant 0 : index
    %15 = vector.load %arg5[%c0_9, %c0_10, %c0_11, %c0_12] : memref<1x12x8x32xbf16, #tpu.memory_space<vmem>>, vector<1x12x8x32xbf16>
    %16 = vector.shape_cast %15 : vector<1x12x8x32xbf16> to vector<12x8x32xbf16>
    %c0_13 = arith.constant 0 : index
    %c0_14 = arith.constant 0 : index
    %c0_15 = arith.constant 0 : index
    %c0_16 = arith.constant 0 : index
    %17 = vector.load %arg6[%c0_13, %c0_14, %c0_15, %c0_16] : memref<1x4x32x8xbf16, #tpu.memory_space<vmem>>, vector<1x4x32x8xbf16>
    %18 = vector.shape_cast %17 : vector<1x4x32x8xbf16> to vector<4x32x8xbf16>
    %c0_17 = arith.constant 0 : index
    %c0_18 = arith.constant 0 : index
    %c0_19 = arith.constant 0 : index
    %19 = vector.load %arg7[%c0_17, %c0_18, %c0_19] : memref<1x128x32xbf16, #tpu.memory_space<vmem>>, vector<1x128x32xbf16>
    %20 = vector.shape_cast %19 : vector<1x128x32xbf16> to vector<128x32xbf16>
    %c0_20 = arith.constant 0 : index
    %c0_21 = arith.constant 0 : index
    %c0_22 = arith.constant 0 : index
    %21 = vector.load %arg8[%c0_20, %c0_21, %c0_22] : memref<1x32x128xbf16, #tpu.memory_space<vmem>>, vector<1x32x128xbf16>
    %22 = vector.shape_cast %21 : vector<1x32x128xbf16> to vector<32x128xbf16>
    %cst = arith.constant dense<0.000000e+00> : vector<128xf32>
    %23 = vector.multi_reduction <add>, %3, %cst [0] : vector<32x128xf32> to vector<128xf32>
    %24 = vector.shape_cast %23 : vector<128xf32> to vector<1x128xf32>
    %cst_23 = arith.constant 3.125000e-02 : f32
    %25 = vector.broadcast %cst_23 : f32 to vector<1x128xf32>
    %26 = arith.mulf %24, %25 : vector<1x128xf32>
    %27 = vector.broadcast %26 : vector<1x128xf32> to vector<32x128xf32>
    %28 = arith.subf %3, %27 : vector<32x128xf32>
    %29 = arith.mulf %28, %28 : vector<32x128xf32>
    %cst_24 = arith.constant dense<0.000000e+00> : vector<128xf32>
    %30 = vector.multi_reduction <add>, %29, %cst_24 [0] : vector<32x128xf32> to vector<128xf32>
    %31 = vector.shape_cast %30 : vector<128xf32> to vector<1x128xf32>
    %cst_25 = arith.constant 3.125000e-02 : f32
    %32 = vector.broadcast %cst_25 : f32 to vector<1x128xf32>
    %33 = arith.mulf %31, %32 : vector<1x128xf32>
    %cst_26 = arith.constant 9.99999997E-7 : f32
    %34 = vector.broadcast %cst_26 : f32 to vector<1x128xf32>
    %35 = arith.addf %33, %34 : vector<1x128xf32>
    %36 = math.rsqrt %35 : vector<1x128xf32>
    %37 = vector.broadcast %36 : vector<1x128xf32> to vector<32x128xf32>
    %38 = arith.mulf %28, %37 : vector<32x128xf32>
    %39 = vector.broadcast %6 : vector<32x1xf32> to vector<32x128xf32>
    %40 = arith.mulf %38, %39 : vector<32x128xf32>
    %41 = vector.broadcast %7 : vector<32x1xf32> to vector<32x128xf32>
    %42 = arith.addf %40, %41 : vector<32x128xf32>
    %43 = arith.truncf %42 : vector<32x128xf32> to vector<32x128xbf16>
    %44 = vector.shape_cast %43 : vector<32x128xbf16> to vector<1x32x128xbf16>
    %45 = vector.shape_cast %44 : vector<1x32x128xbf16> to vector<1x32x128xbf16>
    %46 = vector.broadcast %45 : vector<1x32x128xbf16> to vector<12x32x128xbf16>
    %cst_27 = arith.constant dense<0.000000e+00> : vector<12x8x128xf32>
    %47 = tpu.matmul %16, %46, %cst_27 {dimension_numbers = #tpu.dot_dimension_numbers<[2], [1], [1], [2], [0, 0, 0, 1, 1, 2], [0], [0]>} : vector<12x8x32xbf16>, vector<12x32x128xbf16>, vector<12x8x128xf32> -> vector<12x8x128xf32>
    %48 = vector.broadcast %14 : vector<12x8x1xf32> to vector<12x8x128xf32>
    %49 = arith.addf %47, %48 : vector<12x8x128xf32>
    %50 = vector.extract_strided_slice %49 {offsets = [0, 0, 0], sizes = [4, 8, 128], strides = [1, 1, 1]} : vector<12x8x128xf32> to vector<4x8x128xf32>
    %51 = arith.truncf %50 : vector<4x8x128xf32> to vector<4x8x128xbf16>
    %52 = vector.extract_strided_slice %49 {offsets = [4, 0, 0], sizes = [4, 8, 128], strides = [1, 1, 1]} : vector<12x8x128xf32> to vector<4x8x128xf32>
    %53 = arith.truncf %52 : vector<4x8x128xf32> to vector<4x8x128xbf16>
    %54 = vector.extract_strided_slice %49 {offsets = [8, 0, 0], sizes = [4, 8, 128], strides = [1, 1, 1]} : vector<12x8x128xf32> to vector<4x8x128xf32>
    %55 = arith.truncf %54 : vector<4x8x128xf32> to vector<4x8x128xbf16>
    %cst_28 = arith.constant dense<0.000000e+00> : vector<4x128x128xf32>
    %56 = tpu.matmul %51, %53, %cst_28 {dimension_numbers = #tpu.dot_dimension_numbers<[1], [1], [2], [2], [0, 0, 0, 2, 1, 2], [0], [0]>} : vector<4x8x128xbf16>, vector<4x8x128xbf16>, vector<4x128x128xf32> -> vector<4x128x128xf32>
    %cst_29 = arith.constant dense<0xFF800000> : vector<4x128xf32>
    %57 = vector.multi_reduction <maximumf>, %56, %cst_29 [2] : vector<4x128x128xf32> to vector<4x128xf32>
    %58 = vector.shape_cast %57 : vector<4x128xf32> to vector<4x128x1xf32>
    %59 = vector.broadcast %58 : vector<4x128x1xf32> to vector<4x128x128xf32>
    %60 = arith.subf %56, %59 : vector<4x128x128xf32>
    %61 = math.exp %60 : vector<4x128x128xf32>
    %62 = arith.truncf %61 : vector<4x128x128xf32> to vector<4x128x128xbf16>
    %cst_30 = arith.constant dense<0.000000e+00> : vector<4x8x128xf32>
    %63 = tpu.matmul %55, %62, %cst_30 {dimension_numbers = #tpu.dot_dimension_numbers<[2], [2], [1], [1], [0, 0, 0, 1, 1, 1], [0], [0]>} : vector<4x8x128xbf16>, vector<4x128x128xbf16>, vector<4x8x128xf32> -> vector<4x8x128xf32>
    %cst_31 = arith.constant 1.000000e+00 : bf16
    %64 = vector.broadcast %cst_31 : bf16 to vector<4x1x128xbf16>
    %cst_32 = arith.constant dense<0.000000e+00> : vector<4x1x128xf32>
    %65 = tpu.matmul %64, %62, %cst_32 {dimension_numbers = #tpu.dot_dimension_numbers<[2], [2], [1], [1], [0, 0, 0, 1, 1, 1], [0], [0]>} : vector<4x1x128xbf16>, vector<4x128x128xbf16>, vector<4x1x128xf32> -> vector<4x1x128xf32>
    %66 = tpu.reciprocal %65 {approx = true} : vector<4x1x128xf32> -> vector<4x1x128xf32>
    %67 = vector.broadcast %66 : vector<4x1x128xf32> to vector<4x8x128xf32>
    %68 = arith.mulf %63, %67 : vector<4x8x128xf32>
    %69 = arith.truncf %68 : vector<4x8x128xf32> to vector<4x8x128xbf16>
    %cst_33 = arith.constant dense<0.000000e+00> : vector<4x32x128xf32>
    %70 = tpu.matmul %18, %69, %cst_33 {dimension_numbers = #tpu.dot_dimension_numbers<[2], [1], [1], [2], [0, 0, 0, 1, 1, 2], [0], [0]>} : vector<4x32x8xbf16>, vector<4x8x128xbf16>, vector<4x32x128xf32> -> vector<4x32x128xf32>
    %cst_34 = arith.constant dense<0.000000e+00> : vector<32x128xf32>
    %71 = vector.multi_reduction <add>, %70, %cst_34 [0] : vector<4x32x128xf32> to vector<32x128xf32>
    %72 = arith.addf %3, %71 : vector<32x128xf32>
    %73 = vector.broadcast %10 : vector<32x1xf32> to vector<32x128xf32>
    %74 = arith.addf %72, %73 : vector<32x128xf32>
    %cst_35 = arith.constant dense<0.000000e+00> : vector<128xf32>
    %75 = vector.multi_reduction <add>, %74, %cst_35 [0] : vector<32x128xf32> to vector<128xf32>
    %76 = vector.shape_cast %75 : vector<128xf32> to vector<1x128xf32>
    %cst_36 = arith.constant 3.125000e-02 : f32
    %77 = vector.broadcast %cst_36 : f32 to vector<1x128xf32>
    %78 = arith.mulf %76, %77 : vector<1x128xf32>
    %79 = vector.broadcast %78 : vector<1x128xf32> to vector<32x128xf32>
    %80 = arith.subf %74, %79 : vector<32x128xf32>
    %81 = arith.mulf %80, %80 : vector<32x128xf32>
    %cst_37 = arith.constant dense<0.000000e+00> : vector<128xf32>
    %82 = vector.multi_reduction <add>, %81, %cst_37 [0] : vector<32x128xf32> to vector<128xf32>
    %83 = vector.shape_cast %82 : vector<128xf32> to vector<1x128xf32>
    %cst_38 = arith.constant 3.125000e-02 : f32
    %84 = vector.broadcast %cst_38 : f32 to vector<1x128xf32>
    %85 = arith.mulf %83, %84 : vector<1x128xf32>
    %cst_39 = arith.constant 9.99999997E-7 : f32
    %86 = vector.broadcast %cst_39 : f32 to vector<1x128xf32>
    %87 = arith.addf %85, %86 : vector<1x128xf32>
    %88 = math.rsqrt %87 : vector<1x128xf32>
    %89 = vector.broadcast %88 : vector<1x128xf32> to vector<32x128xf32>
    %90 = arith.mulf %80, %89 : vector<32x128xf32>
    %91 = vector.broadcast %8 : vector<32x1xf32> to vector<32x128xf32>
    %92 = arith.mulf %90, %91 : vector<32x128xf32>
    %93 = vector.broadcast %9 : vector<32x1xf32> to vector<32x128xf32>
    %94 = arith.addf %92, %93 : vector<32x128xf32>
    %95 = arith.truncf %94 : vector<32x128xf32> to vector<32x128xbf16>
    %cst_40 = arith.constant dense<0.000000e+00> : vector<128x128xf32>
    %96 = tpu.matmul %20, %95, %cst_40 {dimension_numbers = #tpu.dot_dimension_numbers<[1], [0], [0], [1], [0, 0, 1, 1], [], []>} : vector<128x32xbf16>, vector<32x128xbf16>, vector<128x128xf32> -> vector<128x128xf32>
    %97 = vector.broadcast %12 : vector<128x1xf32> to vector<128x128xf32>
    %98 = arith.addf %96, %97 : vector<128x128xf32>
    %cst_41 = arith.constant 5.000000e-01 : f32
    %99 = vector.broadcast %cst_41 : f32 to vector<128x128xf32>
    %100 = arith.mulf %99, %98 : vector<128x128xf32>
    %cst_42 = arith.constant 0.707106769 : f32
    %101 = vector.broadcast %cst_42 : f32 to vector<128x128xf32>
    %102 = arith.mulf %98, %101 : vector<128x128xf32>
    %103 = math.absf %102 : vector<128x128xf32>
    %cst_43 = arith.constant 0.327591091 : f32
    %104 = vector.broadcast %cst_43 : f32 to vector<128x128xf32>
    %105 = arith.mulf %104, %103 : vector<128x128xf32>
    %cst_44 = arith.constant 1.000000e+00 : f32
    %106 = vector.broadcast %cst_44 : f32 to vector<128x128xf32>
    %107 = arith.addf %106, %105 : vector<128x128xf32>
    %cst_45 = arith.constant 1.000000e+00 : f32
    %108 = vector.broadcast %cst_45 : f32 to vector<128x128xf32>
    %109 = arith.divf %108, %107 : vector<128x128xf32>
    %cst_46 = arith.constant 1.06140542 : f32
    %110 = vector.broadcast %cst_46 : f32 to vector<128x128xf32>
    %111 = arith.mulf %110, %109 : vector<128x128xf32>
    %cst_47 = arith.constant -1.45315206 : f32
    %112 = vector.broadcast %cst_47 : f32 to vector<128x128xf32>
    %113 = arith.addf %111, %112 : vector<128x128xf32>
    %114 = arith.mulf %113, %109 : vector<128x128xf32>
    %cst_48 = arith.constant 1.42141378 : f32
    %115 = vector.broadcast %cst_48 : f32 to vector<128x128xf32>
    %116 = arith.addf %114, %115 : vector<128x128xf32>
    %117 = arith.mulf %116, %109 : vector<128x128xf32>
    %cst_49 = arith.constant -0.284496725 : f32
    %118 = vector.broadcast %cst_49 : f32 to vector<128x128xf32>
    %119 = arith.addf %117, %118 : vector<128x128xf32>
    %120 = arith.mulf %119, %109 : vector<128x128xf32>
    %cst_50 = arith.constant 0.254829586 : f32
    %121 = vector.broadcast %cst_50 : f32 to vector<128x128xf32>
    %122 = arith.addf %120, %121 : vector<128x128xf32>
    %123 = arith.mulf %122, %109 : vector<128x128xf32>
    %cst_51 = arith.constant 0.000000e+00 : f32
    %124 = vector.broadcast %cst_51 : f32 to vector<128x128xf32>
    %125 = arith.subf %124, %103 : vector<128x128xf32>
    %126 = arith.mulf %125, %103 : vector<128x128xf32>
    %127 = math.exp %126 : vector<128x128xf32>
    %128 = arith.mulf %123, %127 : vector<128x128xf32>
    %cst_52 = arith.constant 1.000000e+00 : f32
    %129 = vector.broadcast %cst_52 : f32 to vector<128x128xf32>
    %130 = arith.subf %129, %128 : vector<128x128xf32>
    %cst_53 = arith.constant 0.000000e+00 : f32
    %131 = vector.broadcast %cst_53 : f32 to vector<128x128xf32>
    %132 = arith.cmpf oge, %102, %131 : vector<128x128xf32>
    %cst_54 = arith.constant 0.000000e+00 : f32
    %133 = vector.broadcast %cst_54 : f32 to vector<128x128xf32>
    %134 = arith.subf %133, %130 : vector<128x128xf32>
    %135 = arith.select %132, %130, %134 : vector<128x128xi1>, vector<128x128xf32>
    %cst_55 = arith.constant 1.000000e+00 : f32
    %136 = vector.broadcast %cst_55 : f32 to vector<128x128xf32>
    %137 = arith.addf %136, %135 : vector<128x128xf32>
    %138 = arith.mulf %100, %137 : vector<128x128xf32>
    %139 = arith.truncf %138 : vector<128x128xf32> to vector<128x128xbf16>
    %cst_56 = arith.constant dense<0.000000e+00> : vector<32x128xf32>
    %140 = tpu.matmul %22, %139, %cst_56 {dimension_numbers = #tpu.dot_dimension_numbers<[1], [0], [0], [1], [0, 0, 1, 1], [], []>} : vector<32x128xbf16>, vector<128x128xbf16>, vector<32x128xf32> -> vector<32x128xf32>
    %141 = vector.broadcast %11 : vector<32x1xf32> to vector<32x128xf32>
    %142 = arith.addf %140, %141 : vector<32x128xf32>
    %143 = arith.addf %74, %142 : vector<32x128xf32>
    %c0_57 = arith.constant 0 : index
    %c0_58 = arith.constant 0 : index
    %144 = vector.load %arg10[%c0_57, %c0_58] : memref<32x128xf32, #tpu.memory_space<vmem>>, vector<32x128xf32>
    tpu.vector_store %arg10[%c0_57, %c0_58], %143 {strides = array<i32>} : memref<32x128xf32, #tpu.memory_space<vmem>>, vector<32x128xf32>,
    %c1_i32 = arith.constant 1 : i32
    %145 = arith.cmpi eq, %arg1, %c1_i32 : i32
    %146 = arith.extui %145 : i1 to i32
    %c0_i32_59 = arith.constant 0 : i32
    %147 = arith.cmpi ne, %146, %c0_i32_59 : i32
    scf.if %147 {
      %c0_60 = arith.constant 0 : index
      %c0_61 = arith.constant 0 : index
      %c0_62 = arith.constant 0 : index
      %148 = vector.load %arg9[%c0_60, %c0_61, %c0_62] : memref<1x32x128xf32, #tpu.memory_space<vmem>>, vector<1x32x128xf32>
      %149 = vector.shape_cast %148 : vector<1x32x128xf32> to vector<32x128xf32>
      %150 = vector.shape_cast %143 : vector<32x128xf32> to vector<1x32x128xf32>
      tpu.vector_store %arg9[%c0_60, %c0_61, %c0_62], %150 {strides = array<i32>} : memref<1x32x128xf32, #tpu.memory_space<vmem>>, vector<1x32x128xf32>,
    } else {
    }
    return
  }
  func.func @transform_0(%arg0: i32, %arg1: i32) -> (i32, i32, i32) {
    %c0_i32 = arith.constant 0 : i32
    %c0_i32_0 = arith.constant 0 : i32
    %c0_i32_1 = arith.constant 0 : i32
    return %arg0, %c0_i32, %c0_i32_0 : i32, i32, i32
  }
  func.func @transform_1(%arg0: i32, %arg1: i32) -> (i32, i32, i32) {
    %c0_i32 = arith.constant 0 : i32
    %c0_i32_0 = arith.constant 0 : i32
    %c0_i32_1 = arith.constant 0 : i32
    return %arg1, %c0_i32, %c0_i32_0 : i32, i32, i32
  }
  func.func @transform_2(%arg0: i32, %arg1: i32) -> (i32, i32, i32, i32) {
    %c0_i32 = arith.constant 0 : i32
    %c0_i32_0 = arith.constant 0 : i32
    %c0_i32_1 = arith.constant 0 : i32
    %c0_i32_2 = arith.constant 0 : i32
    return %arg1, %c0_i32, %c0_i32_0, %c0_i32_1 : i32, i32, i32, i32
  }
  func.func @transform_3(%arg0: i32, %arg1: i32) -> (i32, i32, i32, i32) {
    %c0_i32 = arith.constant 0 : i32
    %c0_i32_0 = arith.constant 0 : i32
    %c0_i32_1 = arith.constant 0 : i32
    %c0_i32_2 = arith.constant 0 : i32
    return %arg1, %c0_i32, %c0_i32_0, %c0_i32_1 : i32, i32, i32, i32
  }
  func.func @transform_4(%arg0: i32, %arg1: i32) -> (i32, i32, i32, i32) {
    %c0_i32 = arith.constant 0 : i32
    %c0_i32_0 = arith.constant 0 : i32
    %c0_i32_1 = arith.constant 0 : i32
    %c0_i32_2 = arith.constant 0 : i32
    return %arg1, %c0_i32, %c0_i32_0, %c0_i32_1 : i32, i32, i32, i32
  }
  func.func @transform_5(%arg0: i32, %arg1: i32) -> (i32, i32, i32) {
    %c0_i32 = arith.constant 0 : i32
    %c0_i32_0 = arith.constant 0 : i32
    %c0_i32_1 = arith.constant 0 : i32
    return %arg1, %c0_i32, %c0_i32_0 : i32, i32, i32
  }
  func.func @transform_6(%arg0: i32, %arg1: i32) -> (i32, i32, i32) {
    %c0_i32 = arith.constant 0 : i32
    %c0_i32_0 = arith.constant 0 : i32
    %c0_i32_1 = arith.constant 0 : i32
    return %arg1, %c0_i32, %c0_i32_0 : i32, i32, i32
  }
  func.func @transform_7(%arg0: i32, %arg1: i32) -> (i32, i32, i32) {
    %c0_i32 = arith.constant 0 : i32
    %c0_i32_0 = arith.constant 0 : i32
    %c0_i32_1 = arith.constant 0 : i32
    return %arg0, %c0_i32, %c0_i32_0 : i32, i32, i32
  }
}

</mosaic_0001>

<llo_original>
// kernel: tpu_custom_call.1
$region0: #{tpu_custom_call.1}
  #allocation0 [shape = 'u32[]', space=smem, size = 0x4, offset = 0x4, fixed_abs, tag = 'smem constant byte address 0x4 - core index']
  #allocation1 [shape = 'u32[144,128]{1,0:T(1,128)}', space=vmem, size = 0x12000, scoped, tag = 'internal scratch']
  #allocation2 [shape = 'f32[32,128]{1,0:T(8,128)}', space=vmem, size = 0x4000, scoped, tag = 'scratch operand']
  %s0 = inlined_call_operand.vmem [shape: f32[2,32,128], index: 0, kind: input, shape index: {}]
  %s1 = inlined_call_operand.vmem [shape: f32[2,128,8], index: 1, kind: input, shape index: {}]
  %s2 = inlined_call_operand.vmem [shape: f32[2,12,8,1], index: 2, kind: input, shape index: {}]
  %s3 = inlined_call_operand.vmem [shape: bf16[2,12,8,32], index: 3, kind: input, shape index: {}]
  %s4 = inlined_call_operand.vmem [shape: bf16[2,4,32,8], index: 4, kind: input, shape index: {}]
  %s5 = inlined_call_operand.vmem [shape: bf16[2,128,32], index: 5, kind: input, shape index: {}]
  %s6 = inlined_call_operand.vmem [shape: bf16[2,32,128], index: 6, kind: input, shape index: {}]
  %s7 = inlined_call_operand.hbm [shape: f32[2,32,128], index: 7, kind: output, shape index: {}]
  %s8 = sld [smem:[#allocation0]]
  $region69: #{tpu_custom_call.1} parent=0
    _
  %s10 = ssub.s32 1, %s8
  %s11 = scalar_select 0, %s10, %s8
  $region1: #{tpu_custom_call.1} parent=0
    #allocation3 [shape = 'u8[32768]{0}', space=vmem, size = 0x8000, scoped, tag = 'output window, operand 0']
    #allocation4 [shape = 's32[2]{0}', space=sflag, size = 0x8, scoped, tag = 'scoped memory for tpu_custom_call.1']
    %12 = vsyncpa [#allocation4], 0
    %s13 = scalar_lea.sflag [#allocation4], 1
    %14 = vsyncpa %s13, 0
    loop: start=0, step=1, limit=6
    $region2: #{tpu_custom_call.1} parent=1 // loop_pre_header
      _
    $region3: #{tpu_custom_call.1} parent=1 // loop_header
      %s16 = sphi 0, %s20
      %p17 = scmp.ge.s32.totalorder %s16, 6
      %s23 = sphi 0, %s35
      %s24 = sphi 0, %s31
      %s25 = sphi 0, %s23
      %s26 = sphi 0, %s24
      %s27 = sphi 0, %s25
      %s28 = sphi 0, %s26
      %s38 = sphi 0, %s40
      %s41 = sphi 0, %s38
      %s42 = sphi 0, %s41
      %s58 = sphi 0, %s42
      %s64 = sphi 0, %s66
      %s67 = sphi 0, %s64
      %s68 = sphi 0, %s67
      %s84 = sphi 0, %s68
      %s90 = sphi 0, %s92
      %s93 = sphi 0, %s90
      %s94 = sphi 0, %s93
      %s110 = sphi 0, %s94
      %s116 = sphi 0, %s118
      %s119 = sphi 0, %s116
      %s120 = sphi 0, %s119
      %s136 = sphi 0, %s120
      %s142 = sphi 0, %s144
      %s145 = sphi 0, %s142
      %s146 = sphi 0, %s145
      %s162 = sphi 0, %s146
      %s168 = sphi 0, %s170
      %s171 = sphi 0, %s168
      %s172 = sphi 0, %s171
      %s188 = sphi 0, %s172
      %s194 = sphi 0, %s196
      %s197 = sphi 0, %s194
      %s198 = sphi 0, %s197
      %s214 = sphi 0, %s198
      %s220 = sphi 0, %s222
      %s223 = sphi 0, %s220
      %s224 = sphi 0, %s223
      %s240 = sphi 0, %s224
    $region4: #{tpu_custom_call.1} parent=1 // loop_header_branch
      %19 = sbr.rel (%p17) target = $region8
    $region5: #{tpu_custom_call.1} parent=1 // loop_body
      %s21 = ssub.s32 %s16, 1
      %s22 = ssub.s32 %s16, 2
      %s29 = sadd.s32 1, %s24
      %p30 = scmp.ge.s32.totalorder %s29, 2
      %s31 = scalar_select %p30, 0, %s29
      %s32 = sadd.s32 1, %s23
      %s33 = scalar_select %p30, %s32, %s23
      %p34 = scmp.ge.s32.totalorder %s33, 2
      %s35 = scalar_select %p34, 0, %s33
      %s36 = ssub.s32 %s23, %s35
      %p37 = scmp.eq.s32.totalorder %s36, 0
      %s39 = sadd.s32 %s38, 1
      %s40 = scalar_select %p37, %s38, %s39
      %p43 = pneg %p37
      %p44 = scmp.eq.s32.totalorder %s16, 3
      %p45 = por %p43, %p44
      %p46 = scmp.ne.s32.totalorder %s38, %s41
      %p47 = scmp.eq.s32.totalorder %s16, 0
      %p48 = por %p46, %p47
      %p49 = scmp.ne.s32.totalorder %s38, %s41
      %p50 = scmp.eq.s32.totalorder %s21, 3
      %p51 = por %p49, %p50
      %p52 = scmp.ne.s32.totalorder %s41, %s42
      %p53 = scmp.eq.s32.totalorder %s21, 0
      %p54 = por %p52, %p53
      %p55 = scmp.ne.s32.totalorder %s41, %s42
      %p56 = scmp.eq.s32.totalorder %s22, 3
      %p57 = por %p55, %p56
      %p59 = scmp.ne.s32.totalorder %s42, %s58
      %p60 = scmp.eq.s32.totalorder %s22, 0
      %p61 = por %p59, %p60
      %s62 = ssub.s32 %s24, %s31
      %p63 = scmp.eq.s32.totalorder %s62, 0
      %s65 = sadd.s32 %s64, 1
      %s66 = scalar_select %p63, %s64, %s65
      %p69 = pneg %p63
      %p70 = scmp.eq.s32.totalorder %s16, 3
      %p71 = por %p69, %p70
      %p72 = scmp.ne.s32.totalorder %s64, %s67
      %p73 = scmp.eq.s32.totalorder %s16, 0
      %p74 = por %p72, %p73
      %p75 = scmp.ne.s32.totalorder %s64, %s67
      %p76 = scmp.eq.s32.totalorder %s21, 3
      %p77 = por %p75, %p76
      %p78 = scmp.ne.s32.totalorder %s67, %s68
      %p79 = scmp.eq.s32.totalorder %s21, 0
      %p80 = por %p78, %p79
      %p81 = scmp.ne.s32.totalorder %s67, %s68
      %p82 = scmp.eq.s32.totalorder %s22, 3
      %p83 = por %p81, %p82
      %p85 = scmp.ne.s32.totalorder %s68, %s84
      %p86 = scmp.eq.s32.totalorder %s22, 0
      %p87 = por %p85, %p86
      %s88 = ssub.s32 %s24, %s31
      %p89 = scmp.eq.s32.totalorder %s88, 0
      %s91 = sadd.s32 %s90, 1
      %s92 = scalar_select %p89, %s90, %s91
      %p95 = pneg %p89
      %p96 = scmp.eq.s32.totalorder %s16, 3
      %p97 = por %p95, %p96
      %p98 = scmp.ne.s32.totalorder %s90, %s93
      %p99 = scmp.eq.s32.totalorder %s16, 0
      %p100 = por %p98, %p99
      %p101 = scmp.ne.s32.totalorder %s90, %s93
      %p102 = scmp.eq.s32.totalorder %s21, 3
      %p103 = por %p101, %p102
      %p104 = scmp.ne.s32.totalorder %s93, %s94
      %p105 = scmp.eq.s32.totalorder %s21, 0
      %p106 = por %p104, %p105
      %p107 = scmp.ne.s32.totalorder %s93, %s94
      %p108 = scmp.eq.s32.totalorder %s22, 3
      %p109 = por %p107, %p108
      %p111 = scmp.ne.s32.totalorder %s94, %s110
      %p112 = scmp.eq.s32.totalorder %s22, 0
      %p113 = por %p111, %p112
      %s114 = ssub.s32 %s24, %s31
      %p115 = scmp.eq.s32.totalorder %s114, 0
      %s117 = sadd.s32 %s116, 1
      %s118 = scalar_select %p115, %s116, %s117
      %p121 = pneg %p115
      %p122 = scmp.eq.s32.totalorder %s16, 3
      %p123 = por %p121, %p122
      %p124 = scmp.ne.s32.totalorder %s116, %s119
      %p125 = scmp.eq.s32.totalorder %s16, 0
      %p126 = por %p124, %p125
      %p127 = scmp.ne.s32.totalorder %s116, %s119
      %p128 = scmp.eq.s32.totalorder %s21, 3
      %p129 = por %p127, %p128
      %p130 = scmp.ne.s32.totalorder %s119, %s120
      %p131 = scmp.eq.s32.totalorder %s21, 0
      %p132 = por %p130, %p131
      %p133 = scmp.ne.s32.totalorder %s119, %s120
      %p134 = scmp.eq.s32.totalorder %s22, 3
      %p135 = por %p133, %p134
      %p137 = scmp.ne.s32.totalorder %s120, %s136
      %p138 = scmp.eq.s32.totalorder %s22, 0
      %p139 = por %p137, %p138
      %s140 = ssub.s32 %s24, %s31
      %p141 = scmp.eq.s32.totalorder %s140, 0
      %s143 = sadd.s32 %s142, 1
      %s144 = scalar_select %p141, %s142, %s143
      %p147 = pneg %p141
      %p148 = scmp.eq.s32.totalorder %s16, 3
      %p149 = por %p147, %p148
      %p150 = scmp.ne.s32.totalorder %s142, %s145
      %p151 = scmp.eq.s32.totalorder %s16, 0
      %p152 = por %p150, %p151
      %p153 = scmp.ne.s32.totalorder %s142, %s145
      %p154 = scmp.eq.s32.totalorder %s21, 3
      %p155 = por %p153, %p154
      %p156 = scmp.ne.s32.totalorder %s145, %s146
      %p157 = scmp.eq.s32.totalorder %s21, 0
      %p158 = por %p156, %p157
      %p159 = scmp.ne.s32.totalorder %s145, %s146
      %p160 = scmp.eq.s32.totalorder %s22, 3
      %p161 = por %p159, %p160
      %p163 = scmp.ne.s32.totalorder %s146, %s162
      %p164 = scmp.eq.s32.totalorder %s22, 0
      %p165 = por %p163, %p164
      %s166 = ssub.s32 %s24, %s31
      %p167 = scmp.eq.s32.totalorder %s166, 0
      %s169 = sadd.s32 %s168, 1
      %s170 = scalar_select %p167, %s168, %s169
      %p173 = pneg %p167
      %p174 = scmp.eq.s32.totalorder %s16, 3
      %p175 = por %p173, %p174
      %p176 = scmp.ne.s32.totalorder %s168, %s171
      %p177 = scmp.eq.s32.totalorder %s16, 0
      %p178 = por %p176, %p177
      %p179 = scmp.ne.s32.totalorder %s168, %s171
      %p180 = scmp.eq.s32.totalorder %s21, 3
      %p181 = por %p179, %p180
      %p182 = scmp.ne.s32.totalorder %s171, %s172
      %p183 = scmp.eq.s32.totalorder %s21, 0
      %p184 = por %p182, %p183
      %p185 = scmp.ne.s32.totalorder %s171, %s172
      %p186 = scmp.eq.s32.totalorder %s22, 3
      %p187 = por %p185, %p186
      %p189 = scmp.ne.s32.totalorder %s172, %s188
      %p190 = scmp.eq.s32.totalorder %s22, 0
      %p191 = por %p189, %p190
      %s192 = ssub.s32 %s24, %s31
      %p193 = scmp.eq.s32.totalorder %s192, 0
      %s195 = sadd.s32 %s194, 1
      %s196 = scalar_select %p193, %s194, %s195
      %p199 = pneg %p193
      %p200 = scmp.eq.s32.totalorder %s16, 3
      %p201 = por %p199, %p200
      %p202 = scmp.ne.s32.totalorder %s194, %s197
      %p203 = scmp.eq.s32.totalorder %s16, 0
      %p204 = por %p202, %p203
      %p205 = scmp.ne.s32.totalorder %s194, %s197
      %p206 = scmp.eq.s32.totalorder %s21, 3
      %p207 = por %p205, %p206
      %p208 = scmp.ne.s32.totalorder %s197, %s198
      %p209 = scmp.eq.s32.totalorder %s21, 0
      %p210 = por %p208, %p209
      %p211 = scmp.ne.s32.totalorder %s197, %s198
      %p212 = scmp.eq.s32.totalorder %s22, 3
      %p213 = por %p211, %p212
      %p215 = scmp.ne.s32.totalorder %s198, %s214
      %p216 = scmp.eq.s32.totalorder %s22, 0
      %p217 = por %p215, %p216
      %s218 = ssub.s32 %s23, %s35
      %p219 = scmp.eq.s32.totalorder %s218, 0
      %s221 = sadd.s32 %s220, 1
      %s222 = scalar_select %p219, %s220, %s221
      %p225 = pneg %p219
      %p226 = scmp.eq.s32.totalorder %s16, 3
      %p227 = por %p225, %p226
      %p228 = scmp.ne.s32.totalorder %s220, %s223
      %p229 = scmp.eq.s32.totalorder %s16, 0
      %p230 = por %p228, %p229
      %p231 = scmp.ne.s32.totalorder %s220, %s223
      %p232 = scmp.eq.s32.totalorder %s21, 3
      %p233 = por %p231, %p232
      %p234 = scmp.ne.s32.totalorder %s223, %s224
      %p235 = scmp.eq.s32.totalorder %s21, 0
      %p236 = por %p234, %p235
      %p237 = scmp.ne.s32.totalorder %s223, %s224
      %p238 = scmp.eq.s32.totalorder %s22, 3
      %p239 = por %p237, %p238
      %p241 = scmp.ne.s32.totalorder %s224, %s240
      %p242 = scmp.eq.s32.totalorder %s22, 0
      %p243 = por %p241, %p242
      %p244 = scmp.le.s32.totalorder 1, %s16
      %p245 = scmp.lt.s32.totalorder %s16, 5
      %p246 = pnand %p244, %p245
      %p247 = pneg %p246
      // Predicated region
      $region9: #{tpu_custom_call.1} parent=5 // pred_check
        _
      $region10: #{tpu_custom_call.1} parent=5 // pred_check_branch
        %249 = sbr.rel (%p246) target = $region12
      $region11: #{tpu_custom_call.1} parent=5 // pred_region
        %s250 = ssub.s32 %s16, 1
      $region12: #{tpu_custom_call.1} parent=5 // pred_fallthru
        _
      %p251 = scmp.lt.s32.totalorder %s16, 4
      // Predicated region
      $region13: #{tpu_custom_call.1} parent=5 // pred_check
        %p252 = pneg %p251
      $region14: #{tpu_custom_call.1} parent=5 // pred_check_branch
        %254 = sbr.rel (%p252) target = $region16
      $region15: #{tpu_custom_call.1} parent=5 // pred_region
        // Predicated region
        $region17: #{tpu_custom_call.1} parent=15 // pred_check
          %p255 = pneg %p48
        $region18: #{tpu_custom_call.1} parent=15 // pred_check_branch
          %257 = sbr.rel (%p255) target = $region20
        $region19: #{tpu_custom_call.1} parent=15 // pred_region
          %p258 = scmp.lt.s32.totalorder %s23, 1
          %s259 = scalar_select %p258, %s23, 1
          %s260 = smul.addr %s259, 4
          %s261 = smul.addr %s260, 8
          %s262 = scalar_lea.vmem %s0, %s261
        $region20: #{tpu_custom_call.1} parent=15 // pred_fallthru
          _
        // Predicated region
        $region21: #{tpu_custom_call.1} parent=15 // pred_check
          %p263 = pneg %p74
        $region22: #{tpu_custom_call.1} parent=15 // pred_check_branch
          %265 = sbr.rel (%p263) target = $region24
        $region23: #{tpu_custom_call.1} parent=15 // pred_region
          %p266 = scmp.lt.s32.totalorder %s24, 1
          %s267 = scalar_select %p266, %s24, 1
          %s268 = smul.addr %s267, 16
          %s269 = smul.addr %s268, 8
          %s270 = scalar_lea.vmem %s1, %s269
        $region24: #{tpu_custom_call.1} parent=15 // pred_fallthru
          _
        // Predicated region
        $region25: #{tpu_custom_call.1} parent=15 // pred_check
          %p271 = pneg %p100
        $region26: #{tpu_custom_call.1} parent=15 // pred_check_branch
          %273 = sbr.rel (%p271) target = $region28
        $region27: #{tpu_custom_call.1} parent=15 // pred_region
          %p274 = scmp.lt.s32.totalorder %s24, 1
          %s275 = scalar_select %p274, %s24, 1
          %s276 = smul.addr %s275, 12
          %s277 = smul.addr %s276, 8
          %s278 = scalar_lea.vmem %s2, %s277
        $region28: #{tpu_custom_call.1} parent=15 // pred_fallthru
          _
        // Predicated region
        $region29: #{tpu_custom_call.1} parent=15 // pred_check
          %p279 = pneg %p126
        $region30: #{tpu_custom_call.1} parent=15 // pred_check_branch
          %281 = sbr.rel (%p279) target = $region32
        $region31: #{tpu_custom_call.1} parent=15 // pred_region
          %p282 = scmp.lt.s32.totalorder %s24, 1
          %s283 = scalar_select %p282, %s24, 1
          %s284 = smul.addr %s283, 12
          %s285 = smul.addr %s284, 4
          %s286 = scalar_lea.vmem %s3, %s285
        $region32: #{tpu_custom_call.1} parent=15 // pred_fallthru
          _
        // Predicated region
        $region33: #{tpu_custom_call.1} parent=15 // pred_check
          %p287 = pneg %p152
        $region34: #{tpu_custom_call.1} parent=15 // pred_check_branch
          %289 = sbr.rel (%p287) target = $region36
        $region35: #{tpu_custom_call.1} parent=15 // pred_region
          %p290 = scmp.lt.s32.totalorder %s24, 1
          %s291 = scalar_select %p290, %s24, 1
          %s292 = smul.addr %s291, 16
          %s293 = smul.addr %s292, 4
          %s294 = scalar_lea.vmem %s4, %s293
        $region36: #{tpu_custom_call.1} parent=15 // pred_fallthru
          _
        // Predicated region
        $region37: #{tpu_custom_call.1} parent=15 // pred_check
          %p295 = pneg %p178
        $region38: #{tpu_custom_call.1} parent=15 // pred_check_branch
          %297 = sbr.rel (%p295) target = $region40
        $region39: #{tpu_custom_call.1} parent=15 // pred_region
          %p298 = scmp.lt.s32.totalorder %s24, 1
          %s299 = scalar_select %p298, %s24, 1
          %s300 = smul.addr %s299, 16
          %s301 = smul.addr %s300, 4
          %s302 = scalar_lea.vmem %s5, %s301
        $region40: #{tpu_custom_call.1} parent=15 // pred_fallthru
          _
        // Predicated region
        $region41: #{tpu_custom_call.1} parent=15 // pred_check
          %p303 = pneg %p204
        $region42: #{tpu_custom_call.1} parent=15 // pred_check_branch
          %305 = sbr.rel (%p303) target = $region44
        $region43: #{tpu_custom_call.1} parent=15 // pred_region
          %p306 = scmp.lt.s32.totalorder %s24, 1
          %s307 = scalar_select %p306, %s24, 1
          %s308 = smul.addr %s307, 4
          %s309 = smul.addr %s308, 4
          %s310 = scalar_lea.vmem %s6, %s309
        $region44: #{tpu_custom_call.1} parent=15 // pred_fallthru
          _
      $region16: #{tpu_custom_call.1} parent=5 // pred_fallthru
        _
      %p311 = scmp.le.s32.totalorder 1, %s16
      %p312 = scmp.lt.s32.totalorder %s16, 5
      %p313 = pnand %p311, %p312
      %p314 = pneg %p313
      // Predicated region
      $region45: #{tpu_custom_call.1} parent=5 // pred_check
        _
      $region46: #{tpu_custom_call.1} parent=5 // pred_check_branch
        %316 = sbr.rel (%p313) target = $region48
      $region47: #{tpu_custom_call.1} parent=5 // pred_region
        %s317 = ssub.s32 %s16, 1
        %p318 = scmp.lt.s32.totalorder %s25, 1
        %s319 = scalar_select %p318, %s25, 1
        %s320 = smul.addr %s319, 4
        %s321 = smul.addr %s320, 8
        %s322 = scalar_lea.vmem %s0, %s321
        %p323 = pneg %p54
        %p324 = pneg %p51
        %p325 = scmp.lt.s32.totalorder %s26, 1
        %s326 = scalar_select %p325, %s26, 1
        %s327 = smul.addr %s326, 16
        %s328 = smul.addr %s327, 8
        %s329 = scalar_lea.vmem %s1, %s328
        %p330 = pneg %p80
        %p331 = pneg %p77
        %p332 = scmp.lt.s32.totalorder %s26, 1
        %s333 = scalar_select %p332, %s26, 1
        %s334 = smul.addr %s333, 12
        %s335 = smul.addr %s334, 8
        %s336 = scalar_lea.vmem %s2, %s335
        %p337 = pneg %p106
        %p338 = pneg %p103
        %p339 = scmp.lt.s32.totalorder %s26, 1
        %s340 = scalar_select %p339, %s26, 1
        %s341 = smul.addr %s340, 12
        %s342 = smul.addr %s341, 4
        %s343 = scalar_lea.vmem %s3, %s342
        %p344 = pneg %p132
        %p345 = pneg %p129
        %p346 = scmp.lt.s32.totalorder %s26, 1
        %s347 = scalar_select %p346, %s26, 1
        %s348 = smul.addr %s347, 16
        %s349 = smul.addr %s348, 4
        %s350 = scalar_lea.vmem %s4, %s349
        %p351 = pneg %p158
        %p352 = pneg %p155
        %p353 = scmp.lt.s32.totalorder %s26, 1
        %s354 = scalar_select %p353, %s26, 1
        %s355 = smul.addr %s354, 16
        %s356 = smul.addr %s355, 4
        %s357 = scalar_lea.vmem %s5, %s356
        %p358 = pneg %p184
        %p359 = pneg %p181
        %p360 = scmp.lt.s32.totalorder %s26, 1
        %s361 = scalar_select %p360, %s26, 1
        %s362 = smul.addr %s361, 4
        %s363 = smul.addr %s362, 4
        %s364 = scalar_lea.vmem %s6, %s363
        %p365 = pneg %p210
        %p366 = pneg %p207
        %p367 = pneg %p236
        %p368 = pneg %p233
        %s369 = sand.u32 %s223, 1
        %s370 = scalar_lea.sflag [#allocation4], %s369
        %s371 = sand.u32 %s223, 1
        %s372 = smul.addr %s371, 32
        %s373 = scalar_lea.vmem [#allocation3], %s372
        %p374 = scmp.lt.s32.totalorder %s25, 1
        %s375 = scalar_select %p374, %s25, 1
        %s376 = smul.addr %s375, 4
        %s377 = smul.addr %s376, 8
        %s378 = scalar_lea.vmem %s0, %s377
        %p379 = scmp.lt.s32.totalorder %s26, 1
        %s380 = scalar_select %p379, %s26, 1
        %s381 = smul.addr %s380, 16
        %s382 = smul.addr %s381, 8
        %s383 = scalar_lea.vmem %s1, %s382
        %p384 = scmp.lt.s32.totalorder %s26, 1
        %s385 = scalar_select %p384, %s26, 1
        %s386 = smul.addr %s385, 12
        %s387 = smul.addr %s386, 8
        %s388 = scalar_lea.vmem %s2, %s387
        %p389 = scmp.lt.s32.totalorder %s26, 1
        %s390 = scalar_select %p389, %s26, 1
        %s391 = smul.addr %s390, 12
        %s392 = smul.addr %s391, 4
        %s393 = scalar_lea.vmem %s3, %s392
        %p394 = scmp.lt.s32.totalorder %s26, 1
        %s395 = scalar_select %p394, %s26, 1
        %s396 = smul.addr %s395, 16
        %s397 = smul.addr %s396, 4
        %s398 = scalar_lea.vmem %s4, %s397
        %p399 = scmp.lt.s32.totalorder %s26, 1
        %s400 = scalar_select %p399, %s26, 1
        %s401 = smul.addr %s400, 16
        %s402 = smul.addr %s401, 4
        %s403 = scalar_lea.vmem %s5, %s402
        %p404 = scmp.lt.s32.totalorder %s26, 1
        %s405 = scalar_select %p404, %s26, 1
        %s406 = smul.addr %s405, 4
        %s407 = smul.addr %s406, 4
        %s408 = scalar_lea.vmem %s6, %s407
        %p411 = scmp.eq.s32.totalorder %s26, 0
        // Predicated region
        $region49: #{tpu_custom_call.1} parent=47 // pred_check
          %p412 = pneg %p411
        $region50: #{tpu_custom_call.1} parent=47 // pred_check_branch
          %414 = sbr.rel (%p412) target = $region52
        $region51: #{tpu_custom_call.1} parent=47 // pred_region
          %v415 = vld [vmem:[%s378] sm:$0xff]
          %v416 = vld [vmem:[%s378 + $0x8] sm:$0xff]
          %v417 = vld [vmem:[%s378 + $0x10] sm:$0xff]
          %v418 = vld [vmem:[%s378 + $0x18] sm:$0xff]
          %419 = vst [vmem:[#allocation2] sm:$0xff] %v415
          %420 = vst [vmem:[#allocation2 + $0x8] sm:$0xff] %v416
          %421 = vst [vmem:[#allocation2 + $0x10] sm:$0xff] %v417
          %422 = vst [vmem:[#allocation2 + $0x18] sm:$0xff] %v418
        $region52: #{tpu_custom_call.1} parent=47 // pred_fallthru
          _
        %v423 = vld [vmem:[#allocation2] sm:$0xff]
        %v424 = vld [vmem:[#allocation2 + $0x8] sm:$0xff]
        %v425 = vld [vmem:[#allocation2 + $0x10] sm:$0xff]
        %v426 = vld [vmem:[#allocation2 + $0x18] sm:$0xff]
        %v427 = vld [vmem:[%s383] sm:$0xff]
        %v428 = vld [vmem:[%s383 + $0x8] sm:$0xff]
        %v429 = vld [vmem:[%s383 + $0x10] sm:$0xff]
        %v430 = vld [vmem:[%s383 + $0x18] sm:$0xff]
        %v431 = vld [vmem:[%s383 + $0x20] sm:$0xff]
        %v432 = vld [vmem:[%s383 + $0x28] sm:$0xff]
        %v433 = vld [vmem:[%s383 + $0x30] sm:$0xff]
        %v434 = vld [vmem:[%s383 + $0x38] sm:$0xff]
        %v435 = vld [vmem:[%s383 + $0x40] sm:$0xff]
        %v436 = vld [vmem:[%s383 + $0x48] sm:$0xff]
        %v437 = vld [vmem:[%s383 + $0x50] sm:$0xff]
        %v438 = vld [vmem:[%s383 + $0x58] sm:$0xff]
        %v439 = vld [vmem:[%s383 + $0x60] sm:$0xff]
        %v440 = vld [vmem:[%s383 + $0x68] sm:$0xff]
        %v441 = vld [vmem:[%s383 + $0x70] sm:$0xff]
        %v442 = vld [vmem:[%s383 + $0x78] sm:$0xff]
        %v443 = vld [vmem:[%s388] sm:$0xff]
        %v444 = vld [vmem:[%s388 + $0x8] sm:$0xff]
        %v445 = vld [vmem:[%s388 + $0x10] sm:$0xff]
        %v446 = vld [vmem:[%s388 + $0x18] sm:$0xff]
        %v447 = vld [vmem:[%s388 + $0x20] sm:$0xff]
        %v448 = vld [vmem:[%s388 + $0x28] sm:$0xff]
        %v449 = vld [vmem:[%s388 + $0x30] sm:$0xff]
        %v450 = vld [vmem:[%s388 + $0x38] sm:$0xff]
        %v451 = vld [vmem:[%s388 + $0x40] sm:$0xff]
        %v452 = vld [vmem:[%s388 + $0x48] sm:$0xff]
        %v453 = vld [vmem:[%s388 + $0x50] sm:$0xff]
        %v454 = vld [vmem:[%s388 + $0x58] sm:$0xff]
        %v455 = vld [vmem:[%s393] sm:$0xf]
        %v456 = vld [vmem:[%s393 + $0x4] sm:$0xf]
        %v457 = vld [vmem:[%s393 + $0x8] sm:$0xf]
        %v458 = vld [vmem:[%s393 + $0xc] sm:$0xf]
        %v459 = vld [vmem:[%s393 + $0x10] sm:$0xf]
        %v460 = vld [vmem:[%s393 + $0x14] sm:$0xf]
        %v461 = vld [vmem:[%s393 + $0x18] sm:$0xf]
        %v462 = vld [vmem:[%s393 + $0x1c] sm:$0xf]
        %v463 = vld [vmem:[%s393 + $0x20] sm:$0xf]
        %v464 = vld [vmem:[%s393 + $0x24] sm:$0xf]
        %v465 = vld [vmem:[%s393 + $0x28] sm:$0xf]
        %v466 = vld [vmem:[%s393 + $0x2c] sm:$0xf]
        %v467 = vld [vmem:[%s398] sm:$0xf]
        %v468 = vld [vmem:[%s398 + $0x4] sm:$0xf]
        %v469 = vld [vmem:[%s398 + $0x8] sm:$0xf]
        %v470 = vld [vmem:[%s398 + $0xc] sm:$0xf]
        %v471 = vld [vmem:[%s398 + $0x10] sm:$0xf]
        %v472 = vld [vmem:[%s398 + $0x14] sm:$0xf]
        %v473 = vld [vmem:[%s398 + $0x18] sm:$0xf]
        %v474 = vld [vmem:[%s398 + $0x1c] sm:$0xf]
        %v475 = vld [vmem:[%s398 + $0x20] sm:$0xf]
        %v476 = vld [vmem:[%s398 + $0x24] sm:$0xf]
        %v477 = vld [vmem:[%s398 + $0x28] sm:$0xf]
        %v478 = vld [vmem:[%s398 + $0x2c] sm:$0xf]
        %v479 = vld [vmem:[%s398 + $0x30] sm:$0xf]
        %v480 = vld [vmem:[%s398 + $0x34] sm:$0xf]
        %v481 = vld [vmem:[%s398 + $0x38] sm:$0xf]
        %v482 = vld [vmem:[%s398 + $0x3c] sm:$0xf]
        %v483 = vld [vmem:[%s403] sm:$0xf]
        %v484 = vld [vmem:[%s403 + $0x4] sm:$0xf]
        %v485 = vld [vmem:[%s403 + $0x8] sm:$0xf]
        %v486 = vld [vmem:[%s403 + $0xc] sm:$0xf]
        %v487 = vld [vmem:[%s403 + $0x10] sm:$0xf]
        %v488 = vld [vmem:[%s403 + $0x14] sm:$0xf]
        %v489 = vld [vmem:[%s403 + $0x18] sm:$0xf]
        %v490 = vld [vmem:[%s403 + $0x1c] sm:$0xf]
        %v491 = vld [vmem:[%s403 + $0x20] sm:$0xf]
        %v492 = vld [vmem:[%s403 + $0x24] sm:$0xf]
        %v493 = vld [vmem:[%s403 + $0x28] sm:$0xf]
        %v494 = vld [vmem:[%s403 + $0x2c] sm:$0xf]
        %v495 = vld [vmem:[%s403 + $0x30] sm:$0xf]
        %v496 = vld [vmem:[%s403 + $0x34] sm:$0xf]
        %v497 = vld [vmem:[%s403 + $0x38] sm:$0xf]
        %v498 = vld [vmem:[%s403 + $0x3c] sm:$0xf]
        %v499 = vld [vmem:[%s408] sm:$0xf]
        %v500 = vld [vmem:[%s408 + $0x4] sm:$0xf]
        %v501 = vld [vmem:[%s408 + $0x8] sm:$0xf]
        %v502 = vld [vmem:[%s408 + $0xc] sm:$0xf]
        %v503 = vadd.f32 %v423, %v424
        %v504 = vadd.f32 %v503, %v425
        %v505 = vadd.f32 %v504, %v426
        %v506 = vrot.slane %v505, 4
        %v507 = vadd.f32 %v505, %v506
        %v508 = vrot.slane %v507, 2
        %v509 = vadd.f32 %v507, %v508
        %v510 = vrot.slane %v509, 1
        %v511 = vadd.f32 %v509, %v510
        %v512 = vmul.f32 %v511, 0.03125
        %v513 = vsub.f32 %v423, %v512
        %v514 = vsub.f32 %v424, %v512
        %v515 = vsub.f32 %v425, %v512
        %v516 = vsub.f32 %v426, %v512
        %v517 = vmul.f32 %v513, %v513
        %v518 = vmul.f32 %v514, %v514
        %v519 = vmul.f32 %v515, %v515
        %v520 = vmul.f32 %v516, %v516
        %v521 = vadd.f32 %v517, %v518
        %v522 = vadd.f32 %v521, %v519
        %v523 = vadd.f32 %v522, %v520
        %v524 = vrot.slane %v523, 4
        %v525 = vadd.f32 %v523, %v524
        %v526 = vrot.slane %v525, 2
        %v527 = vadd.f32 %v525, %v526
        %v528 = vrot.slane %v527, 1
        %v529 = vadd.f32 %v527, %v528
        %v530 = vmul.f32 %v529, 0.03125
        %v531 = vadd.f32 %v530, 1e-06
        %v532 = vrsqrt.pop %v531
        %v533 = vmul.f32 %v513, %v532
        %v534 = vmul.f32 %v514, %v532
        %v535 = vmul.f32 %v515, %v532
        %v536 = vmul.f32 %v516, %v532
        %538 = vset.pattern.permute.xlu0 0
        %539 = vperm.xlu0 %538, %v427
        %v540 = vpop.permute.xlu0 %539
        %543 = vset.pattern.permute.xlu0 0
        %544 = vperm.xlu0 %543, %v428
        %v545 = vpop.permute.xlu0 %544
        %548 = vset.pattern.permute.xlu0 0
        %549 = vperm.xlu0 %548, %v429
        %v550 = vpop.permute.xlu0 %549
        %553 = vset.pattern.permute.xlu0 0
        %554 = vperm.xlu0 %553, %v430
        %v555 = vpop.permute.xlu0 %554
        %v557 = vmul.f32 %v533, %v540
        %v558 = vmul.f32 %v534, %v545
        %v559 = vmul.f32 %v535, %v550
        %v560 = vmul.f32 %v536, %v555
        %561 = vset.pattern.permute.xlu0 1
        %562 = vperm.xlu0 %561, %v427
        %v563 = vpop.permute.xlu0 %562
        %565 = vset.pattern.permute.xlu0 1
        %566 = vperm.xlu0 %565, %v428
        %v567 = vpop.permute.xlu0 %566
        %569 = vset.pattern.permute.xlu0 1
        %570 = vperm.xlu0 %569, %v429
        %v571 = vpop.permute.xlu0 %570
        %573 = vset.pattern.permute.xlu0 1
        %574 = vperm.xlu0 %573, %v430
        %v575 = vpop.permute.xlu0 %574
        %v577 = vadd.f32 %v557, %v563
        %v578 = vadd.f32 %v558, %v567
        %v579 = vadd.f32 %v559, %v571
        %v580 = vadd.f32 %v560, %v575
        %v581 = vpack.c.bf16 %v578, %v577
        %v582 = vpack.c.bf16 %v580, %v579
        %584 = vset.pattern.permute.xlu0 0
        %585 = vperm.xlu0 %584, %v443
        %v586 = vpop.permute.xlu0 %585
        %589 = vset.pattern.permute.xlu0 0
        %590 = vperm.xlu0 %589, %v444
        %v591 = vpop.permute.xlu0 %590
        %594 = vset.pattern.permute.xlu0 0
        %595 = vperm.xlu0 %594, %v445
        %v596 = vpop.permute.xlu0 %595
        %599 = vset.pattern.permute.xlu0 0
        %600 = vperm.xlu0 %599, %v446
        %v601 = vpop.permute.xlu0 %600
        %604 = vset.pattern.permute.xlu0 0
        %605 = vperm.xlu0 %604, %v447
        %v606 = vpop.permute.xlu0 %605
        %609 = vset.pattern.permute.xlu0 0
        %610 = vperm.xlu0 %609, %v448
        %v611 = vpop.permute.xlu0 %610
        %614 = vset.pattern.permute.xlu0 0
        %615 = vperm.xlu0 %614, %v449
        %v616 = vpop.permute.xlu0 %615
        %619 = vset.pattern.permute.xlu0 0
        %620 = vperm.xlu0 %619, %v450
        %v621 = vpop.permute.xlu0 %620
        %624 = vset.pattern.permute.xlu0 0
        %625 = vperm.xlu0 %624, %v451
        %v626 = vpop.permute.xlu0 %625
        %629 = vset.pattern.permute.xlu0 0
        %630 = vperm.xlu0 %629, %v452
        %v631 = vpop.permute.xlu0 %630
        %634 = vset.pattern.permute.xlu0 0
        %635 = vperm.xlu0 %634, %v453
        %v636 = vpop.permute.xlu0 %635
        %639 = vset.pattern.permute.xlu0 0
        %640 = vperm.xlu0 %639, %v454
        %v641 = vpop.permute.xlu0 %640
        %vm643 = vcmask 261120
        %v645 = vsel %vm643, %v455, 0
        %647 = vmatprep.subr.bf16.mxu0 0
        %648 = vmatpush1.bf16.msra.mxu0 %v581
        %649 = vmatprep.subr.bf16.mxu0 0
        %650 = vmatpush1.bf16.msra.mxu0 %v582
        %651 = vmatprep.subr.bf16.mxu0 0
        %652 = vmatpush1.bf16.msra.mxu0 0
        %653 = vmatprep.subr.bf16.mxu0 0
        %654 = vmatpush1.bf16.msra.mxu0 0
        %655 = vmatprep.subr.bf16.mxu0 0
        %656 = vmatpush1.bf16.msra.mxu0 0
        %657 = vmatprep.subr.bf16.mxu0 0
        %658 = vmatpush1.bf16.msra.mxu0 0
        %659 = vmatprep.subr.bf16.mxu0 0
        %660 = vmatpush1.bf16.msra.mxu0 0
        %661 = vmatprep.subr.bf16.mxu0 0
        %662 = vmatpush1.bf16.msra.mxu0 0
        %663 = vmatprep.subr.bf16.mxu0 0
        %664 = vmatpush1.bf16.msra.mxu0 0
        %665 = vmatprep.subr.bf16.mxu0 0
        %666 = vmatpush1.bf16.msra.mxu0 0
        %667 = vmatprep.subr.bf16.mxu0 0
        %668 = vmatpush1.bf16.msra.mxu0 0
        %669 = vmatprep.subr.bf16.mxu0 0
        %670 = vmatpush1.bf16.msra.mxu0 0
        %671 = vmatprep.subr.bf16.mxu0 0
        %672 = vmatpush1.bf16.msra.mxu0 0
        %673 = vmatprep.subr.bf16.mxu0 0
        %674 = vmatpush1.bf16.msra.mxu0 0
        %675 = vmatprep.subr.bf16.mxu0 0
        %676 = vmatpush1.bf16.msra.mxu0 0
        %677 = vmatprep.subr.bf16.mxu0 0
        %678 = vmatpush1.bf16.msra.mxu0 0
        %679 = vmatprep.mubr.bf16.mxu0 0
        %680 = vmatmul.mubr.bf16.gmra.mrb[0].mxu0 %v645
        %v681 = vpop.f32.mrb[0].mxu0
        %v682 = vadd.f32 %v586, %v681
        %v683 = vpop.f32.mrb[0].mxu0
        %v684 = vpop.f32.mrb[0].mxu0
        %v685 = vpop.f32.mrb[0].mxu0
        %686 = vdwg.mxu0
        %v688 = vsel %vm643, %v456, 0
        %690 = vmatprep.subr.bf16.mxu0 0
        %691 = vmatpush1.bf16.msra.mxu0 %v581
        %692 = vmatprep.subr.bf16.mxu0 0
        %693 = vmatpush1.bf16.msra.mxu0 %v582
        %694 = vmatprep.subr.bf16.mxu0 0
        %695 = vmatpush1.bf16.msra.mxu0 0
        %696 = vmatprep.subr.bf16.mxu0 0
        %697 = vmatpush1.bf16.msra.mxu0 0
        %698 = vmatprep.subr.bf16.mxu0 0
        %699 = vmatpush1.bf16.msra.mxu0 0
        %700 = vmatprep.subr.bf16.mxu0 0
        %701 = vmatpush1.bf16.msra.mxu0 0
        %702 = vmatprep.subr.bf16.mxu0 0
        %703 = vmatpush1.bf16.msra.mxu0 0
        %704 = vmatprep.subr.bf16.mxu0 0
        %705 = vmatpush1.bf16.msra.mxu0 0
        %706 = vmatprep.subr.bf16.mxu0 0
        %707 = vmatpush1.bf16.msra.mxu0 0
        %708 = vmatprep.subr.bf16.mxu0 0
        %709 = vmatpush1.bf16.msra.mxu0 0
        %710 = vmatprep.subr.bf16.mxu0 0
        %711 = vmatpush1.bf16.msra.mxu0 0
        %712 = vmatprep.subr.bf16.mxu0 0
        %713 = vmatpush1.bf16.msra.mxu0 0
        %714 = vmatprep.subr.bf16.mxu0 0
        %715 = vmatpush1.bf16.msra.mxu0 0
        %716 = vmatprep.subr.bf16.mxu0 0
        %717 = vmatpush1.bf16.msra.mxu0 0
        %718 = vmatprep.subr.bf16.mxu0 0
        %719 = vmatpush1.bf16.msra.mxu0 0
        %720 = vmatprep.subr.bf16.mxu0 0
        %721 = vmatpush1.bf16.msra.mxu0 0
        %722 = vmatprep.mubr.bf16.mxu0 0
        %723 = vmatmul.mubr.bf16.gmra.mrb[0].mxu0 %v688
        %v724 = vpop.f32.mrb[0].mxu0
        %v725 = vadd.f32 %v591, %v724
        %v726 = vpop.f32.mrb[0].mxu0
        %v727 = vpop.f32.mrb[0].mxu0
        %v728 = vpop.f32.mrb[0].mxu0
        %729 = vdwg.mxu0
        %v731 = vsel %vm643, %v457, 0
        %733 = vmatprep.subr.bf16.mxu0 0
        %734 = vmatpush1.bf16.msra.mxu0 %v581
        %735 = vmatprep.subr.bf16.mxu0 0
        %736 = vmatpush1.bf16.msra.mxu0 %v582
        %737 = vmatprep.subr.bf16.mxu0 0
        %738 = vmatpush1.bf16.msra.mxu0 0
        %739 = vmatprep.subr.bf16.mxu0 0
        %740 = vmatpush1.bf16.msra.mxu0 0
        %741 = vmatprep.subr.bf16.mxu0 0
        %742 = vmatpush1.bf16.msra.mxu0 0
        %743 = vmatprep.subr.bf16.mxu0 0
        %744 = vmatpush1.bf16.msra.mxu0 0
        %745 = vmatprep.subr.bf16.mxu0 0
        %746 = vmatpush1.bf16.msra.mxu0 0
        %747 = vmatprep.subr.bf16.mxu0 0
        %748 = vmatpush1.bf16.msra.mxu0 0
        %749 = vmatprep.subr.bf16.mxu0 0
        %750 = vmatpush1.bf16.msra.mxu0 0
        %751 = vmatprep.subr.bf16.mxu0 0
        %752 = vmatpush1.bf16.msra.mxu0 0
        %753 = vmatprep.subr.bf16.mxu0 0
        %754 = vmatpush1.bf16.msra.mxu0 0
        %755 = vmatprep.subr.bf16.mxu0 0
        %756 = vmatpush1.bf16.msra.mxu0 0
        %757 = vmatprep.subr.bf16.mxu0 0
        %758 = vmatpush1.bf16.msra.mxu0 0
        %759 = vmatprep.subr.bf16.mxu0 0
        %760 = vmatpush1.bf16.msra.mxu0 0
        %761 = vmatprep.subr.bf16.mxu0 0
        %762 = vmatpush1.bf16.msra.mxu0 0
        %763 = vmatprep.subr.bf16.mxu0 0
        %764 = vmatpush1.bf16.msra.mxu0 0
        %765 = vmatprep.mubr.bf16.mxu0 0
        %766 = vmatmul.mubr.bf16.gmra.mrb[0].mxu0 %v731
        %v767 = vpop.f32.mrb[0].mxu0
        %v768 = vadd.f32 %v596, %v767
        %v769 = vpop.f32.mrb[0].mxu0
        %v770 = vpop.f32.mrb[0].mxu0
        %v771 = vpop.f32.mrb[0].mxu0
        %772 = vdwg.mxu0
        %v774 = vsel %vm643, %v458, 0
        %776 = vmatprep.subr.bf16.mxu0 0
        %777 = vmatpush1.bf16.msra.mxu0 %v581
        %778 = vmatprep.subr.bf16.mxu0 0
        %779 = vmatpush1.bf16.msra.mxu0 %v582
        %780 = vmatprep.subr.bf16.mxu0 0
        %781 = vmatpush1.bf16.msra.mxu0 0
        %782 = vmatprep.subr.bf16.mxu0 0
        %783 = vmatpush1.bf16.msra.mxu0 0
        %784 = vmatprep.subr.bf16.mxu0 0
        %785 = vmatpush1.bf16.msra.mxu0 0
        %786 = vmatprep.subr.bf16.mxu0 0
        %787 = vmatpush1.bf16.msra.mxu0 0
        %788 = vmatprep.subr.bf16.mxu0 0
        %789 = vmatpush1.bf16.msra.mxu0 0
        %790 = vmatprep.subr.bf16.mxu0 0
        %791 = vmatpush1.bf16.msra.mxu0 0
        %792 = vmatprep.subr.bf16.mxu0 0
        %793 = vmatpush1.bf16.msra.mxu0 0
        %794 = vmatprep.subr.bf16.mxu0 0
        %795 = vmatpush1.bf16.msra.mxu0 0
        %796 = vmatprep.subr.bf16.mxu0 0
        %797 = vmatpush1.bf16.msra.mxu0 0
        %798 = vmatprep.subr.bf16.mxu0 0
        %799 = vmatpush1.bf16.msra.mxu0 0
        %800 = vmatprep.subr.bf16.mxu0 0
        %801 = vmatpush1.bf16.msra.mxu0 0
        %802 = vmatprep.subr.bf16.mxu0 0
        %803 = vmatpush1.bf16.msra.mxu0 0
        %804 = vmatprep.subr.bf16.mxu0 0
        %805 = vmatpush1.bf16.msra.mxu0 0
        %806 = vmatprep.subr.bf16.mxu0 0
        %807 = vmatpush1.bf16.msra.mxu0 0
        %808 = vmatprep.mubr.bf16.mxu0 0
        %809 = vmatmul.mubr.bf16.gmra.mrb[0].mxu0 %v774
        %v810 = vpop.f32.mrb[0].mxu0
        %v811 = vadd.f32 %v601, %v810
        %v812 = vpop.f32.mrb[0].mxu0
        %v813 = vpop.f32.mrb[0].mxu0
        %v814 = vpop.f32.mrb[0].mxu0
        %815 = vdwg.mxu0
        %v817 = vsel %vm643, %v459, 0
        %819 = vmatprep.subr.bf16.mxu0 0
        %820 = vmatpush1.bf16.msra.mxu0 %v581
        %821 = vmatprep.subr.bf16.mxu0 0
        %822 = vmatpush1.bf16.msra.mxu0 %v582
        %823 = vmatprep.subr.bf16.mxu0 0
        %824 = vmatpush1.bf16.msra.mxu0 0
        %825 = vmatprep.subr.bf16.mxu0 0
        %826 = vmatpush1.bf16.msra.mxu0 0
        %827 = vmatprep.subr.bf16.mxu0 0
        %828 = vmatpush1.bf16.msra.mxu0 0
        %829 = vmatprep.subr.bf16.mxu0 0
        %830 = vmatpush1.bf16.msra.mxu0 0
        %831 = vmatprep.subr.bf16.mxu0 0
        %832 = vmatpush1.bf16.msra.mxu0 0
        %833 = vmatprep.subr.bf16.mxu0 0
        %834 = vmatpush1.bf16.msra.mxu0 0
        %835 = vmatprep.subr.bf16.mxu0 0
        %836 = vmatpush1.bf16.msra.mxu0 0
        %837 = vmatprep.subr.bf16.mxu0 0
        %838 = vmatpush1.bf16.msra.mxu0 0
        %839 = vmatprep.subr.bf16.mxu0 0
        %840 = vmatpush1.bf16.msra.mxu0 0
        %841 = vmatprep.subr.bf16.mxu0 0
        %842 = vmatpush1.bf16.msra.mxu0 0
        %843 = vmatprep.subr.bf16.mxu0 0
        %844 = vmatpush1.bf16.msra.mxu0 0
        %845 = vmatprep.subr.bf16.mxu0 0
        %846 = vmatpush1.bf16.msra.mxu0 0
        %847 = vmatprep.subr.bf16.mxu0 0
        %848 = vmatpush1.bf16.msra.mxu0 0
        %849 = vmatprep.subr.bf16.mxu0 0
        %850 = vmatpush1.bf16.msra.mxu0 0
        %851 = vmatprep.mubr.bf16.mxu0 0
        %852 = vmatmul.mubr.bf16.gmra.mrb[0].mxu0 %v817
        %v853 = vpop.f32.mrb[0].mxu0
        %v854 = vadd.f32 %v606, %v853
        %v855 = vpop.f32.mrb[0].mxu0
        %v856 = vpop.f32.mrb[0].mxu0
        %v857 = vpop.f32.mrb[0].mxu0
        %858 = vdwg.mxu0
        %v860 = vsel %vm643, %v460, 0
        %862 = vmatprep.subr.bf16.mxu0 0
        %863 = vmatpush1.bf16.msra.mxu0 %v581
        %864 = vmatprep.subr.bf16.mxu0 0
        %865 = vmatpush1.bf16.msra.mxu0 %v582
        %866 = vmatprep.subr.bf16.mxu0 0
        %867 = vmatpush1.bf16.msra.mxu0 0
        %868 = vmatprep.subr.bf16.mxu0 0
        %869 = vmatpush1.bf16.msra.mxu0 0
        %870 = vmatprep.subr.bf16.mxu0 0
        %871 = vmatpush1.bf16.msra.mxu0 0
        %872 = vmatprep.subr.bf16.mxu0 0
        %873 = vmatpush1.bf16.msra.mxu0 0
        %874 = vmatprep.subr.bf16.mxu0 0
        %875 = vmatpush1.bf16.msra.mxu0 0
        %876 = vmatprep.subr.bf16.mxu0 0
        %877 = vmatpush1.bf16.msra.mxu0 0
        %878 = vmatprep.subr.bf16.mxu0 0
        %879 = vmatpush1.bf16.msra.mxu0 0
        %880 = vmatprep.subr.bf16.mxu0 0
        %881 = vmatpush1.bf16.msra.mxu0 0
        %882 = vmatprep.subr.bf16.mxu0 0
        %883 = vmatpush1.bf16.msra.mxu0 0
        %884 = vmatprep.subr.bf16.mxu0 0
        %885 = vmatpush1.bf16.msra.mxu0 0
        %886 = vmatprep.subr.bf16.mxu0 0
        %887 = vmatpush1.bf16.msra.mxu0 0
        %888 = vmatprep.subr.bf16.mxu0 0
        %889 = vmatpush1.bf16.msra.mxu0 0
        %890 = vmatprep.subr.bf16.mxu0 0
        %891 = vmatpush1.bf16.msra.mxu0 0
        %892 = vmatprep.subr.bf16.mxu0 0
        %893 = vmatpush1.bf16.msra.mxu0 0
        %894 = vmatprep.mubr.bf16.mxu0 0
        %895 = vmatmul.mubr.bf16.gmra.mrb[0].mxu0 %v860
        %v896 = vpop.f32.mrb[0].mxu0
        %v897 = vadd.f32 %v611, %v896
        %v898 = vpop.f32.mrb[0].mxu0
        %v899 = vpop.f32.mrb[0].mxu0
        %v900 = vpop.f32.mrb[0].mxu0
        %901 = vdwg.mxu0
        %v903 = vsel %vm643, %v461, 0
        %905 = vmatprep.subr.bf16.mxu0 0
        %906 = vmatpush1.bf16.msra.mxu0 %v581
        %907 = vmatprep.subr.bf16.mxu0 0
        %908 = vmatpush1.bf16.msra.mxu0 %v582
        %909 = vmatprep.subr.bf16.mxu0 0
        %910 = vmatpush1.bf16.msra.mxu0 0
        %911 = vmatprep.subr.bf16.mxu0 0
        %912 = vmatpush1.bf16.msra.mxu0 0
        %913 = vmatprep.subr.bf16.mxu0 0
        %914 = vmatpush1.bf16.msra.mxu0 0
        %915 = vmatprep.subr.bf16.mxu0 0
        %916 = vmatpush1.bf16.msra.mxu0 0
        %917 = vmatprep.subr.bf16.mxu0 0
        %918 = vmatpush1.bf16.msra.mxu0 0
        %919 = vmatprep.subr.bf16.mxu0 0
        %920 = vmatpush1.bf16.msra.mxu0 0
        %921 = vmatprep.subr.bf16.mxu0 0
        %922 = vmatpush1.bf16.msra.mxu0 0
        %923 = vmatprep.subr.bf16.mxu0 0
        %924 = vmatpush1.bf16.msra.mxu0 0
        %925 = vmatprep.subr.bf16.mxu0 0
        %926 = vmatpush1.bf16.msra.mxu0 0
        %927 = vmatprep.subr.bf16.mxu0 0
        %928 = vmatpush1.bf16.msra.mxu0 0
        %929 = vmatprep.subr.bf16.mxu0 0
        %930 = vmatpush1.bf16.msra.mxu0 0
        %931 = vmatprep.subr.bf16.mxu0 0
        %932 = vmatpush1.bf16.msra.mxu0 0
        %933 = vmatprep.subr.bf16.mxu0 0
        %934 = vmatpush1.bf16.msra.mxu0 0
        %935 = vmatprep.subr.bf16.mxu0 0
        %936 = vmatpush1.bf16.msra.mxu0 0
        %937 = vmatprep.mubr.bf16.mxu0 0
        %938 = vmatmul.mubr.bf16.gmra.mrb[0].mxu0 %v903
        %v939 = vpop.f32.mrb[0].mxu0
        %v940 = vadd.f32 %v616, %v939
        %v941 = vpop.f32.mrb[0].mxu0
        %v942 = vpop.f32.mrb[0].mxu0
        %v943 = vpop.f32.mrb[0].mxu0
        %944 = vdwg.mxu0
        %v946 = vsel %vm643, %v462, 0
        %948 = vmatprep.subr.bf16.mxu0 0
        %949 = vmatpush1.bf16.msra.mxu0 %v581
        %950 = vmatprep.subr.bf16.mxu0 0
        %951 = vmatpush1.bf16.msra.mxu0 %v582
        %952 = vmatprep.subr.bf16.mxu0 0
        %953 = vmatpush1.bf16.msra.mxu0 0
        %954 = vmatprep.subr.bf16.mxu0 0
        %955 = vmatpush1.bf16.msra.mxu0 0
        %956 = vmatprep.subr.bf16.mxu0 0
        %957 = vmatpush1.bf16.msra.mxu0 0
        %958 = vmatprep.subr.bf16.mxu0 0
        %959 = vmatpush1.bf16.msra.mxu0 0
        %960 = vmatprep.subr.bf16.mxu0 0
        %961 = vmatpush1.bf16.msra.mxu0 0
        %962 = vmatprep.subr.bf16.mxu0 0
        %963 = vmatpush1.bf16.msra.mxu0 0
        %964 = vmatprep.subr.bf16.mxu0 0
        %965 = vmatpush1.bf16.msra.mxu0 0
        %966 = vmatprep.subr.bf16.mxu0 0
        %967 = vmatpush1.bf16.msra.mxu0 0
        %968 = vmatprep.subr.bf16.mxu0 0
        %969 = vmatpush1.bf16.msra.mxu0 0
        %970 = vmatprep.subr.bf16.mxu0 0
        %971 = vmatpush1.bf16.msra.mxu0 0
        %972 = vmatprep.subr.bf16.mxu0 0
        %973 = vmatpush1.bf16.msra.mxu0 0
        %974 = vmatprep.subr.bf16.mxu0 0
        %975 = vmatpush1.bf16.msra.mxu0 0
        %976 = vmatprep.subr.bf16.mxu0 0
        %977 = vmatpush1.bf16.msra.mxu0 0
        %978 = vmatprep.subr.bf16.mxu0 0
        %979 = vmatpush1.bf16.msra.mxu0 0
        %980 = vmatprep.mubr.bf16.mxu0 0
        %981 = vmatmul.mubr.bf16.gmra.mrb[0].mxu0 %v946
        %v982 = vpop.f32.mrb[0].mxu0
        %v983 = vadd.f32 %v621, %v982
        %v984 = vpop.f32.mrb[0].mxu0
        %v985 = vpop.f32.mrb[0].mxu0
        %v986 = vpop.f32.mrb[0].mxu0
        %987 = vdwg.mxu0
        %v989 = vsel %vm643, %v463, 0
        %991 = vmatprep.subr.bf16.mxu0 0
        %992 = vmatpush1.bf16.msra.mxu0 %v581
        %993 = vmatprep.subr.bf16.mxu0 0
        %994 = vmatpush1.bf16.msra.mxu0 %v582
        %995 = vmatprep.subr.bf16.mxu0 0
        %996 = vmatpush1.bf16.msra.mxu0 0
        %997 = vmatprep.subr.bf16.mxu0 0
        %998 = vmatpush1.bf16.msra.mxu0 0
        %999 = vmatprep.subr.bf16.mxu0 0
        %1000 = vmatpush1.bf16.msra.mxu0 0
        %1001 = vmatprep.subr.bf16.mxu0 0
        %1002 = vmatpush1.bf16.msra.mxu0 0
        %1003 = vmatprep.subr.bf16.mxu0 0
        %1004 = vmatpush1.bf16.msra.mxu0 0
        %1005 = vmatprep.subr.bf16.mxu0 0
        %1006 = vmatpush1.bf16.msra.mxu0 0
        %1007 = vmatprep.subr.bf16.mxu0 0
        %1008 = vmatpush1.bf16.msra.mxu0 0
        %1009 = vmatprep.subr.bf16.mxu0 0
        %1010 = vmatpush1.bf16.msra.mxu0 0
        %1011 = vmatprep.subr.bf16.mxu0 0
        %1012 = vmatpush1.bf16.msra.mxu0 0
        %1013 = vmatprep.subr.bf16.mxu0 0
        %1014 = vmatpush1.bf16.msra.mxu0 0
        %1015 = vmatprep.subr.bf16.mxu0 0
        %1016 = vmatpush1.bf16.msra.mxu0 0
        %1017 = vmatprep.subr.bf16.mxu0 0
        %1018 = vmatpush1.bf16.msra.mxu0 0
        %1019 = vmatprep.subr.bf16.mxu0 0
        %1020 = vmatpush1.bf16.msra.mxu0 0
        %1021 = vmatprep.subr.bf16.mxu0 0
        %1022 = vmatpush1.bf16.msra.mxu0 0
        %1023 = vmatprep.mubr.bf16.mxu0 0
        %1024 = vmatmul.mubr.bf16.gmra.mrb[0].mxu0 %v989
        %v1025 = vpop.f32.mrb[0].mxu0
        %v1026 = vadd.f32 %v626, %v1025
        %v1027 = vpop.f32.mrb[0].mxu0
        %v1028 = vpop.f32.mrb[0].mxu0
        %v1029 = vpop.f32.mrb[0].mxu0
        %1030 = vdwg.mxu0
        %v1032 = vsel %vm643, %v464, 0
        %1034 = vmatprep.subr.bf16.mxu0 0
        %1035 = vmatpush1.bf16.msra.mxu0 %v581
        %1036 = vmatprep.subr.bf16.mxu0 0
        %1037 = vmatpush1.bf16.msra.mxu0 %v582
        %1038 = vmatprep.subr.bf16.mxu0 0
        %1039 = vmatpush1.bf16.msra.mxu0 0
        %1040 = vmatprep.subr.bf16.mxu0 0
        %1041 = vmatpush1.bf16.msra.mxu0 0
        %1042 = vmatprep.subr.bf16.mxu0 0
        %1043 = vmatpush1.bf16.msra.mxu0 0
        %1044 = vmatprep.subr.bf16.mxu0 0
        %1045 = vmatpush1.bf16.msra.mxu0 0
        %1046 = vmatprep.subr.bf16.mxu0 0
        %1047 = vmatpush1.bf16.msra.mxu0 0
        %1048 = vmatprep.subr.bf16.mxu0 0
        %1049 = vmatpush1.bf16.msra.mxu0 0
        %1050 = vmatprep.subr.bf16.mxu0 0
        %1051 = vmatpush1.bf16.msra.mxu0 0
        %1052 = vmatprep.subr.bf16.mxu0 0
        %1053 = vmatpush1.bf16.msra.mxu0 0
        %1054 = vmatprep.subr.bf16.mxu0 0
        %1055 = vmatpush1.bf16.msra.mxu0 0
        %1056 = vmatprep.subr.bf16.mxu0 0
        %1057 = vmatpush1.bf16.msra.mxu0 0
        %1058 = vmatprep.subr.bf16.mxu0 0
        %1059 = vmatpush1.bf16.msra.mxu0 0
        %1060 = vmatprep.subr.bf16.mxu0 0
        %1061 = vmatpush1.bf16.msra.mxu0 0
        %1062 = vmatprep.subr.bf16.mxu0 0
        %1063 = vmatpush1.bf16.msra.mxu0 0
        %1064 = vmatprep.subr.bf16.mxu0 0
        %1065 = vmatpush1.bf16.msra.mxu0 0
        %1066 = vmatprep.mubr.bf16.mxu0 0
        %1067 = vmatmul.mubr.bf16.gmra.mrb[0].mxu0 %v1032
        %v1068 = vpop.f32.mrb[0].mxu0
        %v1069 = vadd.f32 %v631, %v1068
        %v1070 = vpop.f32.mrb[0].mxu0
        %v1071 = vpop.f32.mrb[0].mxu0
        %v1072 = vpop.f32.mrb[0].mxu0
        %1073 = vdwg.mxu0
        %v1075 = vsel %vm643, %v465, 0
        %1077 = vmatprep.subr.bf16.mxu0 0
        %1078 = vmatpush1.bf16.msra.mxu0 %v581
        %1079 = vmatprep.subr.bf16.mxu0 0
        %1080 = vmatpush1.bf16.msra.mxu0 %v582
        %1081 = vmatprep.subr.bf16.mxu0 0
        %1082 = vmatpush1.bf16.msra.mxu0 0
        %1083 = vmatprep.subr.bf16.mxu0 0
        %1084 = vmatpush1.bf16.msra.mxu0 0
        %1085 = vmatprep.subr.bf16.mxu0 0
        %1086 = vmatpush1.bf16.msra.mxu0 0
        %1087 = vmatprep.subr.bf16.mxu0 0
        %1088 = vmatpush1.bf16.msra.mxu0 0
        %1089 = vmatprep.subr.bf16.mxu0 0
        %1090 = vmatpush1.bf16.msra.mxu0 0
        %1091 = vmatprep.subr.bf16.mxu0 0
        %1092 = vmatpush1.bf16.msra.mxu0 0
        %1093 = vmatprep.subr.bf16.mxu0 0
        %1094 = vmatpush1.bf16.msra.mxu0 0
        %1095 = vmatprep.subr.bf16.mxu0 0
        %1096 = vmatpush1.bf16.msra.mxu0 0
        %1097 = vmatprep.subr.bf16.mxu0 0
        %1098 = vmatpush1.bf16.msra.mxu0 0
        %1099 = vmatprep.subr.bf16.mxu0 0
        %1100 = vmatpush1.bf16.msra.mxu0 0
        %1101 = vmatprep.subr.bf16.mxu0 0
        %1102 = vmatpush1.bf16.msra.mxu0 0
        %1103 = vmatprep.subr.bf16.mxu0 0
        %1104 = vmatpush1.bf16.msra.mxu0 0
        %1105 = vmatprep.subr.bf16.mxu0 0
        %1106 = vmatpush1.bf16.msra.mxu0 0
        %1107 = vmatprep.subr.bf16.mxu0 0
        %1108 = vmatpush1.bf16.msra.mxu0 0
        %1109 = vmatprep.mubr.bf16.mxu0 0
        %1110 = vmatmul.mubr.bf16.gmra.mrb[0].mxu0 %v1075
        %v1111 = vpop.f32.mrb[0].mxu0
        %v1112 = vadd.f32 %v636, %v1111
        %v1113 = vpop.f32.mrb[0].mxu0
        %v1114 = vpop.f32.mrb[0].mxu0
        %v1115 = vpop.f32.mrb[0].mxu0
        %1116 = vdwg.mxu0
        %v1118 = vsel %vm643, %v466, 0
        %1120 = vmatprep.subr.bf16.mxu0 0
        %1121 = vmatpush1.bf16.msra.mxu0 %v581
        %1122 = vmatprep.subr.bf16.mxu0 0
        %1123 = vmatpush1.bf16.msra.mxu0 %v582
        %1124 = vmatprep.subr.bf16.mxu0 0
        %1125 = vmatpush1.bf16.msra.mxu0 0
        %1126 = vmatprep.subr.bf16.mxu0 0
        %1127 = vmatpush1.bf16.msra.mxu0 0
        %1128 = vmatprep.subr.bf16.mxu0 0
        %1129 = vmatpush1.bf16.msra.mxu0 0
        %1130 = vmatprep.subr.bf16.mxu0 0
        %1131 = vmatpush1.bf16.msra.mxu0 0
        %1132 = vmatprep.subr.bf16.mxu0 0
        %1133 = vmatpush1.bf16.msra.mxu0 0
        %1134 = vmatprep.subr.bf16.mxu0 0
        %1135 = vmatpush1.bf16.msra.mxu0 0
        %1136 = vmatprep.subr.bf16.mxu0 0
        %1137 = vmatpush1.bf16.msra.mxu0 0
        %1138 = vmatprep.subr.bf16.mxu0 0
        %1139 = vmatpush1.bf16.msra.mxu0 0
        %1140 = vmatprep.subr.bf16.mxu0 0
        %1141 = vmatpush1.bf16.msra.mxu0 0
        %1142 = vmatprep.subr.bf16.mxu0 0
        %1143 = vmatpush1.bf16.msra.mxu0 0
        %1144 = vmatprep.subr.bf16.mxu0 0
        %1145 = vmatpush1.bf16.msra.mxu0 0
        %1146 = vmatprep.subr.bf16.mxu0 0
        %1147 = vmatpush1.bf16.msra.mxu0 0
        %1148 = vmatprep.subr.bf16.mxu0 0
        %1149 = vmatpush1.bf16.msra.mxu0 0
        %1150 = vmatprep.subr.bf16.mxu0 0
        %1151 = vmatpush1.bf16.msra.mxu0 0
        %1152 = vmatprep.mubr.bf16.mxu0 0
        %1153 = vmatmul.mubr.bf16.gmra.mrb[0].mxu0 %v1118
        %v1154 = vpop.f32.mrb[0].mxu0
        %v1155 = vadd.f32 %v641, %v1154
        %v1156 = vpop.f32.mrb[0].mxu0
        %v1157 = vpop.f32.mrb[0].mxu0
        %v1158 = vpop.f32.mrb[0].mxu0
        %1159 = vdwg.mxu0
        %v1160 = vpack.c.bf16 %v682, %v682
        %v1161 = vpack.c.bf16 %v725, %v725
        %v1162 = vpack.c.bf16 %v768, %v768
        %v1163 = vpack.c.bf16 %v811, %v811
        %v1164 = vpack.c.bf16 %v854, %v854
        %v1165 = vpack.c.bf16 %v897, %v897
        %v1166 = vpack.c.bf16 %v940, %v940
        %v1167 = vpack.c.bf16 %v983, %v983
        %v1168 = vpack.c.bf16 %v1026, %v1026
        %v1169 = vpack.c.bf16 %v1069, %v1069
        %v1170 = vpack.c.bf16 %v1112, %v1112
        %v1171 = vpack.c.bf16 %v1155, %v1155
        %1172 = vxpose.xlu0.c.b16.start [1/8] %v1160, 128
        %1173 = vxpose.xlu0.c.b16.cont [2/8] 0, 128
        %1174 = vxpose.xlu0.c.b16.cont [3/8] 0, 128
        %1175 = vxpose.xlu0.c.b16.cont [4/8] 0, 128
        %1176 = vxpose.xlu0.c.b16.cont [5/8] 0, 128
        %1177 = vxpose.xlu0.c.b16.cont [6/8] 0, 128
        %1178 = vxpose.xlu0.c.b16.cont [7/8] 0, 128
        %1179 = vxpose.xlu0.c.b16.end [8/8] 0, 128
        %v1180 = vpop.trf.xlu0
        %v1181 = vpop.trf.xlu0
        %v1182 = vpop.trf.xlu0
        %v1183 = vpop.trf.xlu0
        %v1184 = vpop.trf.xlu0
        %v1185 = vpop.trf.xlu0
        %v1186 = vpop.trf.xlu0
        %v1187 = vpop.trf.xlu0
        %vm1188 = vcmask 64512
        %v1190 = vsel %vm1188, %v1180, 0
        %v1193 = vsel %vm1188, %v1181, 0
        %v1196 = vsel %vm1188, %v1182, 0
        %v1199 = vsel %vm1188, %v1183, 0
        %v1202 = vsel %vm1188, %v1184, 0
        %v1205 = vsel %vm1188, %v1185, 0
        %v1208 = vsel %vm1188, %v1186, 0
        %v1211 = vsel %vm1188, %v1187, 0
        %vm1213 = vcmask 1043456
        %v1215 = vsel %vm1213, %v1164, 0
        %1217 = vmatprep.subr.bf16.mxu0 0
        %1218 = vmatpush1.bf16.msra.mxu0 %v1215
        %1219 = vmatprep.subr.bf16.mxu0 0
        %1220 = vmatpush1.bf16.msra.mxu0 0
        %1221 = vmatprep.subr.bf16.mxu0 0
        %1222 = vmatpush1.bf16.msra.mxu0 0
        %1223 = vmatprep.subr.bf16.mxu0 0
        %1224 = vmatpush1.bf16.msra.mxu0 0
        %1225 = vmatprep.subr.bf16.mxu0 0
        %1226 = vmatpush1.bf16.msra.mxu0 0
        %1227 = vmatprep.subr.bf16.mxu0 0
        %1228 = vmatpush1.bf16.msra.mxu0 0
        %1229 = vmatprep.subr.bf16.mxu0 0
        %1230 = vmatpush1.bf16.msra.mxu0 0
        %1231 = vmatprep.subr.bf16.mxu0 0
        %1232 = vmatpush1.bf16.msra.mxu0 0
        %1233 = vmatprep.subr.bf16.mxu0 0
        %1234 = vmatpush1.bf16.msra.mxu0 0
        %1235 = vmatprep.subr.bf16.mxu0 0
        %1236 = vmatpush1.bf16.msra.mxu0 0
        %1237 = vmatprep.subr.bf16.mxu0 0
        %1238 = vmatpush1.bf16.msra.mxu0 0
        %1239 = vmatprep.subr.bf16.mxu0 0
        %1240 = vmatpush1.bf16.msra.mxu0 0
        %1241 = vmatprep.subr.bf16.mxu0 0
        %1242 = vmatpush1.bf16.msra.mxu0 0
        %1243 = vmatprep.subr.bf16.mxu0 0
        %1244 = vmatpush1.bf16.msra.mxu0 0
        %1245 = vmatprep.subr.bf16.mxu0 0
        %1246 = vmatpush1.bf16.msra.mxu0 0
        %1247 = vmatprep.subr.bf16.mxu0 0
        %1248 = vmatpush1.bf16.msra.mxu0 0
        %1249 = vmatprep.mubr.bf16.mxu0 0
        %1250 = vmatmul.mubr.bf16.gmra.mrb[0].mxu0 %v1190
        %v1251 = vpop.f32.mrb[0].mxu0
        %v1252 = vadd.f32 0.0, %v1251
        %v1253 = vpop.f32.mrb[0].mxu0
        %v1254 = vpop.f32.mrb[0].mxu0
        %v1255 = vadd.f32 0.0, %v1254
        %v1256 = vpop.f32.mrb[0].mxu0
        %1257 = vmatprep.mubr.bf16.mxu0 0
        %1258 = vmatmul.mubr.bf16.gmra.mrb[0].mxu0 %v1193
        %v1259 = vpop.f32.mrb[0].mxu0
        %v1260 = vadd.f32 0.0, %v1259
        %v1261 = vpop.f32.mrb[0].mxu0
        %v1262 = vpop.f32.mrb[0].mxu0
        %v1263 = vadd.f32 0.0, %v1262
        %v1264 = vpop.f32.mrb[0].mxu0
        %1265 = vmatprep.mubr.bf16.mxu0 0
        %1266 = vmatmul.mubr.bf16.gmra.mrb[0].mxu0 %v1196
        %v1267 = vpop.f32.mrb[0].mxu0
        %v1268 = vadd.f32 0.0, %v1267
        %v1269 = vpop.f32.mrb[0].mxu0
        %v1270 = vpop.f32.mrb[0].mxu0
        %v1271 = vadd.f32 0.0, %v1270
        %v1272 = vpop.f32.mrb[0].mxu0
        %1273 = vmatprep.mubr.bf16.mxu0 0
        %1274 = vmatmul.mubr.bf16.gmra.mrb[0].mxu0 %v1199
        %v1275 = vpop.f32.mrb[0].mxu0
        %v1276 = vadd.f32 0.0, %v1275
        %v1277 = vpop.f32.mrb[0].mxu0
        %v1278 = vpop.f32.mrb[0].mxu0
        %v1279 = vadd.f32 0.0, %v1278
        %v1280 = vpop.f32.mrb[0].mxu0
        %1281 = vmatprep.mubr.bf16.mxu0 0
        %1282 = vmatmul.mubr.bf16.gmra.mrb[0].mxu0 %v1202
        %v1283 = vpop.f32.mrb[0].mxu0
        %v1284 = vadd.f32 0.0, %v1283
        %v1285 = vpop.f32.mrb[0].mxu0
        %v1286 = vpop.f32.mrb[0].mxu0
        %v1287 = vadd.f32 0.0, %v1286
        %v1288 = vpop.f32.mrb[0].mxu0
        %1289 = vmatprep.mubr.bf16.mxu0 0
        %1290 = vmatmul.mubr.bf16.gmra.mrb[0].mxu0 %v1205
        %v1291 = vpop.f32.mrb[0].mxu0
        %v1292 = vadd.f32 0.0, %v1291
        %v1293 = vpop.f32.mrb[0].mxu0
        %v1294 = vpop.f32.mrb[0].mxu0
        %v1295 = vadd.f32 0.0, %v1294
        %v1296 = vpop.f32.mrb[0].mxu0
        %1297 = vmatprep.mubr.bf16.mxu0 0
        %1298 = vmatmul.mubr.bf16.gmra.mrb[0].mxu0 %v1208
        %v1299 = vpop.f32.mrb[0].mxu0
        %v1300 = vadd.f32 0.0, %v1299
        %v1301 = vpop.f32.mrb[0].mxu0
        %v1302 = vpop.f32.mrb[0].mxu0
        %v1303 = vadd.f32 0.0, %v1302
        %v1304 = vpop.f32.mrb[0].mxu0
        %1305 = vmatprep.mubr.bf16.mxu0 0
        %1306 = vmatmul.mubr.bf16.gmra.mrb[0].mxu0 %v1211
        %v1307 = vpop.f32.mrb[0].mxu0
        %v1308 = vadd.f32 0.0, %v1307
        %v1309 = vpop.f32.mrb[0].mxu0
        %v1310 = vpop.f32.mrb[0].mxu0
        %v1311 = vadd.f32 0.0, %v1310
        %v1312 = vpop.f32.mrb[0].mxu0
        %1313 = vdwg.mxu0
        %1314 = vxpose.xlu0.c.b16.start [1/8] %v1161, 128
        %1315 = vxpose.xlu0.c.b16.cont [2/8] 0, 128
        %1316 = vxpose.xlu0.c.b16.cont [3/8] 0, 128
        %1317 = vxpose.xlu0.c.b16.cont [4/8] 0, 128
        %1318 = vxpose.xlu0.c.b16.cont [5/8] 0, 128
        %1319 = vxpose.xlu0.c.b16.cont [6/8] 0, 128
        %1320 = vxpose.xlu0.c.b16.cont [7/8] 0, 128
        %1321 = vxpose.xlu0.c.b16.end [8/8] 0, 128
        %v1322 = vpop.trf.xlu0
        %v1323 = vpop.trf.xlu0
        %v1324 = vpop.trf.xlu0
        %v1325 = vpop.trf.xlu0
        %v1326 = vpop.trf.xlu0
        %v1327 = vpop.trf.xlu0
        %v1328 = vpop.trf.xlu0
        %v1329 = vpop.trf.xlu0
        %v1331 = vsel %vm1188, %v1322, 0
        %v1334 = vsel %vm1188, %v1323, 0
        %v1337 = vsel %vm1188, %v1324, 0
        %v1340 = vsel %vm1188, %v1325, 0
        %v1343 = vsel %vm1188, %v1326, 0
        %v1346 = vsel %vm1188, %v1327, 0
        %v1349 = vsel %vm1188, %v1328, 0
        %v1352 = vsel %vm1188, %v1329, 0
        %v1355 = vsel %vm1213, %v1165, 0
        %1357 = vmatprep.subr.bf16.mxu0 0
        %1358 = vmatpush1.bf16.msra.mxu0 %v1355
        %1359 = vmatprep.subr.bf16.mxu0 0
        %1360 = vmatpush1.bf16.msra.mxu0 0
        %1361 = vmatprep.subr.bf16.mxu0 0
        %1362 = vmatpush1.bf16.msra.mxu0 0
        %1363 = vmatprep.subr.bf16.mxu0 0
        %1364 = vmatpush1.bf16.msra.mxu0 0
        %1365 = vmatprep.subr.bf16.mxu0 0
        %1366 = vmatpush1.bf16.msra.mxu0 0
        %1367 = vmatprep.subr.bf16.mxu0 0
        %1368 = vmatpush1.bf16.msra.mxu0 0
        %1369 = vmatprep.subr.bf16.mxu0 0
        %1370 = vmatpush1.bf16.msra.mxu0 0
        %1371 = vmatprep.subr.bf16.mxu0 0
        %1372 = vmatpush1.bf16.msra.mxu0 0
        %1373 = vmatprep.subr.bf16.mxu0 0
        %1374 = vmatpush1.bf16.msra.mxu0 0
        %1375 = vmatprep.subr.bf16.mxu0 0
        %1376 = vmatpush1.bf16.msra.mxu0 0
        %1377 = vmatprep.subr.bf16.mxu0 0
        %1378 = vmatpush1.bf16.msra.mxu0 0
        %1379 = vmatprep.subr.bf16.mxu0 0
        %1380 = vmatpush1.bf16.msra.mxu0 0
        %1381 = vmatprep.subr.bf16.mxu0 0
        %1382 = vmatpush1.bf16.msra.mxu0 0
        %1383 = vmatprep.subr.bf16.mxu0 0
        %1384 = vmatpush1.bf16.msra.mxu0 0
        %1385 = vmatprep.subr.bf16.mxu0 0
        %1386 = vmatpush1.bf16.msra.mxu0 0
        %1387 = vmatprep.subr.bf16.mxu0 0
        %1388 = vmatpush1.bf16.msra.mxu0 0
        %1389 = vmatprep.mubr.bf16.mxu0 0
        %1390 = vmatmul.mubr.bf16.gmra.mrb[0].mxu0 %v1331
        %v1391 = vpop.f32.mrb[0].mxu0
        %v1392 = vadd.f32 0.0, %v1391
        %v1393 = vpop.f32.mrb[0].mxu0
        %v1394 = vpop.f32.mrb[0].mxu0
        %v1395 = vadd.f32 0.0, %v1394
        %v1396 = vpop.f32.mrb[0].mxu0
        %1397 = vmatprep.mubr.bf16.mxu0 0
        %1398 = vmatmul.mubr.bf16.gmra.mrb[0].mxu0 %v1334
        %v1399 = vpop.f32.mrb[0].mxu0
        %v1400 = vadd.f32 0.0, %v1399
        %v1401 = vpop.f32.mrb[0].mxu0
        %v1402 = vpop.f32.mrb[0].mxu0
        %v1403 = vadd.f32 0.0, %v1402
        %v1404 = vpop.f32.mrb[0].mxu0
        %1405 = vmatprep.mubr.bf16.mxu0 0
        %1406 = vmatmul.mubr.bf16.gmra.mrb[0].mxu0 %v1337
        %v1407 = vpop.f32.mrb[0].mxu0
        %v1408 = vadd.f32 0.0, %v1407
        %v1409 = vpop.f32.mrb[0].mxu0
        %v1410 = vpop.f32.mrb[0].mxu0
        %v1411 = vadd.f32 0.0, %v1410
        %v1412 = vpop.f32.mrb[0].mxu0
        %1413 = vmatprep.mubr.bf16.mxu0 0
        %1414 = vmatmul.mubr.bf16.gmra.mrb[0].mxu0 %v1340
        %v1415 = vpop.f32.mrb[0].mxu0
        %v1416 = vadd.f32 0.0, %v1415
        %v1417 = vpop.f32.mrb[0].mxu0
        %v1418 = vpop.f32.mrb[0].mxu0
        %v1419 = vadd.f32 0.0, %v1418
        %v1420 = vpop.f32.mrb[0].mxu0
        %1421 = vmatprep.mubr.bf16.mxu0 0
        %1422 = vmatmul.mubr.bf16.gmra.mrb[0].mxu0 %v1343
        %v1423 = vpop.f32.mrb[0].mxu0
        %v1424 = vadd.f32 0.0, %v1423
        %v1425 = vpop.f32.mrb[0].mxu0
        %v1426 = vpop.f32.mrb[0].mxu0
        %v1427 = vadd.f32 0.0, %v1426
        %v1428 = vpop.f32.mrb[0].mxu0
        %1429 = vmatprep.mubr.bf16.mxu0 0
        %1430 = vmatmul.mubr.bf16.gmra.mrb[0].mxu0 %v1346
        %v1431 = vpop.f32.mrb[0].mxu0
        %v1432 = vadd.f32 0.0, %v1431
        %v1433 = vpop.f32.mrb[0].mxu0
        %v1434 = vpop.f32.mrb[0].mxu0
        %v1435 = vadd.f32 0.0, %v1434
        %v1436 = vpop.f32.mrb[0].mxu0
        %1437 = vmatprep.mubr.bf16.mxu0 0
        %1438 = vmatmul.mubr.bf16.gmra.mrb[0].mxu0 %v1349
        %v1439 = vpop.f32.mrb[0].mxu0
        %v1440 = vadd.f32 0.0, %v1439
        %v1441 = vpop.f32.mrb[0].mxu0
        %v1442 = vpop.f32.mrb[0].mxu0
        %v1443 = vadd.f32 0.0, %v1442
        %v1444 = vpop.f32.mrb[0].mxu0
        %1445 = vmatprep.mubr.bf16.mxu0 0
        %1446 = vmatmul.mubr.bf16.gmra.mrb[0].mxu0 %v1352
        %v1447 = vpop.f32.mrb[0].mxu0
        %v1448 = vadd.f32 0.0, %v1447
        %v1449 = vpop.f32.mrb[0].mxu0
        %v1450 = vpop.f32.mrb[0].mxu0
        %v1451 = vadd.f32 0.0, %v1450
        %v1452 = vpop.f32.mrb[0].mxu0
        %1453 = vdwg.mxu0
        %1454 = vxpose.xlu0.c.b16.start [1/8] %v1162, 128
        %1455 = vxpose.xlu0.c.b16.cont [2/8] 0, 128
        %1456 = vxpose.xlu0.c.b16.cont [3/8] 0, 128
        %1457 = vxpose.xlu0.c.b16.cont [4/8] 0, 128
        %1458 = vxpose.xlu0.c.b16.cont [5/8] 0, 128
        %1459 = vxpose.xlu0.c.b16.cont [6/8] 0, 128
        %1460 = vxpose.xlu0.c.b16.cont [7/8] 0, 128
        %1461 = vxpose.xlu0.c.b16.end [8/8] 0, 128
        %v1462 = vpop.trf.xlu0
        %v1463 = vpop.trf.xlu0
        %v1464 = vpop.trf.xlu0
        %v1465 = vpop.trf.xlu0
        %v1466 = vpop.trf.xlu0
        %v1467 = vpop.trf.xlu0
        %v1468 = vpop.trf.xlu0
        %v1469 = vpop.trf.xlu0
        %v1471 = vsel %vm1188, %v1462, 0
        %v1474 = vsel %vm1188, %v1463, 0
        %v1477 = vsel %vm1188, %v1464, 0
        %v1480 = vsel %vm1188, %v1465, 0
        %v1483 = vsel %vm1188, %v1466, 0
        %v1486 = vsel %vm1188, %v1467, 0
        %v1489 = vsel %vm1188, %v1468, 0
        %v1492 = vsel %vm1188, %v1469, 0
        %v1495 = vsel %vm1213, %v1166, 0
        %1497 = vmatprep.subr.bf16.mxu0 0
        %1498 = vmatpush1.bf16.msra.mxu0 %v1495
        %1499 = vmatprep.subr.bf16.mxu0 0
        %1500 = vmatpush1.bf16.msra.mxu0 0
        %1501 = vmatprep.subr.bf16.mxu0 0
        %1502 = vmatpush1.bf16.msra.mxu0 0
        %1503 = vmatprep.subr.bf16.mxu0 0
        %1504 = vmatpush1.bf16.msra.mxu0 0
        %1505 = vmatprep.subr.bf16.mxu0 0
        %1506 = vmatpush1.bf16.msra.mxu0 0
        %1507 = vmatprep.subr.bf16.mxu0 0
        %1508 = vmatpush1.bf16.msra.mxu0 0
        %1509 = vmatprep.subr.bf16.mxu0 0
        %1510 = vmatpush1.bf16.msra.mxu0 0
        %1511 = vmatprep.subr.bf16.mxu0 0
        %1512 = vmatpush1.bf16.msra.mxu0 0
        %1513 = vmatprep.subr.bf16.mxu0 0
        %1514 = vmatpush1.bf16.msra.mxu0 0
        %1515 = vmatprep.subr.bf16.mxu0 0
        %1516 = vmatpush1.bf16.msra.mxu0 0
        %1517 = vmatprep.subr.bf16.mxu0 0
        %1518 = vmatpush1.bf16.msra.mxu0 0
        %1519 = vmatprep.subr.bf16.mxu0 0
        %1520 = vmatpush1.bf16.msra.mxu0 0
        %1521 = vmatprep.subr.bf16.mxu0 0
        %1522 = vmatpush1.bf16.msra.mxu0 0
        %1523 = vmatprep.subr.bf16.mxu0 0
        %1524 = vmatpush1.bf16.msra.mxu0 0
        %1525 = vmatprep.subr.bf16.mxu0 0
        %1526 = vmatpush1.bf16.msra.mxu0 0
        %1527 = vmatprep.subr.bf16.mxu0 0
        %1528 = vmatpush1.bf16.msra.mxu0 0
        %1529 = vmatprep.mubr.bf16.mxu0 0
        %1530 = vmatmul.mubr.bf16.gmra.mrb[0].mxu0 %v1471
        %v1531 = vpop.f32.mrb[0].mxu0
        %v1532 = vadd.f32 0.0, %v1531
        %v1533 = vpop.f32.mrb[0].mxu0
        %v1534 = vpop.f32.mrb[0].mxu0
        %v1535 = vadd.f32 0.0, %v1534
        %v1536 = vpop.f32.mrb[0].mxu0
        %1537 = vmatprep.mubr.bf16.mxu0 0
        %1538 = vmatmul.mubr.bf16.gmra.mrb[0].mxu0 %v1474
        %v1539 = vpop.f32.mrb[0].mxu0
        %v1540 = vadd.f32 0.0, %v1539
        %v1541 = vpop.f32.mrb[0].mxu0
        %v1542 = vpop.f32.mrb[0].mxu0
        %v1543 = vadd.f32 0.0, %v1542
        %v1544 = vpop.f32.mrb[0].mxu0
        %1545 = vmatprep.mubr.bf16.mxu0 0
        %1546 = vmatmul.mubr.bf16.gmra.mrb[0].mxu0 %v1477
        %v1547 = vpop.f32.mrb[0].mxu0
        %v1548 = vadd.f32 0.0, %v1547
        %v1549 = vpop.f32.mrb[0].mxu0
        %v1550 = vpop.f32.mrb[0].mxu0
        %v1551 = vadd.f32 0.0, %v1550
        %v1552 = vpop.f32.mrb[0].mxu0
        %1553 = vmatprep.mubr.bf16.mxu0 0
        %1554 = vmatmul.mubr.bf16.gmra.mrb[0].mxu0 %v1480
        %v1555 = vpop.f32.mrb[0].mxu0
        %v1556 = vadd.f32 0.0, %v1555
        %v1557 = vpop.f32.mrb[0].mxu0
        %v1558 = vpop.f32.mrb[0].mxu0
        %v1559 = vadd.f32 0.0, %v1558
        %v1560 = vpop.f32.mrb[0].mxu0
        %1561 = vmatprep.mubr.bf16.mxu0 0
        %1562 = vmatmul.mubr.bf16.gmra.mrb[0].mxu0 %v1483
        %v1563 = vpop.f32.mrb[0].mxu0
        %v1564 = vadd.f32 0.0, %v1563
        %v1565 = vpop.f32.mrb[0].mxu0
        %v1566 = vpop.f32.mrb[0].mxu0
        %v1567 = vadd.f32 0.0, %v1566
        %v1568 = vpop.f32.mrb[0].mxu0
        %1569 = vmatprep.mubr.bf16.mxu0 0
        %1570 = vmatmul.mubr.bf16.gmra.mrb[0].mxu0 %v1486
        %v1571 = vpop.f32.mrb[0].mxu0
        %v1572 = vadd.f32 0.0, %v1571
        %v1573 = vpop.f32.mrb[0].mxu0
        %v1574 = vpop.f32.mrb[0].mxu0
        %v1575 = vadd.f32 0.0, %v1574
        %v1576 = vpop.f32.mrb[0].mxu0
        %1577 = vmatprep.mubr.bf16.mxu0 0
        %1578 = vmatmul.mubr.bf16.gmra.mrb[0].mxu0 %v1489
        %v1579 = vpop.f32.mrb[0].mxu0
        %v1580 = vadd.f32 0.0, %v1579
        %v1581 = vpop.f32.mrb[0].mxu0
        %v1582 = vpop.f32.mrb[0].mxu0
        %v1583 = vadd.f32 0.0, %v1582
        %v1584 = vpop.f32.mrb[0].mxu0
        %1585 = vmatprep.mubr.bf16.mxu0 0
        %1586 = vmatmul.mubr.bf16.gmra.mrb[0].mxu0 %v1492
        %v1587 = vpop.f32.mrb[0].mxu0
        %v1588 = vadd.f32 0.0, %v1587
        %v1589 = vpop.f32.mrb[0].mxu0
        %v1590 = vpop.f32.mrb[0].mxu0
        %v1591 = vadd.f32 0.0, %v1590
        %v1592 = vpop.f32.mrb[0].mxu0
        %1593 = vdwg.mxu0
        %1594 = vxpose.xlu0.c.b16.start [1/8] %v1163, 128
        %1595 = vxpose.xlu0.c.b16.cont [2/8] 0, 128
        %1596 = vxpose.xlu0.c.b16.cont [3/8] 0, 128
        %1597 = vxpose.xlu0.c.b16.cont [4/8] 0, 128
        %1598 = vxpose.xlu0.c.b16.cont [5/8] 0, 128
        %1599 = vxpose.xlu0.c.b16.cont [6/8] 0, 128
        %1600 = vxpose.xlu0.c.b16.cont [7/8] 0, 128
        %1601 = vxpose.xlu0.c.b16.end [8/8] 0, 128
        %v1602 = vpop.trf.xlu0
        %v1603 = vpop.trf.xlu0
        %v1604 = vpop.trf.xlu0
        %v1605 = vpop.trf.xlu0
        %v1606 = vpop.trf.xlu0
        %v1607 = vpop.trf.xlu0
        %v1608 = vpop.trf.xlu0
        %v1609 = vpop.trf.xlu0
        %v1611 = vsel %vm1188, %v1602, 0
        %v1614 = vsel %vm1188, %v1603, 0
        %v1617 = vsel %vm1188, %v1604, 0
        %v1620 = vsel %vm1188, %v1605, 0
        %v1623 = vsel %vm1188, %v1606, 0
        %v1626 = vsel %vm1188, %v1607, 0
        %v1629 = vsel %vm1188, %v1608, 0
        %v1632 = vsel %vm1188, %v1609, 0
        %v1635 = vsel %vm1213, %v1167, 0
        %1637 = vmatprep.subr.bf16.mxu0 0
        %1638 = vmatpush1.bf16.msra.mxu0 %v1635
        %1639 = vmatprep.subr.bf16.mxu0 0
        %1640 = vmatpush1.bf16.msra.mxu0 0
        %1641 = vmatprep.subr.bf16.mxu0 0
        %1642 = vmatpush1.bf16.msra.mxu0 0
        %1643 = vmatprep.subr.bf16.mxu0 0
        %1644 = vmatpush1.bf16.msra.mxu0 0
        %1645 = vmatprep.subr.bf16.mxu0 0
        %1646 = vmatpush1.bf16.msra.mxu0 0
        %1647 = vmatprep.subr.bf16.mxu0 0
        %1648 = vmatpush1.bf16.msra.mxu0 0
        %1649 = vmatprep.subr.bf16.mxu0 0
        %1650 = vmatpush1.bf16.msra.mxu0 0
        %1651 = vmatprep.subr.bf16.mxu0 0
        %1652 = vmatpush1.bf16.msra.mxu0 0
        %1653 = vmatprep.subr.bf16.mxu0 0
        %1654 = vmatpush1.bf16.msra.mxu0 0
        %1655 = vmatprep.subr.bf16.mxu0 0
        %1656 = vmatpush1.bf16.msra.mxu0 0
        %1657 = vmatprep.subr.bf16.mxu0 0
        %1658 = vmatpush1.bf16.msra.mxu0 0
        %1659 = vmatprep.subr.bf16.mxu0 0
        %1660 = vmatpush1.bf16.msra.mxu0 0
        %1661 = vmatprep.subr.bf16.mxu0 0
        %1662 = vmatpush1.bf16.msra.mxu0 0
        %1663 = vmatprep.subr.bf16.mxu0 0
        %1664 = vmatpush1.bf16.msra.mxu0 0
        %1665 = vmatprep.subr.bf16.mxu0 0
        %1666 = vmatpush1.bf16.msra.mxu0 0
        %1667 = vmatprep.subr.bf16.mxu0 0
        %1668 = vmatpush1.bf16.msra.mxu0 0
        %1669 = vmatprep.mubr.bf16.mxu0 0
        %1670 = vmatmul.mubr.bf16.gmra.mrb[0].mxu0 %v1611
        %v1671 = vpop.f32.mrb[0].mxu0
        %v1672 = vadd.f32 0.0, %v1671
        %v1673 = vpop.f32.mrb[0].mxu0
        %v1674 = vpop.f32.mrb[0].mxu0
        %v1675 = vadd.f32 0.0, %v1674
        %v1676 = vpop.f32.mrb[0].mxu0
        %1677 = vmatprep.mubr.bf16.mxu0 0
        %1678 = vmatmul.mubr.bf16.gmra.mrb[0].mxu0 %v1614
        %v1679 = vpop.f32.mrb[0].mxu0
        %v1680 = vadd.f32 0.0, %v1679
        %v1681 = vpop.f32.mrb[0].mxu0
        %v1682 = vpop.f32.mrb[0].mxu0
        %v1683 = vadd.f32 0.0, %v1682
        %v1684 = vpop.f32.mrb[0].mxu0
        %1685 = vmatprep.mubr.bf16.mxu0 0
        %1686 = vmatmul.mubr.bf16.gmra.mrb[0].mxu0 %v1617
        %v1687 = vpop.f32.mrb[0].mxu0
        %v1688 = vadd.f32 0.0, %v1687
        %v1689 = vpop.f32.mrb[0].mxu0
        %v1690 = vpop.f32.mrb[0].mxu0
        %v1691 = vadd.f32 0.0, %v1690
        %v1692 = vpop.f32.mrb[0].mxu0
        %1693 = vmatprep.mubr.bf16.mxu0 0
        %1694 = vmatmul.mubr.bf16.gmra.mrb[0].mxu0 %v1620
        %v1695 = vpop.f32.mrb[0].mxu0
        %v1696 = vadd.f32 0.0, %v1695
        %v1697 = vpop.f32.mrb[0].mxu0
        %v1698 = vpop.f32.mrb[0].mxu0
        %v1699 = vadd.f32 0.0, %v1698
        %v1700 = vpop.f32.mrb[0].mxu0
        %1701 = vmatprep.mubr.bf16.mxu0 0
        %1702 = vmatmul.mubr.bf16.gmra.mrb[0].mxu0 %v1623
        %v1703 = vpop.f32.mrb[0].mxu0
        %v1704 = vadd.f32 0.0, %v1703
        %v1705 = vpop.f32.mrb[0].mxu0
        %v1706 = vpop.f32.mrb[0].mxu0
        %v1707 = vadd.f32 0.0, %v1706
        %v1708 = vpop.f32.mrb[0].mxu0
        %1709 = vmatprep.mubr.bf16.mxu0 0
        %1710 = vmatmul.mubr.bf16.gmra.mrb[0].mxu0 %v1626
        %v1711 = vpop.f32.mrb[0].mxu0
        %v1712 = vadd.f32 0.0, %v1711
        %v1713 = vpop.f32.mrb[0].mxu0
        %v1714 = vpop.f32.mrb[0].mxu0
        %v1715 = vadd.f32 0.0, %v1714
        %v1716 = vpop.f32.mrb[0].mxu0
        %1717 = vmatprep.mubr.bf16.mxu0 0
        %1718 = vmatmul.mubr.bf16.gmra.mrb[0].mxu0 %v1629
        %v1719 = vpop.f32.mrb[0].mxu0
        %v1720 = vadd.f32 0.0, %v1719
        %v1721 = vpop.f32.mrb[0].mxu0
        %v1722 = vpop.f32.mrb[0].mxu0
        %v1723 = vadd.f32 0.0, %v1722
        %v1724 = vpop.f32.mrb[0].mxu0
        %1725 = vmatprep.mubr.bf16.mxu0 0
        %1726 = vmatmul.mubr.bf16.gmra.mrb[0].mxu0 %v1632
        %v1727 = vpop.f32.mrb[0].mxu0
        %v1728 = vadd.f32 0.0, %v1727
        %v1729 = vpop.f32.mrb[0].mxu0
        %v1730 = vpop.f32.mrb[0].mxu0
        %v1731 = vadd.f32 0.0, %v1730
        %v1732 = vpop.f32.mrb[0].mxu0
        %1733 = vdwg.mxu0
        %1734 = vmax.xlane.f32.xlu0 %v1252
        %v1735 = vpop.xlane.xlu0 %1734
        %1736 = vmax.xlane.f32.xlu0 %v1255
        %v1737 = vpop.xlane.xlu0 %1736
        %1738 = vmax.xlane.f32.xlu0 %v1260
        %v1739 = vpop.xlane.xlu0 %1738
        %1740 = vmax.xlane.f32.xlu0 %v1263
        %v1741 = vpop.xlane.xlu0 %1740
        %1742 = vmax.xlane.f32.xlu0 %v1268
        %v1743 = vpop.xlane.xlu0 %1742
        %1744 = vmax.xlane.f32.xlu0 %v1271
        %v1745 = vpop.xlane.xlu0 %1744
        %1746 = vmax.xlane.f32.xlu0 %v1276
        %v1747 = vpop.xlane.xlu0 %1746
        %1748 = vmax.xlane.f32.xlu0 %v1279
        %v1749 = vpop.xlane.xlu0 %1748
        %1750 = vmax.xlane.f32.xlu0 %v1284
        %v1751 = vpop.xlane.xlu0 %1750
        %1752 = vmax.xlane.f32.xlu0 %v1287
        %v1753 = vpop.xlane.xlu0 %1752
        %1754 = vmax.xlane.f32.xlu0 %v1292
        %v1755 = vpop.xlane.xlu0 %1754
        %1756 = vmax.xlane.f32.xlu0 %v1295
        %v1757 = vpop.xlane.xlu0 %1756
        %1758 = vmax.xlane.f32.xlu0 %v1300
        %v1759 = vpop.xlane.xlu0 %1758
        %1760 = vmax.xlane.f32.xlu0 %v1303
        %v1761 = vpop.xlane.xlu0 %1760
        %1762 = vmax.xlane.f32.xlu0 %v1308
        %v1763 = vpop.xlane.xlu0 %1762
        %1764 = vmax.xlane.f32.xlu0 %v1311
        %v1765 = vpop.xlane.xlu0 %1764
        %1766 = vmax.xlane.f32.xlu0 %v1392
        %v1767 = vpop.xlane.xlu0 %1766
        %1768 = vmax.xlane.f32.xlu0 %v1395
        %v1769 = vpop.xlane.xlu0 %1768
        %1770 = vmax.xlane.f32.xlu0 %v1400
        %v1771 = vpop.xlane.xlu0 %1770
        %1772 = vmax.xlane.f32.xlu0 %v1403
        %v1773 = vpop.xlane.xlu0 %1772
        %1774 = vmax.xlane.f32.xlu0 %v1408
        %v1775 = vpop.xlane.xlu0 %1774
        %1776 = vmax.xlane.f32.xlu0 %v1411
        %v1777 = vpop.xlane.xlu0 %1776
        %1778 = vmax.xlane.f32.xlu0 %v1416
        %v1779 = vpop.xlane.xlu0 %1778
        %1780 = vmax.xlane.f32.xlu0 %v1419
        %v1781 = vpop.xlane.xlu0 %1780
        %1782 = vmax.xlane.f32.xlu0 %v1424
        %v1783 = vpop.xlane.xlu0 %1782
        %1784 = vmax.xlane.f32.xlu0 %v1427
        %v1785 = vpop.xlane.xlu0 %1784
        %1786 = vmax.xlane.f32.xlu0 %v1432
        %v1787 = vpop.xlane.xlu0 %1786
        %1788 = vmax.xlane.f32.xlu0 %v1435
        %v1789 = vpop.xlane.xlu0 %1788
        %1790 = vmax.xlane.f32.xlu0 %v1440
        %v1791 = vpop.xlane.xlu0 %1790
        %1792 = vmax.xlane.f32.xlu0 %v1443
        %v1793 = vpop.xlane.xlu0 %1792
        %1794 = vmax.xlane.f32.xlu0 %v1448
        %v1795 = vpop.xlane.xlu0 %1794
        %1796 = vmax.xlane.f32.xlu0 %v1451
        %v1797 = vpop.xlane.xlu0 %1796
        %1798 = vmax.xlane.f32.xlu0 %v1532
        %v1799 = vpop.xlane.xlu0 %1798
        %1800 = vmax.xlane.f32.xlu0 %v1535
        %v1801 = vpop.xlane.xlu0 %1800
        %1802 = vmax.xlane.f32.xlu0 %v1540
        %v1803 = vpop.xlane.xlu0 %1802
        %1804 = vmax.xlane.f32.xlu0 %v1543
        %v1805 = vpop.xlane.xlu0 %1804
        %1806 = vmax.xlane.f32.xlu0 %v1548
        %v1807 = vpop.xlane.xlu0 %1806
        %1808 = vmax.xlane.f32.xlu0 %v1551
        %v1809 = vpop.xlane.xlu0 %1808
        %1810 = vmax.xlane.f32.xlu0 %v1556
        %v1811 = vpop.xlane.xlu0 %1810
        %1812 = vmax.xlane.f32.xlu0 %v1559
        %v1813 = vpop.xlane.xlu0 %1812
        %1814 = vmax.xlane.f32.xlu0 %v1564
        %v1815 = vpop.xlane.xlu0 %1814
        %1816 = vmax.xlane.f32.xlu0 %v1567
        %v1817 = vpop.xlane.xlu0 %1816
        %1818 = vmax.xlane.f32.xlu0 %v1572
        %v1819 = vpop.xlane.xlu0 %1818
        %1820 = vmax.xlane.f32.xlu0 %v1575
        %v1821 = vpop.xlane.xlu0 %1820
        %1822 = vmax.xlane.f32.xlu0 %v1580
        %v1823 = vpop.xlane.xlu0 %1822
        %1824 = vmax.xlane.f32.xlu0 %v1583
        %v1825 = vpop.xlane.xlu0 %1824
        %1826 = vmax.xlane.f32.xlu0 %v1588
        %v1827 = vpop.xlane.xlu0 %1826
        %1828 = vmax.xlane.f32.xlu0 %v1591
        %v1829 = vpop.xlane.xlu0 %1828
        %1830 = vmax.xlane.f32.xlu0 %v1672
        %v1831 = vpop.xlane.xlu0 %1830
        %1832 = vmax.xlane.f32.xlu0 %v1675
        %v1833 = vpop.xlane.xlu0 %1832
        %1834 = vmax.xlane.f32.xlu0 %v1680
        %v1835 = vpop.xlane.xlu0 %1834
        %1836 = vmax.xlane.f32.xlu0 %v1683
        %v1837 = vpop.xlane.xlu0 %1836
        %1838 = vmax.xlane.f32.xlu0 %v1688
        %v1839 = vpop.xlane.xlu0 %1838
        %1840 = vmax.xlane.f32.xlu0 %v1691
        %v1841 = vpop.xlane.xlu0 %1840
        %1842 = vmax.xlane.f32.xlu0 %v1696
        %v1843 = vpop.xlane.xlu0 %1842
        %1844 = vmax.xlane.f32.xlu0 %v1699
        %v1845 = vpop.xlane.xlu0 %1844
        %1846 = vmax.xlane.f32.xlu0 %v1704
        %v1847 = vpop.xlane.xlu0 %1846
        %1848 = vmax.xlane.f32.xlu0 %v1707
        %v1849 = vpop.xlane.xlu0 %1848
        %1850 = vmax.xlane.f32.xlu0 %v1712
        %v1851 = vpop.xlane.xlu0 %1850
        %1852 = vmax.xlane.f32.xlu0 %v1715
        %v1853 = vpop.xlane.xlu0 %1852
        %1854 = vmax.xlane.f32.xlu0 %v1720
        %v1855 = vpop.xlane.xlu0 %1854
        %1856 = vmax.xlane.f32.xlu0 %v1723
        %v1857 = vpop.xlane.xlu0 %1856
        %1858 = vmax.xlane.f32.xlu0 %v1728
        %v1859 = vpop.xlane.xlu0 %1858
        %1860 = vmax.xlane.f32.xlu0 %v1731
        %v1861 = vpop.xlane.xlu0 %1860
        %v1862 = vsub.f32 %v1252, %v1735
        %v1863 = vsub.f32 %v1255, %v1737
        %v1864 = vsub.f32 %v1260, %v1739
        %v1865 = vsub.f32 %v1263, %v1741
        %v1866 = vsub.f32 %v1268, %v1743
        %v1867 = vsub.f32 %v1271, %v1745
        %v1868 = vsub.f32 %v1276, %v1747
        %v1869 = vsub.f32 %v1279, %v1749
        %v1870 = vsub.f32 %v1284, %v1751
        %v1871 = vsub.f32 %v1287, %v1753
        %v1872 = vsub.f32 %v1292, %v1755
        %v1873 = vsub.f32 %v1295, %v1757
        %v1874 = vsub.f32 %v1300, %v1759
        %v1875 = vsub.f32 %v1303, %v1761
        %v1876 = vsub.f32 %v1308, %v1763
        %v1877 = vsub.f32 %v1311, %v1765
        %v1878 = vsub.f32 %v1392, %v1767
        %v1879 = vsub.f32 %v1395, %v1769
        %v1880 = vsub.f32 %v1400, %v1771
        %v1881 = vsub.f32 %v1403, %v1773
        %v1882 = vsub.f32 %v1408, %v1775
        %v1883 = vsub.f32 %v1411, %v1777
        %v1884 = vsub.f32 %v1416, %v1779
        %v1885 = vsub.f32 %v1419, %v1781
        %v1886 = vsub.f32 %v1424, %v1783
        %v1887 = vsub.f32 %v1427, %v1785
        %v1888 = vsub.f32 %v1432, %v1787
        %v1889 = vsub.f32 %v1435, %v1789
        %v1890 = vsub.f32 %v1440, %v1791
        %v1891 = vsub.f32 %v1443, %v1793
        %v1892 = vsub.f32 %v1448, %v1795
        %v1893 = vsub.f32 %v1451, %v1797
        %v1894 = vsub.f32 %v1532, %v1799
        %v1895 = vsub.f32 %v1535, %v1801
        %v1896 = vsub.f32 %v1540, %v1803
        %v1897 = vsub.f32 %v1543, %v1805
        %v1898 = vsub.f32 %v1548, %v1807
        %v1899 = vsub.f32 %v1551, %v1809
        %v1900 = vsub.f32 %v1556, %v1811
        %v1901 = vsub.f32 %v1559, %v1813
        %v1902 = vsub.f32 %v1564, %v1815
        %v1903 = vsub.f32 %v1567, %v1817
        %v1904 = vsub.f32 %v1572, %v1819
        %v1905 = vsub.f32 %v1575, %v1821
        %v1906 = vsub.f32 %v1580, %v1823
        %v1907 = vsub.f32 %v1583, %v1825
        %v1908 = vsub.f32 %v1588, %v1827
        %v1909 = vsub.f32 %v1591, %v1829
        %v1910 = vsub.f32 %v1672, %v1831
        %v1911 = vsub.f32 %v1675, %v1833
        %v1912 = vsub.f32 %v1680, %v1835
        %v1913 = vsub.f32 %v1683, %v1837
        %v1914 = vsub.f32 %v1688, %v1839
        %v1915 = vsub.f32 %v1691, %v1841
        %v1916 = vsub.f32 %v1696, %v1843
        %v1917 = vsub.f32 %v1699, %v1845
        %v1918 = vsub.f32 %v1704, %v1847
        %v1919 = vsub.f32 %v1707, %v1849
        %v1920 = vsub.f32 %v1712, %v1851
        %v1921 = vsub.f32 %v1715, %v1853
        %v1922 = vsub.f32 %v1720, %v1855
        %v1923 = vsub.f32 %v1723, %v1857
        %v1924 = vsub.f32 %v1728, %v1859
        %v1925 = vsub.f32 %v1731, %v1861
        %v1926 = vmul.f32 %v1862, 1.442695
        %v1927 = vpow.pop %v1926
        %v1928 = vmul.f32 %v1863, 1.442695
        %v1929 = vpow.pop %v1928
        %v1930 = vmul.f32 %v1864, 1.442695
        %v1931 = vpow.pop %v1930
        %v1932 = vmul.f32 %v1865, 1.442695
        %v1933 = vpow.pop %v1932
        %v1934 = vmul.f32 %v1866, 1.442695
        %v1935 = vpow.pop %v1934
        %v1936 = vmul.f32 %v1867, 1.442695
        %v1937 = vpow.pop %v1936
        %v1938 = vmul.f32 %v1868, 1.442695
        %v1939 = vpow.pop %v1938
        %v1940 = vmul.f32 %v1869, 1.442695
        %v1941 = vpow.pop %v1940
        %v1942 = vmul.f32 %v1870, 1.442695
        %v1943 = vpow.pop %v1942
        %v1944 = vmul.f32 %v1871, 1.442695
        %v1945 = vpow.pop %v1944
        %v1946 = vmul.f32 %v1872, 1.442695
        %v1947 = vpow.pop %v1946
        %v1948 = vmul.f32 %v1873, 1.442695
        %v1949 = vpow.pop %v1948
        %v1950 = vmul.f32 %v1874, 1.442695
        %v1951 = vpow.pop %v1950
        %v1952 = vmul.f32 %v1875, 1.442695
        %v1953 = vpow.pop %v1952
        %v1954 = vmul.f32 %v1876, 1.442695
        %v1955 = vpow.pop %v1954
        %v1956 = vmul.f32 %v1877, 1.442695
        %v1957 = vpow.pop %v1956
        %v1958 = vmul.f32 %v1878, 1.442695
        %v1959 = vpow.pop %v1958
        %v1960 = vmul.f32 %v1879, 1.442695
        %v1961 = vpow.pop %v1960
        %v1962 = vmul.f32 %v1880, 1.442695
        %v1963 = vpow.pop %v1962
        %v1964 = vmul.f32 %v1881, 1.442695
        %v1965 = vpow.pop %v1964
        %v1966 = vmul.f32 %v1882, 1.442695
        %v1967 = vpow.pop %v1966
        %v1968 = vmul.f32 %v1883, 1.442695
        %v1969 = vpow.pop %v1968
        %v1970 = vmul.f32 %v1884, 1.442695
        %v1971 = vpow.pop %v1970
        %v1972 = vmul.f32 %v1885, 1.442695
        %v1973 = vpow.pop %v1972
        %v1974 = vmul.f32 %v1886, 1.442695
        %v1975 = vpow.pop %v1974
        %v1976 = vmul.f32 %v1887, 1.442695
        %v1977 = vpow.pop %v1976
        %v1978 = vmul.f32 %v1888, 1.442695
        %v1979 = vpow.pop %v1978
        %v1980 = vmul.f32 %v1889, 1.442695
        %v1981 = vpow.pop %v1980
        %v1982 = vmul.f32 %v1890, 1.442695
        %v1983 = vpow.pop %v1982
        %v1984 = vmul.f32 %v1891, 1.442695
        %v1985 = vpow.pop %v1984
        %v1986 = vmul.f32 %v1892, 1.442695
        %v1987 = vpow.pop %v1986
        %v1988 = vmul.f32 %v1893, 1.442695
        %v1989 = vpow.pop %v1988
        %v1990 = vmul.f32 %v1894, 1.442695
        %v1991 = vpow.pop %v1990
        %v1992 = vmul.f32 %v1895, 1.442695
        %v1993 = vpow.pop %v1992
        %v1994 = vmul.f32 %v1896, 1.442695
        %v1995 = vpow.pop %v1994
        %v1996 = vmul.f32 %v1897, 1.442695
        %v1997 = vpow.pop %v1996
        %v1998 = vmul.f32 %v1898, 1.442695
        %v1999 = vpow.pop %v1998
        %v2000 = vmul.f32 %v1899, 1.442695
        %v2001 = vpow.pop %v2000
        %v2002 = vmul.f32 %v1900, 1.442695
        %v2003 = vpow.pop %v2002
        %v2004 = vmul.f32 %v1901, 1.442695
        %v2005 = vpow.pop %v2004
        %v2006 = vmul.f32 %v1902, 1.442695
        %v2007 = vpow.pop %v2006
        %v2008 = vmul.f32 %v1903, 1.442695
        %v2009 = vpow.pop %v2008
        %v2010 = vmul.f32 %v1904, 1.442695
        %v2011 = vpow.pop %v2010
        %v2012 = vmul.f32 %v1905, 1.442695
        %v2013 = vpow.pop %v2012
        %v2014 = vmul.f32 %v1906, 1.442695
        %v2015 = vpow.pop %v2014
        %v2016 = vmul.f32 %v1907, 1.442695
        %v2017 = vpow.pop %v2016
        %v2018 = vmul.f32 %v1908, 1.442695
        %v2019 = vpow.pop %v2018
        %v2020 = vmul.f32 %v1909, 1.442695
        %v2021 = vpow.pop %v2020
        %v2022 = vmul.f32 %v1910, 1.442695
        %v2023 = vpow.pop %v2022
        %v2024 = vmul.f32 %v1911, 1.442695
        %v2025 = vpow.pop %v2024
        %v2026 = vmul.f32 %v1912, 1.442695
        %v2027 = vpow.pop %v2026
        %v2028 = vmul.f32 %v1913, 1.442695
        %v2029 = vpow.pop %v2028
        %v2030 = vmul.f32 %v1914, 1.442695
        %v2031 = vpow.pop %v2030
        %v2032 = vmul.f32 %v1915, 1.442695
        %v2033 = vpow.pop %v2032
        %v2034 = vmul.f32 %v1916, 1.442695
        %v2035 = vpow.pop %v2034
        %v2036 = vmul.f32 %v1917, 1.442695
        %v2037 = vpow.pop %v2036
        %v2038 = vmul.f32 %v1918, 1.442695
        %v2039 = vpow.pop %v2038
        %v2040 = vmul.f32 %v1919, 1.442695
        %v2041 = vpow.pop %v2040
        %v2042 = vmul.f32 %v1920, 1.442695
        %v2043 = vpow.pop %v2042
        %v2044 = vmul.f32 %v1921, 1.442695
        %v2045 = vpow.pop %v2044
        %v2046 = vmul.f32 %v1922, 1.442695
        %v2047 = vpow.pop %v2046
        %v2048 = vmul.f32 %v1923, 1.442695
        %v2049 = vpow.pop %v2048
        %v2050 = vmul.f32 %v1924, 1.442695
        %v2051 = vpow.pop %v2050
        %v2052 = vmul.f32 %v1925, 1.442695
        %v2053 = vpow.pop %v2052
        %v2054 = vpack.c.bf16 %v1929, %v1927
        %v2055 = vpack.c.bf16 %v1933, %v1931
        %v2056 = vpack.c.bf16 %v1937, %v1935
        %v2057 = vpack.c.bf16 %v1941, %v1939
        %v2058 = vpack.c.bf16 %v1945, %v1943
        %v2059 = vpack.c.bf16 %v1949, %v1947
        %v2060 = vpack.c.bf16 %v1953, %v1951
        %v2061 = vpack.c.bf16 %v1957, %v1955
        %v2062 = vpack.c.bf16 %v1961, %v1959
        %v2063 = vpack.c.bf16 %v1965, %v1963
        %v2064 = vpack.c.bf16 %v1969, %v1967
        %v2065 = vpack.c.bf16 %v1973, %v1971
        %v2066 = vpack.c.bf16 %v1977, %v1975
        %v2067 = vpack.c.bf16 %v1981, %v1979
        %v2068 = vpack.c.bf16 %v1985, %v1983
        %v2069 = vpack.c.bf16 %v1989, %v1987
        %v2070 = vpack.c.bf16 %v1993, %v1991
        %v2071 = vpack.c.bf16 %v1997, %v1995
        %v2072 = vpack.c.bf16 %v2001, %v1999
        %v2073 = vpack.c.bf16 %v2005, %v2003
        %v2074 = vpack.c.bf16 %v2009, %v2007
        %v2075 = vpack.c.bf16 %v2013, %v2011
        %v2076 = vpack.c.bf16 %v2017, %v2015
        %v2077 = vpack.c.bf16 %v2021, %v2019
        %v2078 = vpack.c.bf16 %v2025, %v2023
        %v2079 = vpack.c.bf16 %v2029, %v2027
        %v2080 = vpack.c.bf16 %v2033, %v2031
        %v2081 = vpack.c.bf16 %v2037, %v2035
        %v2082 = vpack.c.bf16 %v2041, %v2039
        %v2083 = vpack.c.bf16 %v2045, %v2043
        %v2084 = vpack.c.bf16 %v2049, %v2047
        %v2085 = vpack.c.bf16 %v2053, %v2051
        %2086 = vmatprep.subr.bf16.mxu0 0
        %2087 = vmatpush1.bf16.xpose.msra.mxu0 %v2054
        %2088 = vmatprep.subr.bf16.mxu0 0
        %2089 = vmatpush1.bf16.xpose.msra.mxu0 %v2055
        %2090 = vmatprep.subr.bf16.mxu0 0
        %2091 = vmatpush1.bf16.xpose.msra.mxu0 %v2056
        %2092 = vmatprep.subr.bf16.mxu0 0
        %2093 = vmatpush1.bf16.xpose.msra.mxu0 %v2057
        %2094 = vmatprep.subr.bf16.mxu0 0
        %2095 = vmatpush1.bf16.xpose.msra.mxu0 %v2058
        %2096 = vmatprep.subr.bf16.mxu0 0
        %2097 = vmatpush1.bf16.xpose.msra.mxu0 %v2059
        %2098 = vmatprep.subr.bf16.mxu0 0
        %2099 = vmatpush1.bf16.xpose.msra.mxu0 %v2060
        %2100 = vmatprep.subr.bf16.mxu0 0
        %2101 = vmatpush1.bf16.xpose.msra.mxu0 %v2061
        %2102 = vmatprep.subr.bf16.mxu0 0
        %2103 = vmatpush1.bf16.xpose.msra.mxu0 0
        %2104 = vmatprep.subr.bf16.mxu0 0
        %2105 = vmatpush1.bf16.xpose.msra.mxu0 0
        %2106 = vmatprep.subr.bf16.mxu0 0
        %2107 = vmatpush1.bf16.xpose.msra.mxu0 0
        %2108 = vmatprep.subr.bf16.mxu0 0
        %2109 = vmatpush1.bf16.xpose.msra.mxu0 0
        %2110 = vmatprep.subr.bf16.mxu0 0
        %2111 = vmatpush1.bf16.xpose.msra.mxu0 0
        %2112 = vmatprep.subr.bf16.mxu0 0
        %2113 = vmatpush1.bf16.xpose.msra.mxu0 0
        %2114 = vmatprep.subr.bf16.mxu0 0
        %2115 = vmatpush1.bf16.xpose.msra.mxu0 0
        %2116 = vmatprep.subr.bf16.mxu0 0
        %2117 = vmatpush1.bf16.xpose.msra.mxu0 0
        %2118 = vmatprep.mubr.bf16.mxu0 0
        %2119 = vmatmul.mubr.bf16.gmra.mrb[0].mxu0 %v1168
        %v2120 = vpop.f32.mrb[0].mxu0
        %v2121 = vadd.f32 0.0, %v2120
        %v2122 = vpop.f32.mrb[0].mxu0
        %v2123 = vpop.f32.mrb[0].mxu0
        %v2124 = vpop.f32.mrb[0].mxu0
        %2125 = vdwg.mxu0
        %2126 = vmatprep.subr.bf16.mxu0 0
        %2127 = vmatpush1.bf16.xpose.msra.mxu0 %v2062
        %2128 = vmatprep.subr.bf16.mxu0 0
        %2129 = vmatpush1.bf16.xpose.msra.mxu0 %v2063
        %2130 = vmatprep.subr.bf16.mxu0 0
        %2131 = vmatpush1.bf16.xpose.msra.mxu0 %v2064
        %2132 = vmatprep.subr.bf16.mxu0 0
        %2133 = vmatpush1.bf16.xpose.msra.mxu0 %v2065
        %2134 = vmatprep.subr.bf16.mxu0 0
        %2135 = vmatpush1.bf16.xpose.msra.mxu0 %v2066
        %2136 = vmatprep.subr.bf16.mxu0 0
        %2137 = vmatpush1.bf16.xpose.msra.mxu0 %v2067
        %2138 = vmatprep.subr.bf16.mxu0 0
        %2139 = vmatpush1.bf16.xpose.msra.mxu0 %v2068
        %2140 = vmatprep.subr.bf16.mxu0 0
        %2141 = vmatpush1.bf16.xpose.msra.mxu0 %v2069
        %2142 = vmatprep.subr.bf16.mxu0 0
        %2143 = vmatpush1.bf16.xpose.msra.mxu0 0
        %2144 = vmatprep.subr.bf16.mxu0 0
        %2145 = vmatpush1.bf16.xpose.msra.mxu0 0
        %2146 = vmatprep.subr.bf16.mxu0 0
        %2147 = vmatpush1.bf16.xpose.msra.mxu0 0
        %2148 = vmatprep.subr.bf16.mxu0 0
        %2149 = vmatpush1.bf16.xpose.msra.mxu0 0
        %2150 = vmatprep.subr.bf16.mxu0 0
        %2151 = vmatpush1.bf16.xpose.msra.mxu0 0
        %2152 = vmatprep.subr.bf16.mxu0 0
        %2153 = vmatpush1.bf16.xpose.msra.mxu0 0
        %2154 = vmatprep.subr.bf16.mxu0 0
        %2155 = vmatpush1.bf16.xpose.msra.mxu0 0
        %2156 = vmatprep.subr.bf16.mxu0 0
        %2157 = vmatpush1.bf16.xpose.msra.mxu0 0
        %2158 = vmatprep.mubr.bf16.mxu0 0
        %2159 = vmatmul.mubr.bf16.gmra.mrb[0].mxu0 %v1169
        %v2160 = vpop.f32.mrb[0].mxu0
        %v2161 = vadd.f32 0.0, %v2160
        %v2162 = vpop.f32.mrb[0].mxu0
        %v2163 = vpop.f32.mrb[0].mxu0
        %v2164 = vpop.f32.mrb[0].mxu0
        %2165 = vdwg.mxu0
        %2166 = vmatprep.subr.bf16.mxu0 0
        %2167 = vmatpush1.bf16.xpose.msra.mxu0 %v2070
        %2168 = vmatprep.subr.bf16.mxu0 0
        %2169 = vmatpush1.bf16.xpose.msra.mxu0 %v2071
        %2170 = vmatprep.subr.bf16.mxu0 0
        %2171 = vmatpush1.bf16.xpose.msra.mxu0 %v2072
        %2172 = vmatprep.subr.bf16.mxu0 0
        %2173 = vmatpush1.bf16.xpose.msra.mxu0 %v2073
        %2174 = vmatprep.subr.bf16.mxu0 0
        %2175 = vmatpush1.bf16.xpose.msra.mxu0 %v2074
        %2176 = vmatprep.subr.bf16.mxu0 0
        %2177 = vmatpush1.bf16.xpose.msra.mxu0 %v2075
        %2178 = vmatprep.subr.bf16.mxu0 0
        %2179 = vmatpush1.bf16.xpose.msra.mxu0 %v2076
        %2180 = vmatprep.subr.bf16.mxu0 0
        %2181 = vmatpush1.bf16.xpose.msra.mxu0 %v2077
        %2182 = vmatprep.subr.bf16.mxu0 0
        %2183 = vmatpush1.bf16.xpose.msra.mxu0 0
        %2184 = vmatprep.subr.bf16.mxu0 0
        %2185 = vmatpush1.bf16.xpose.msra.mxu0 0
        %2186 = vmatprep.subr.bf16.mxu0 0
        %2187 = vmatpush1.bf16.xpose.msra.mxu0 0
        %2188 = vmatprep.subr.bf16.mxu0 0
        %2189 = vmatpush1.bf16.xpose.msra.mxu0 0
        %2190 = vmatprep.subr.bf16.mxu0 0
        %2191 = vmatpush1.bf16.xpose.msra.mxu0 0
        %2192 = vmatprep.subr.bf16.mxu0 0
        %2193 = vmatpush1.bf16.xpose.msra.mxu0 0
        %2194 = vmatprep.subr.bf16.mxu0 0
        %2195 = vmatpush1.bf16.xpose.msra.mxu0 0
        %2196 = vmatprep.subr.bf16.mxu0 0
        %2197 = vmatpush1.bf16.xpose.msra.mxu0 0
        %2198 = vmatprep.mubr.bf16.mxu0 0
        %2199 = vmatmul.mubr.bf16.gmra.mrb[0].mxu0 %v1170
        %v2200 = vpop.f32.mrb[0].mxu0
        %v2201 = vadd.f32 0.0, %v2200
        %v2202 = vpop.f32.mrb[0].mxu0
        %v2203 = vpop.f32.mrb[0].mxu0
        %v2204 = vpop.f32.mrb[0].mxu0
        %2205 = vdwg.mxu0
        %2206 = vmatprep.subr.bf16.mxu0 0
        %2207 = vmatpush1.bf16.xpose.msra.mxu0 %v2078
        %2208 = vmatprep.subr.bf16.mxu0 0
        %2209 = vmatpush1.bf16.xpose.msra.mxu0 %v2079
        %2210 = vmatprep.subr.bf16.mxu0 0
        %2211 = vmatpush1.bf16.xpose.msra.mxu0 %v2080
        %2212 = vmatprep.subr.bf16.mxu0 0
        %2213 = vmatpush1.bf16.xpose.msra.mxu0 %v2081
        %2214 = vmatprep.subr.bf16.mxu0 0
        %2215 = vmatpush1.bf16.xpose.msra.mxu0 %v2082
        %2216 = vmatprep.subr.bf16.mxu0 0
        %2217 = vmatpush1.bf16.xpose.msra.mxu0 %v2083
        %2218 = vmatprep.subr.bf16.mxu0 0
        %2219 = vmatpush1.bf16.xpose.msra.mxu0 %v2084
        %2220 = vmatprep.subr.bf16.mxu0 0
        %2221 = vmatpush1.bf16.xpose.msra.mxu0 %v2085
        %2222 = vmatprep.subr.bf16.mxu0 0
        %2223 = vmatpush1.bf16.xpose.msra.mxu0 0
        %2224 = vmatprep.subr.bf16.mxu0 0
        %2225 = vmatpush1.bf16.xpose.msra.mxu0 0
        %2226 = vmatprep.subr.bf16.mxu0 0
        %2227 = vmatpush1.bf16.xpose.msra.mxu0 0
        %2228 = vmatprep.subr.bf16.mxu0 0
        %2229 = vmatpush1.bf16.xpose.msra.mxu0 0
        %2230 = vmatprep.subr.bf16.mxu0 0
        %2231 = vmatpush1.bf16.xpose.msra.mxu0 0
        %2232 = vmatprep.subr.bf16.mxu0 0
        %2233 = vmatpush1.bf16.xpose.msra.mxu0 0
        %2234 = vmatprep.subr.bf16.mxu0 0
        %2235 = vmatpush1.bf16.xpose.msra.mxu0 0
        %2236 = vmatprep.subr.bf16.mxu0 0
        %2237 = vmatpush1.bf16.xpose.msra.mxu0 0
        %2238 = vmatprep.mubr.bf16.mxu0 0
        %2239 = vmatmul.mubr.bf16.gmra.mrb[0].mxu0 %v1171
        %v2240 = vpop.f32.mrb[0].mxu0
        %v2241 = vadd.f32 0.0, %v2240
        %v2242 = vpop.f32.mrb[0].mxu0
        %v2243 = vpop.f32.mrb[0].mxu0
        %v2244 = vpop.f32.mrb[0].mxu0
        %2245 = vdwg.mxu0
        %2246 = vmatprep.subr.bf16.mxu0 0
        %2247 = vmatpush1.bf16.xpose.msra.mxu0 %v2054
        %2248 = vmatprep.subr.bf16.mxu0 0
        %2249 = vmatpush1.bf16.xpose.msra.mxu0 %v2055
        %2250 = vmatprep.subr.bf16.mxu0 0
        %2251 = vmatpush1.bf16.xpose.msra.mxu0 %v2056
        %2252 = vmatprep.subr.bf16.mxu0 0
        %2253 = vmatpush1.bf16.xpose.msra.mxu0 %v2057
        %2254 = vmatprep.subr.bf16.mxu0 0
        %2255 = vmatpush1.bf16.xpose.msra.mxu0 %v2058
        %2256 = vmatprep.subr.bf16.mxu0 0
        %2257 = vmatpush1.bf16.xpose.msra.mxu0 %v2059
        %2258 = vmatprep.subr.bf16.mxu0 0
        %2259 = vmatpush1.bf16.xpose.msra.mxu0 %v2060
        %2260 = vmatprep.subr.bf16.mxu0 0
        %2261 = vmatpush1.bf16.xpose.msra.mxu0 %v2061
        %2262 = vmatprep.subr.bf16.mxu0 0
        %2263 = vmatpush1.bf16.xpose.msra.mxu0 0
        %2264 = vmatprep.subr.bf16.mxu0 0
        %2265 = vmatpush1.bf16.xpose.msra.mxu0 0
        %2266 = vmatprep.subr.bf16.mxu0 0
        %2267 = vmatpush1.bf16.xpose.msra.mxu0 0
        %2268 = vmatprep.subr.bf16.mxu0 0
        %2269 = vmatpush1.bf16.xpose.msra.mxu0 0
        %2270 = vmatprep.subr.bf16.mxu0 0
        %2271 = vmatpush1.bf16.xpose.msra.mxu0 0
        %2272 = vmatprep.subr.bf16.mxu0 0
        %2273 = vmatpush1.bf16.xpose.msra.mxu0 0
        %2274 = vmatprep.subr.bf16.mxu0 0
        %2275 = vmatpush1.bf16.xpose.msra.mxu0 0
        %2276 = vmatprep.subr.bf16.mxu0 0
        %2277 = vmatpush1.bf16.xpose.msra.mxu0 0
        %2278 = vmatprep.mubr.bf16.mxu0 0
        %2279 = vmatmul.mubr.bf16.gmra.mrb[0].mxu0 1065369472
        %v2280 = vpop.f32.mrb[0].mxu0
        %v2281 = vadd.f32 0.0, %v2280
        %v2282 = vpop.f32.mrb[0].mxu0
        %v2283 = vpop.f32.mrb[0].mxu0
        %v2284 = vpop.f32.mrb[0].mxu0
        %2285 = vdwg.mxu0
        %2286 = vmatprep.subr.bf16.mxu0 0
        %2287 = vmatpush1.bf16.xpose.msra.mxu0 %v2062
        %2288 = vmatprep.subr.bf16.mxu0 0
        %2289 = vmatpush1.bf16.xpose.msra.mxu0 %v2063
        %2290 = vmatprep.subr.bf16.mxu0 0
        %2291 = vmatpush1.bf16.xpose.msra.mxu0 %v2064
        %2292 = vmatprep.subr.bf16.mxu0 0
        %2293 = vmatpush1.bf16.xpose.msra.mxu0 %v2065
        %2294 = vmatprep.subr.bf16.mxu0 0
        %2295 = vmatpush1.bf16.xpose.msra.mxu0 %v2066
        %2296 = vmatprep.subr.bf16.mxu0 0
        %2297 = vmatpush1.bf16.xpose.msra.mxu0 %v2067
        %2298 = vmatprep.subr.bf16.mxu0 0
        %2299 = vmatpush1.bf16.xpose.msra.mxu0 %v2068
        %2300 = vmatprep.subr.bf16.mxu0 0
        %2301 = vmatpush1.bf16.xpose.msra.mxu0 %v2069
        %2302 = vmatprep.subr.bf16.mxu0 0
        %2303 = vmatpush1.bf16.xpose.msra.mxu0 0
        %2304 = vmatprep.subr.bf16.mxu0 0
        %2305 = vmatpush1.bf16.xpose.msra.mxu0 0
        %2306 = vmatprep.subr.bf16.mxu0 0
        %2307 = vmatpush1.bf16.xpose.msra.mxu0 0
        %2308 = vmatprep.subr.bf16.mxu0 0
        %2309 = vmatpush1.bf16.xpose.msra.mxu0 0
        %2310 = vmatprep.subr.bf16.mxu0 0
        %2311 = vmatpush1.bf16.xpose.msra.mxu0 0
        %2312 = vmatprep.subr.bf16.mxu0 0
        %2313 = vmatpush1.bf16.xpose.msra.mxu0 0
        %2314 = vmatprep.subr.bf16.mxu0 0
        %2315 = vmatpush1.bf16.xpose.msra.mxu0 0
        %2316 = vmatprep.subr.bf16.mxu0 0
        %2317 = vmatpush1.bf16.xpose.msra.mxu0 0
        %2318 = vmatprep.mubr.bf16.mxu0 0
        %2319 = vmatmul.mubr.bf16.gmra.mrb[0].mxu0 1065369472
        %v2320 = vpop.f32.mrb[0].mxu0
        %v2321 = vadd.f32 0.0, %v2320
        %v2322 = vpop.f32.mrb[0].mxu0
        %v2323 = vpop.f32.mrb[0].mxu0
        %v2324 = vpop.f32.mrb[0].mxu0
        %2325 = vdwg.mxu0
        %2326 = vmatprep.subr.bf16.mxu0 0
        %2327 = vmatpush1.bf16.xpose.msra.mxu0 %v2070
        %2328 = vmatprep.subr.bf16.mxu0 0
        %2329 = vmatpush1.bf16.xpose.msra.mxu0 %v2071
        %2330 = vmatprep.subr.bf16.mxu0 0
        %2331 = vmatpush1.bf16.xpose.msra.mxu0 %v2072
        %2332 = vmatprep.subr.bf16.mxu0 0
        %2333 = vmatpush1.bf16.xpose.msra.mxu0 %v2073
        %2334 = vmatprep.subr.bf16.mxu0 0
        %2335 = vmatpush1.bf16.xpose.msra.mxu0 %v2074
        %2336 = vmatprep.subr.bf16.mxu0 0
        %2337 = vmatpush1.bf16.xpose.msra.mxu0 %v2075
        %2338 = vmatprep.subr.bf16.mxu0 0
        %2339 = vmatpush1.bf16.xpose.msra.mxu0 %v2076
        %2340 = vmatprep.subr.bf16.mxu0 0
        %2341 = vmatpush1.bf16.xpose.msra.mxu0 %v2077
        %2342 = vmatprep.subr.bf16.mxu0 0
        %2343 = vmatpush1.bf16.xpose.msra.mxu0 0
        %2344 = vmatprep.subr.bf16.mxu0 0
        %2345 = vmatpush1.bf16.xpose.msra.mxu0 0
        %2346 = vmatprep.subr.bf16.mxu0 0
        %2347 = vmatpush1.bf16.xpose.msra.mxu0 0
        %2348 = vmatprep.subr.bf16.mxu0 0
        %2349 = vmatpush1.bf16.xpose.msra.mxu0 0
        %2350 = vmatprep.subr.bf16.mxu0 0
        %2351 = vmatpush1.bf16.xpose.msra.mxu0 0
        %2352 = vmatprep.subr.bf16.mxu0 0
        %2353 = vmatpush1.bf16.xpose.msra.mxu0 0
        %2354 = vmatprep.subr.bf16.mxu0 0
        %2355 = vmatpush1.bf16.xpose.msra.mxu0 0
        %2356 = vmatprep.subr.bf16.mxu0 0
        %2357 = vmatpush1.bf16.xpose.msra.mxu0 0
        %2358 = vmatprep.mubr.bf16.mxu0 0
        %2359 = vmatmul.mubr.bf16.gmra.mrb[0].mxu0 1065369472
        %v2360 = vpop.f32.mrb[0].mxu0
        %v2361 = vadd.f32 0.0, %v2360
        %v2362 = vpop.f32.mrb[0].mxu0
        %v2363 = vpop.f32.mrb[0].mxu0
        %v2364 = vpop.f32.mrb[0].mxu0
        %2365 = vdwg.mxu0
        %2366 = vmatprep.subr.bf16.mxu0 0
        %2367 = vmatpush1.bf16.xpose.msra.mxu0 %v2078
        %2368 = vmatprep.subr.bf16.mxu0 0
        %2369 = vmatpush1.bf16.xpose.msra.mxu0 %v2079
        %2370 = vmatprep.subr.bf16.mxu0 0
        %2371 = vmatpush1.bf16.xpose.msra.mxu0 %v2080
        %2372 = vmatprep.subr.bf16.mxu0 0
        %2373 = vmatpush1.bf16.xpose.msra.mxu0 %v2081
        %2374 = vmatprep.subr.bf16.mxu0 0
        %2375 = vmatpush1.bf16.xpose.msra.mxu0 %v2082
        %2376 = vmatprep.subr.bf16.mxu0 0
        %2377 = vmatpush1.bf16.xpose.msra.mxu0 %v2083
        %2378 = vmatprep.subr.bf16.mxu0 0
        %2379 = vmatpush1.bf16.xpose.msra.mxu0 %v2084
        %2380 = vmatprep.subr.bf16.mxu0 0
        %2381 = vmatpush1.bf16.xpose.msra.mxu0 %v2085
        %2382 = vmatprep.subr.bf16.mxu0 0
        %2383 = vmatpush1.bf16.xpose.msra.mxu0 0
        %2384 = vmatprep.subr.bf16.mxu0 0
        %2385 = vmatpush1.bf16.xpose.msra.mxu0 0
        %2386 = vmatprep.subr.bf16.mxu0 0
        %2387 = vmatpush1.bf16.xpose.msra.mxu0 0
        %2388 = vmatprep.subr.bf16.mxu0 0
        %2389 = vmatpush1.bf16.xpose.msra.mxu0 0
        %2390 = vmatprep.subr.bf16.mxu0 0
        %2391 = vmatpush1.bf16.xpose.msra.mxu0 0
        %2392 = vmatprep.subr.bf16.mxu0 0
        %2393 = vmatpush1.bf16.xpose.msra.mxu0 0
        %2394 = vmatprep.subr.bf16.mxu0 0
        %2395 = vmatpush1.bf16.xpose.msra.mxu0 0
        %2396 = vmatprep.subr.bf16.mxu0 0
        %2397 = vmatpush1.bf16.xpose.msra.mxu0 0
        %2398 = vmatprep.mubr.bf16.mxu0 0
        %2399 = vmatmul.mubr.bf16.gmra.mrb[0].mxu0 1065369472
        %v2400 = vpop.f32.mrb[0].mxu0
        %v2401 = vadd.f32 0.0, %v2400
        %v2402 = vpop.f32.mrb[0].mxu0
        %v2403 = vpop.f32.mrb[0].mxu0
        %v2404 = vpop.f32.mrb[0].mxu0
        %2405 = vdwg.mxu0
        %v2406 = vrcp.pop %v2281
        %v2407 = vrcp.pop %v2321
        %v2408 = vrcp.pop %v2361
        %v2409 = vrcp.pop %v2401
        %v2410 = vlaneseq
        %v2411 = vshrl.u32 %v2410, 7
        %v2412 = vsub.s32 0, %v2411
        %v2413 = vrot.slane %v2406, %v2412
        %v2414 = vlaneseq
        %v2415 = vshrl.u32 %v2414, 7
        %v2416 = vsub.s32 0, %v2415
        %v2417 = vrot.slane %v2407, %v2416
        %v2418 = vlaneseq
        %v2419 = vshrl.u32 %v2418, 7
        %v2420 = vsub.s32 0, %v2419
        %v2421 = vrot.slane %v2408, %v2420
        %v2422 = vlaneseq
        %v2423 = vshrl.u32 %v2422, 7
        %v2424 = vsub.s32 0, %v2423
        %v2425 = vrot.slane %v2409, %v2424
        %v2426 = vmul.f32 %v2121, %v2413
        %v2427 = vmul.f32 %v2161, %v2417
        %v2428 = vmul.f32 %v2201, %v2421
        %v2429 = vmul.f32 %v2241, %v2425
        %v2430 = vpack.c.bf16 %v2426, %v2426
        %v2431 = vpack.c.bf16 %v2427, %v2427
        %v2432 = vpack.c.bf16 %v2428, %v2428
        %v2433 = vpack.c.bf16 %v2429, %v2429
        %v2438 = vunpack.c.l.b16 %v467
        %v2439 = vunpack.c.l.b16 %v468
        %v2440 = vunpack.c.l.b16 %v469
        %v2441 = vunpack.c.l.b16 %v470
        %v2442 = vpack.c.b16 %v2439, %v2438
        %v2443 = vpack.c.b16 %v2441, %v2440
        %v2445 = vsel %vm1188, %v2442, 0
        %v2448 = vsel %vm1188, %v2443, 0
        %v2451 = vsel %vm1213, %v2430, 0
        %2453 = vmatprep.subr.bf16.mxu0 0
        %2454 = vmatpush1.bf16.msra.mxu0 %v2451
        %2455 = vmatprep.subr.bf16.mxu0 0
        %2456 = vmatpush1.bf16.msra.mxu0 0
        %2457 = vmatprep.subr.bf16.mxu0 0
        %2458 = vmatpush1.bf16.msra.mxu0 0
        %2459 = vmatprep.subr.bf16.mxu0 0
        %2460 = vmatpush1.bf16.msra.mxu0 0
        %2461 = vmatprep.subr.bf16.mxu0 0
        %2462 = vmatpush1.bf16.msra.mxu0 0
        %2463 = vmatprep.subr.bf16.mxu0 0
        %2464 = vmatpush1.bf16.msra.mxu0 0
        %2465 = vmatprep.subr.bf16.mxu0 0
        %2466 = vmatpush1.bf16.msra.mxu0 0
        %2467 = vmatprep.subr.bf16.mxu0 0
        %2468 = vmatpush1.bf16.msra.mxu0 0
        %2469 = vmatprep.subr.bf16.mxu0 0
        %2470 = vmatpush1.bf16.msra.mxu0 0
        %2471 = vmatprep.subr.bf16.mxu0 0
        %2472 = vmatpush1.bf16.msra.mxu0 0
        %2473 = vmatprep.subr.bf16.mxu0 0
        %2474 = vmatpush1.bf16.msra.mxu0 0
        %2475 = vmatprep.subr.bf16.mxu0 0
        %2476 = vmatpush1.bf16.msra.mxu0 0
        %2477 = vmatprep.subr.bf16.mxu0 0
        %2478 = vmatpush1.bf16.msra.mxu0 0
        %2479 = vmatprep.subr.bf16.mxu0 0
        %2480 = vmatpush1.bf16.msra.mxu0 0
        %2481 = vmatprep.subr.bf16.mxu0 0
        %2482 = vmatpush1.bf16.msra.mxu0 0
        %2483 = vmatprep.subr.bf16.mxu0 0
        %2484 = vmatpush1.bf16.msra.mxu0 0
        %2485 = vmatprep.mubr.bf16.mxu0 0
        %2486 = vmatmul.mubr.bf16.gmra.mrb[0].mxu0 %v2445
        %v2487 = vpop.f32.mrb[0].mxu0
        %v2488 = vadd.f32 0.0, %v2487
        %v2489 = vpop.f32.mrb[0].mxu0
        %v2490 = vpop.f32.mrb[0].mxu0
        %v2491 = vadd.f32 0.0, %v2490
        %v2492 = vpop.f32.mrb[0].mxu0
        %2493 = vmatprep.mubr.bf16.mxu0 0
        %2494 = vmatmul.mubr.bf16.gmra.mrb[0].mxu0 %v2448
        %v2495 = vpop.f32.mrb[0].mxu0
        %v2496 = vadd.f32 0.0, %v2495
        %v2497 = vpop.f32.mrb[0].mxu0
        %v2498 = vpop.f32.mrb[0].mxu0
        %v2499 = vadd.f32 0.0, %v2498
        %v2500 = vpop.f32.mrb[0].mxu0
        %2501 = vdwg.mxu0
        %v2506 = vunpack.c.l.b16 %v471
        %v2507 = vunpack.c.l.b16 %v472
        %v2508 = vunpack.c.l.b16 %v473
        %v2509 = vunpack.c.l.b16 %v474
        %v2510 = vpack.c.b16 %v2507, %v2506
        %v2511 = vpack.c.b16 %v2509, %v2508
        %v2513 = vsel %vm1188, %v2510, 0
        %v2516 = vsel %vm1188, %v2511, 0
        %v2519 = vsel %vm1213, %v2431, 0
        %2521 = vmatprep.subr.bf16.mxu0 0
        %2522 = vmatpush1.bf16.msra.mxu0 %v2519
        %2523 = vmatprep.subr.bf16.mxu0 0
        %2524 = vmatpush1.bf16.msra.mxu0 0
        %2525 = vmatprep.subr.bf16.mxu0 0
        %2526 = vmatpush1.bf16.msra.mxu0 0
        %2527 = vmatprep.subr.bf16.mxu0 0
        %2528 = vmatpush1.bf16.msra.mxu0 0
        %2529 = vmatprep.subr.bf16.mxu0 0
        %2530 = vmatpush1.bf16.msra.mxu0 0
        %2531 = vmatprep.subr.bf16.mxu0 0
        %2532 = vmatpush1.bf16.msra.mxu0 0
        %2533 = vmatprep.subr.bf16.mxu0 0
        %2534 = vmatpush1.bf16.msra.mxu0 0
        %2535 = vmatprep.subr.bf16.mxu0 0
        %2536 = vmatpush1.bf16.msra.mxu0 0
        %2537 = vmatprep.subr.bf16.mxu0 0
        %2538 = vmatpush1.bf16.msra.mxu0 0
        %2539 = vmatprep.subr.bf16.mxu0 0
        %2540 = vmatpush1.bf16.msra.mxu0 0
        %2541 = vmatprep.subr.bf16.mxu0 0
        %2542 = vmatpush1.bf16.msra.mxu0 0
        %2543 = vmatprep.subr.bf16.mxu0 0
        %2544 = vmatpush1.bf16.msra.mxu0 0
        %2545 = vmatprep.subr.bf16.mxu0 0
        %2546 = vmatpush1.bf16.msra.mxu0 0
        %2547 = vmatprep.subr.bf16.mxu0 0
        %2548 = vmatpush1.bf16.msra.mxu0 0
        %2549 = vmatprep.subr.bf16.mxu0 0
        %2550 = vmatpush1.bf16.msra.mxu0 0
        %2551 = vmatprep.subr.bf16.mxu0 0
        %2552 = vmatpush1.bf16.msra.mxu0 0
        %2553 = vmatprep.mubr.bf16.mxu0 0
        %2554 = vmatmul.mubr.bf16.gmra.mrb[0].mxu0 %v2513
        %v2555 = vpop.f32.mrb[0].mxu0
        %v2556 = vadd.f32 0.0, %v2555
        %v2557 = vpop.f32.mrb[0].mxu0
        %v2558 = vpop.f32.mrb[0].mxu0
        %v2559 = vadd.f32 0.0, %v2558
        %v2560 = vpop.f32.mrb[0].mxu0
        %2561 = vmatprep.mubr.bf16.mxu0 0
        %2562 = vmatmul.mubr.bf16.gmra.mrb[0].mxu0 %v2516
        %v2563 = vpop.f32.mrb[0].mxu0
        %v2564 = vadd.f32 0.0, %v2563
        %v2565 = vpop.f32.mrb[0].mxu0
        %v2566 = vpop.f32.mrb[0].mxu0
        %v2567 = vadd.f32 0.0, %v2566
        %v2568 = vpop.f32.mrb[0].mxu0
        %2569 = vdwg.mxu0
        %v2574 = vunpack.c.l.b16 %v475
        %v2575 = vunpack.c.l.b16 %v476
        %v2576 = vunpack.c.l.b16 %v477
        %v2577 = vunpack.c.l.b16 %v478
        %v2578 = vpack.c.b16 %v2575, %v2574
        %v2579 = vpack.c.b16 %v2577, %v2576
        %v2581 = vsel %vm1188, %v2578, 0
        %v2584 = vsel %vm1188, %v2579, 0
        %v2587 = vsel %vm1213, %v2432, 0
        %2589 = vmatprep.subr.bf16.mxu0 0
        %2590 = vmatpush1.bf16.msra.mxu0 %v2587
        %2591 = vmatprep.subr.bf16.mxu0 0
        %2592 = vmatpush1.bf16.msra.mxu0 0
        %2593 = vmatprep.subr.bf16.mxu0 0
        %2594 = vmatpush1.bf16.msra.mxu0 0
        %2595 = vmatprep.subr.bf16.mxu0 0
        %2596 = vmatpush1.bf16.msra.mxu0 0
        %2597 = vmatprep.subr.bf16.mxu0 0
        %2598 = vmatpush1.bf16.msra.mxu0 0
        %2599 = vmatprep.subr.bf16.mxu0 0
        %2600 = vmatpush1.bf16.msra.mxu0 0
        %2601 = vmatprep.subr.bf16.mxu0 0
        %2602 = vmatpush1.bf16.msra.mxu0 0
        %2603 = vmatprep.subr.bf16.mxu0 0
        %2604 = vmatpush1.bf16.msra.mxu0 0
        %2605 = vmatprep.subr.bf16.mxu0 0
        %2606 = vmatpush1.bf16.msra.mxu0 0
        %2607 = vmatprep.subr.bf16.mxu0 0
        %2608 = vmatpush1.bf16.msra.mxu0 0
        %2609 = vmatprep.subr.bf16.mxu0 0
        %2610 = vmatpush1.bf16.msra.mxu0 0
        %2611 = vmatprep.subr.bf16.mxu0 0
        %2612 = vmatpush1.bf16.msra.mxu0 0
        %2613 = vmatprep.subr.bf16.mxu0 0
        %2614 = vmatpush1.bf16.msra.mxu0 0
        %2615 = vmatprep.subr.bf16.mxu0 0
        %2616 = vmatpush1.bf16.msra.mxu0 0
        %2617 = vmatprep.subr.bf16.mxu0 0
        %2618 = vmatpush1.bf16.msra.mxu0 0
        %2619 = vmatprep.subr.bf16.mxu0 0
        %2620 = vmatpush1.bf16.msra.mxu0 0
        %2621 = vmatprep.mubr.bf16.mxu0 0
        %2622 = vmatmul.mubr.bf16.gmra.mrb[0].mxu0 %v2581
        %v2623 = vpop.f32.mrb[0].mxu0
        %v2624 = vadd.f32 0.0, %v2623
        %v2625 = vpop.f32.mrb[0].mxu0
        %v2626 = vpop.f32.mrb[0].mxu0
        %v2627 = vadd.f32 0.0, %v2626
        %v2628 = vpop.f32.mrb[0].mxu0
        %2629 = vmatprep.mubr.bf16.mxu0 0
        %2630 = vmatmul.mubr.bf16.gmra.mrb[0].mxu0 %v2584
        %v2631 = vpop.f32.mrb[0].mxu0
        %v2632 = vadd.f32 0.0, %v2631
        %v2633 = vpop.f32.mrb[0].mxu0
        %v2634 = vpop.f32.mrb[0].mxu0
        %v2635 = vadd.f32 0.0, %v2634
        %v2636 = vpop.f32.mrb[0].mxu0
        %2637 = vdwg.mxu0
        %v2642 = vunpack.c.l.b16 %v479
        %v2643 = vunpack.c.l.b16 %v480
        %v2644 = vunpack.c.l.b16 %v481
        %v2645 = vunpack.c.l.b16 %v482
        %v2646 = vpack.c.b16 %v2643, %v2642
        %v2647 = vpack.c.b16 %v2645, %v2644
        %v2649 = vsel %vm1188, %v2646, 0
        %v2652 = vsel %vm1188, %v2647, 0
        %v2655 = vsel %vm1213, %v2433, 0
        %2657 = vmatprep.subr.bf16.mxu0 0
        %2658 = vmatpush1.bf16.msra.mxu0 %v2655
        %2659 = vmatprep.subr.bf16.mxu0 0
        %2660 = vmatpush1.bf16.msra.mxu0 0
        %2661 = vmatprep.subr.bf16.mxu0 0
        %2662 = vmatpush1.bf16.msra.mxu0 0
        %2663 = vmatprep.subr.bf16.mxu0 0
        %2664 = vmatpush1.bf16.msra.mxu0 0
        %2665 = vmatprep.subr.bf16.mxu0 0
        %2666 = vmatpush1.bf16.msra.mxu0 0
        %2667 = vmatprep.subr.bf16.mxu0 0
        %2668 = vmatpush1.bf16.msra.mxu0 0
        %2669 = vmatprep.subr.bf16.mxu0 0
        %2670 = vmatpush1.bf16.msra.mxu0 0
        %2671 = vmatprep.subr.bf16.mxu0 0
        %2672 = vmatpush1.bf16.msra.mxu0 0
        %2673 = vmatprep.subr.bf16.mxu0 0
        %2674 = vmatpush1.bf16.msra.mxu0 0
        %2675 = vmatprep.subr.bf16.mxu0 0
        %2676 = vmatpush1.bf16.msra.mxu0 0
        %2677 = vmatprep.subr.bf16.mxu0 0
        %2678 = vmatpush1.bf16.msra.mxu0 0
        %2679 = vmatprep.subr.bf16.mxu0 0
        %2680 = vmatpush1.bf16.msra.mxu0 0
        %2681 = vmatprep.subr.bf16.mxu0 0
        %2682 = vmatpush1.bf16.msra.mxu0 0
        %2683 = vmatprep.subr.bf16.mxu0 0
        %2684 = vmatpush1.bf16.msra.mxu0 0
        %2685 = vmatprep.subr.bf16.mxu0 0
        %2686 = vmatpush1.bf16.msra.mxu0 0
        %2687 = vmatprep.subr.bf16.mxu0 0
        %2688 = vmatpush1.bf16.msra.mxu0 0
        %2689 = vmatprep.mubr.bf16.mxu0 0
        %2690 = vmatmul.mubr.bf16.gmra.mrb[0].mxu0 %v2649
        %v2691 = vpop.f32.mrb[0].mxu0
        %v2692 = vadd.f32 0.0, %v2691
        %v2693 = vpop.f32.mrb[0].mxu0
        %v2694 = vpop.f32.mrb[0].mxu0
        %v2695 = vadd.f32 0.0, %v2694
        %v2696 = vpop.f32.mrb[0].mxu0
        %2697 = vmatprep.mubr.bf16.mxu0 0
        %2698 = vmatmul.mubr.bf16.gmra.mrb[0].mxu0 %v2652
        %v2699 = vpop.f32.mrb[0].mxu0
        %v2700 = vadd.f32 0.0, %v2699
        %v2701 = vpop.f32.mrb[0].mxu0
        %v2702 = vpop.f32.mrb[0].mxu0
        %v2703 = vadd.f32 0.0, %v2702
        %v2704 = vpop.f32.mrb[0].mxu0
        %2705 = vdwg.mxu0
        %v2706 = vadd.f32 %v2488, %v2556
        %v2707 = vadd.f32 %v2706, %v2624
        %v2708 = vadd.f32 %v2707, %v2692
        %v2709 = vadd.f32 %v2491, %v2559
        %v2710 = vadd.f32 %v2709, %v2627
        %v2711 = vadd.f32 %v2710, %v2695
        %v2712 = vadd.f32 %v2496, %v2564
        %v2713 = vadd.f32 %v2712, %v2632
        %v2714 = vadd.f32 %v2713, %v2700
        %v2715 = vadd.f32 %v2499, %v2567
        %v2716 = vadd.f32 %v2715, %v2635
        %v2717 = vadd.f32 %v2716, %v2703
        %v2718 = vadd.f32 %v423, %v2708
        %v2719 = vadd.f32 %v424, %v2711
        %v2720 = vadd.f32 %v425, %v2714
        %v2721 = vadd.f32 %v426, %v2717
        %2722 = vset.pattern.permute.xlu0 4
        %2723 = vperm.xlu0 %2722, %v427
        %v2724 = vpop.permute.xlu0 %2723
        %2726 = vset.pattern.permute.xlu0 4
        %2727 = vperm.xlu0 %2726, %v428
        %v2728 = vpop.permute.xlu0 %2727
        %2730 = vset.pattern.permute.xlu0 4
        %2731 = vperm.xlu0 %2730, %v429
        %v2732 = vpop.permute.xlu0 %2731
        %2734 = vset.pattern.permute.xlu0 4
        %2735 = vperm.xlu0 %2734, %v430
        %v2736 = vpop.permute.xlu0 %2735
        %v2738 = vadd.f32 %v2718, %v2724
        %v2739 = vadd.f32 %v2719, %v2728
        %v2740 = vadd.f32 %v2720, %v2732
        %v2741 = vadd.f32 %v2721, %v2736
        %v2742 = vadd.f32 %v2738, %v2739
        %v2743 = vadd.f32 %v2742, %v2740
        %v2744 = vadd.f32 %v2743, %v2741
        %v2745 = vrot.slane %v2744, 4
        %v2746 = vadd.f32 %v2744, %v2745
        %v2747 = vrot.slane %v2746, 2
        %v2748 = vadd.f32 %v2746, %v2747
        %v2749 = vrot.slane %v2748, 1
        %v2750 = vadd.f32 %v2748, %v2749
        %v2751 = vmul.f32 %v2750, 0.03125
        %v2752 = vsub.f32 %v2738, %v2751
        %v2753 = vsub.f32 %v2739, %v2751
        %v2754 = vsub.f32 %v2740, %v2751
        %v2755 = vsub.f32 %v2741, %v2751
        %v2756 = vmul.f32 %v2752, %v2752
        %v2757 = vmul.f32 %v2753, %v2753
        %v2758 = vmul.f32 %v2754, %v2754
        %v2759 = vmul.f32 %v2755, %v2755
        %v2760 = vadd.f32 %v2756, %v2757
        %v2761 = vadd.f32 %v2760, %v2758
        %v2762 = vadd.f32 %v2761, %v2759
        %v2763 = vrot.slane %v2762, 4
        %v2764 = vadd.f32 %v2762, %v2763
        %v2765 = vrot.slane %v2764, 2
        %v2766 = vadd.f32 %v2764, %v2765
        %v2767 = vrot.slane %v2766, 1
        %v2768 = vadd.f32 %v2766, %v2767
        %v2769 = vmul.f32 %v2768, 0.03125
        %v2770 = vadd.f32 %v2769, 1e-06
        %v2771 = vrsqrt.pop %v2770
        %v2772 = vmul.f32 %v2752, %v2771
        %v2773 = vmul.f32 %v2753, %v2771
        %v2774 = vmul.f32 %v2754, %v2771
        %v2775 = vmul.f32 %v2755, %v2771
        %2776 = vset.pattern.permute.xlu0 2
        %2777 = vperm.xlu0 %2776, %v427
        %v2778 = vpop.permute.xlu0 %2777
        %2780 = vset.pattern.permute.xlu0 2
        %2781 = vperm.xlu0 %2780, %v428
        %v2782 = vpop.permute.xlu0 %2781
        %2784 = vset.pattern.permute.xlu0 2
        %2785 = vperm.xlu0 %2784, %v429
        %v2786 = vpop.permute.xlu0 %2785
        %2788 = vset.pattern.permute.xlu0 2
        %2789 = vperm.xlu0 %2788, %v430
        %v2790 = vpop.permute.xlu0 %2789
        %v2792 = vmul.f32 %v2772, %v2778
        %v2793 = vmul.f32 %v2773, %v2782
        %v2794 = vmul.f32 %v2774, %v2786
        %v2795 = vmul.f32 %v2775, %v2790
        %2796 = vset.pattern.permute.xlu0 3
        %2797 = vperm.xlu0 %2796, %v427
        %v2798 = vpop.permute.xlu0 %2797
        %2800 = vset.pattern.permute.xlu0 3
        %2801 = vperm.xlu0 %2800, %v428
        %v2802 = vpop.permute.xlu0 %2801
        %2804 = vset.pattern.permute.xlu0 3
        %2805 = vperm.xlu0 %2804, %v429
        %v2806 = vpop.permute.xlu0 %2805
        %2808 = vset.pattern.permute.xlu0 3
        %2809 = vperm.xlu0 %2808, %v430
        %v2810 = vpop.permute.xlu0 %2809
        %v2812 = vadd.f32 %v2792, %v2798
        %v2813 = vadd.f32 %v2793, %v2802
        %v2814 = vadd.f32 %v2794, %v2806
        %v2815 = vadd.f32 %v2795, %v2810
        %v2816 = vpack.c.bf16 %v2813, %v2812
        %v2817 = vpack.c.bf16 %v2815, %v2814
        %2818 = vset.pattern.permute.xlu0 6
        %2819 = vperm.xlu0 %2818, %v427
        %v2820 = vpop.permute.xlu0 %2819
        %2822 = vset.pattern.permute.xlu0 6
        %2823 = vperm.xlu0 %2822, %v428
        %v2824 = vpop.permute.xlu0 %2823
        %2826 = vset.pattern.permute.xlu0 6
        %2827 = vperm.xlu0 %2826, %v429
        %v2828 = vpop.permute.xlu0 %2827
        %2830 = vset.pattern.permute.xlu0 6
        %2831 = vperm.xlu0 %2830, %v430
        %v2832 = vpop.permute.xlu0 %2831
        %2835 = vset.pattern.permute.xlu0 6
        %2836 = vperm.xlu0 %2835, %v431
        %v2837 = vpop.permute.xlu0 %2836
        %2840 = vset.pattern.permute.xlu0 6
        %2841 = vperm.xlu0 %2840, %v432
        %v2842 = vpop.permute.xlu0 %2841
        %2845 = vset.pattern.permute.xlu0 6
        %2846 = vperm.xlu0 %2845, %v433
        %v2847 = vpop.permute.xlu0 %2846
        %2850 = vset.pattern.permute.xlu0 6
        %2851 = vperm.xlu0 %2850, %v434
        %v2852 = vpop.permute.xlu0 %2851
        %2855 = vset.pattern.permute.xlu0 6
        %2856 = vperm.xlu0 %2855, %v435
        %v2857 = vpop.permute.xlu0 %2856
        %2860 = vset.pattern.permute.xlu0 6
        %2861 = vperm.xlu0 %2860, %v436
        %v2862 = vpop.permute.xlu0 %2861
        %2865 = vset.pattern.permute.xlu0 6
        %2866 = vperm.xlu0 %2865, %v437
        %v2867 = vpop.permute.xlu0 %2866
        %2870 = vset.pattern.permute.xlu0 6
        %2871 = vperm.xlu0 %2870, %v438
        %v2872 = vpop.permute.xlu0 %2871
        %2875 = vset.pattern.permute.xlu0 6
        %2876 = vperm.xlu0 %2875, %v439
        %v2877 = vpop.permute.xlu0 %2876
        %2880 = vset.pattern.permute.xlu0 6
        %2881 = vperm.xlu0 %2880, %v440
        %v2882 = vpop.permute.xlu0 %2881
        %2885 = vset.pattern.permute.xlu0 6
        %2886 = vperm.xlu0 %2885, %v441
        %v2887 = vpop.permute.xlu0 %2886
        %2890 = vset.pattern.permute.xlu0 6
        %2891 = vperm.xlu0 %2890, %v442
        %v2892 = vpop.permute.xlu0 %2891
        %v2910 = vunpack.c.l.b16 %v483
        %v2911 = vunpack.c.l.b16 %v484
        %v2912 = vunpack.c.l.b16 %v485
        %v2913 = vunpack.c.l.b16 %v486
        %v2914 = vunpack.c.l.b16 %v487
        %v2915 = vunpack.c.l.b16 %v488
        %v2916 = vunpack.c.l.b16 %v489
        %v2917 = vunpack.c.l.b16 %v490
        %v2918 = vunpack.c.l.b16 %v491
        %v2919 = vunpack.c.l.b16 %v492
        %v2920 = vunpack.c.l.b16 %v493
        %v2921 = vunpack.c.l.b16 %v494
        %v2922 = vunpack.c.l.b16 %v495
        %v2923 = vunpack.c.l.b16 %v496
        %v2924 = vunpack.c.l.b16 %v497
        %v2925 = vunpack.c.l.b16 %v498
        %v2926 = vpack.c.b16 %v2911, %v2910
        %v2927 = vpack.c.b16 %v2913, %v2912
        %v2928 = vpack.c.b16 %v2915, %v2914
        %v2929 = vpack.c.b16 %v2917, %v2916
        %v2930 = vpack.c.b16 %v2919, %v2918
        %v2931 = vpack.c.b16 %v2921, %v2920
        %v2932 = vpack.c.b16 %v2923, %v2922
        %v2933 = vpack.c.b16 %v2925, %v2924
        %v2935 = vsel %vm643, %v2926, 0
        %v2938 = vsel %vm643, %v2927, 0
        %v2941 = vsel %vm643, %v2928, 0
        %v2944 = vsel %vm643, %v2929, 0
        %v2947 = vsel %vm643, %v2930, 0
        %v2950 = vsel %vm643, %v2931, 0
        %v2953 = vsel %vm643, %v2932, 0
        %v2956 = vsel %vm643, %v2933, 0
        %2958 = vmatprep.subr.bf16.mxu0 0
        %2959 = vmatpush1.bf16.msra.mxu0 %v2816
        %2960 = vmatprep.subr.bf16.mxu0 0
        %2961 = vmatpush1.bf16.msra.mxu0 %v2817
        %2962 = vmatprep.subr.bf16.mxu0 0
        %2963 = vmatpush1.bf16.msra.mxu0 0
        %2964 = vmatprep.subr.bf16.mxu0 0
        %2965 = vmatpush1.bf16.msra.mxu0 0
        %2966 = vmatprep.subr.bf16.mxu0 0
        %2967 = vmatpush1.bf16.msra.mxu0 0
        %2968 = vmatprep.subr.bf16.mxu0 0
        %2969 = vmatpush1.bf16.msra.mxu0 0
        %2970 = vmatprep.subr.bf16.mxu0 0
        %2971 = vmatpush1.bf16.msra.mxu0 0
        %2972 = vmatprep.subr.bf16.mxu0 0
        %2973 = vmatpush1.bf16.msra.mxu0 0
        %2974 = vmatprep.subr.bf16.mxu0 0
        %2975 = vmatpush1.bf16.msra.mxu0 0
        %2976 = vmatprep.subr.bf16.mxu0 0
        %2977 = vmatpush1.bf16.msra.mxu0 0
        %2978 = vmatprep.subr.bf16.mxu0 0
        %2979 = vmatpush1.bf16.msra.mxu0 0
        %2980 = vmatprep.subr.bf16.mxu0 0
        %2981 = vmatpush1.bf16.msra.mxu0 0
        %2982 = vmatprep.subr.bf16.mxu0 0
        %2983 = vmatpush1.bf16.msra.mxu0 0
        %2984 = vmatprep.subr.bf16.mxu0 0
        %2985 = vmatpush1.bf16.msra.mxu0 0
        %2986 = vmatprep.subr.bf16.mxu0 0
        %2987 = vmatpush1.bf16.msra.mxu0 0
        %2988 = vmatprep.subr.bf16.mxu0 0
        %2989 = vmatpush1.bf16.msra.mxu0 0
        %2990 = vmatprep.mubr.bf16.mxu0 0
        %2991 = vmatmul.mubr.bf16.gmra.mrb[0].mxu0 %v2935
        %v2992 = vpop.f32.mrb[0].mxu0
        %v2993 = vadd.f32 %v2820, %v2992
        %v2994 = vpop.f32.mrb[0].mxu0
        %v2995 = vpop.f32.mrb[0].mxu0
        %v2996 = vadd.f32 %v2824, %v2995
        %v2997 = vpop.f32.mrb[0].mxu0
        %2998 = vmatprep.mubr.bf16.mxu0 0
        %2999 = vmatmul.mubr.bf16.gmra.mrb[0].mxu0 %v2938
        %v3000 = vpop.f32.mrb[0].mxu0
        %v3001 = vadd.f32 %v2828, %v3000
        %v3002 = vpop.f32.mrb[0].mxu0
        %v3003 = vpop.f32.mrb[0].mxu0
        %v3004 = vadd.f32 %v2832, %v3003
        %v3005 = vpop.f32.mrb[0].mxu0
        %3006 = vmatprep.mubr.bf16.mxu0 0
        %3007 = vmatmul.mubr.bf16.gmra.mrb[0].mxu0 %v2941
        %v3008 = vpop.f32.mrb[0].mxu0
        %v3009 = vadd.f32 %v2837, %v3008
        %v3010 = vpop.f32.mrb[0].mxu0
        %v3011 = vpop.f32.mrb[0].mxu0
        %v3012 = vadd.f32 %v2842, %v3011
        %v3013 = vpop.f32.mrb[0].mxu0
        %3014 = vmatprep.mubr.bf16.mxu0 0
        %3015 = vmatmul.mubr.bf16.gmra.mrb[0].mxu0 %v2944
        %v3016 = vpop.f32.mrb[0].mxu0
        %v3017 = vadd.f32 %v2847, %v3016
        %v3018 = vpop.f32.mrb[0].mxu0
        %v3019 = vpop.f32.mrb[0].mxu0
        %v3020 = vadd.f32 %v2852, %v3019
        %v3021 = vpop.f32.mrb[0].mxu0
        %3022 = vmatprep.mubr.bf16.mxu0 0
        %3023 = vmatmul.mubr.bf16.gmra.mrb[0].mxu0 %v2947
        %v3024 = vpop.f32.mrb[0].mxu0
        %v3025 = vadd.f32 %v2857, %v3024
        %v3026 = vpop.f32.mrb[0].mxu0
        %v3027 = vpop.f32.mrb[0].mxu0
        %v3028 = vadd.f32 %v2862, %v3027
        %v3029 = vpop.f32.mrb[0].mxu0
        %3030 = vmatprep.mubr.bf16.mxu0 0
        %3031 = vmatmul.mubr.bf16.gmra.mrb[0].mxu0 %v2950
        %v3032 = vpop.f32.mrb[0].mxu0
        %v3033 = vadd.f32 %v2867, %v3032
        %v3034 = vpop.f32.mrb[0].mxu0
        %v3035 = vpop.f32.mrb[0].mxu0
        %v3036 = vadd.f32 %v2872, %v3035
        %v3037 = vpop.f32.mrb[0].mxu0
        %3038 = vmatprep.mubr.bf16.mxu0 0
        %3039 = vmatmul.mubr.bf16.gmra.mrb[0].mxu0 %v2953
        %v3040 = vpop.f32.mrb[0].mxu0
        %v3041 = vadd.f32 %v2877, %v3040
        %v3042 = vpop.f32.mrb[0].mxu0
        %v3043 = vpop.f32.mrb[0].mxu0
        %v3044 = vadd.f32 %v2882, %v3043
        %v3045 = vpop.f32.mrb[0].mxu0
        %3046 = vmatprep.mubr.bf16.mxu0 0
        %3047 = vmatmul.mubr.bf16.gmra.mrb[0].mxu0 %v2956
        %v3048 = vpop.f32.mrb[0].mxu0
        %v3049 = vadd.f32 %v2887, %v3048
        %v3050 = vpop.f32.mrb[0].mxu0
        %v3051 = vpop.f32.mrb[0].mxu0
        %v3052 = vadd.f32 %v2892, %v3051
        %v3053 = vpop.f32.mrb[0].mxu0
        %3054 = vdwg.mxu0
        %v3055 = vmul.f32 %v2993, 0.5
        %v3056 = vmul.f32 %v2996, 0.5
        %v3057 = vmul.f32 %v3001, 0.5
        %v3058 = vmul.f32 %v3004, 0.5
        %v3059 = vmul.f32 %v3009, 0.5
        %v3060 = vmul.f32 %v3012, 0.5
        %v3061 = vmul.f32 %v3017, 0.5
        %v3062 = vmul.f32 %v3020, 0.5
        %v3063 = vmul.f32 %v3025, 0.5
        %v3064 = vmul.f32 %v3028, 0.5
        %v3065 = vmul.f32 %v3033, 0.5
        %v3066 = vmul.f32 %v3036, 0.5
        %v3067 = vmul.f32 %v3041, 0.5
        %v3068 = vmul.f32 %v3044, 0.5
        %v3069 = vmul.f32 %v3049, 0.5
        %v3070 = vmul.f32 %v3052, 0.5
        %v3071 = vmul.f32 %v2993, 0.70710677
        %v3072 = vmul.f32 %v2996, 0.70710677
        %v3073 = vmul.f32 %v3001, 0.70710677
        %v3074 = vmul.f32 %v3004, 0.70710677
        %v3075 = vmul.f32 %v3009, 0.70710677
        %v3076 = vmul.f32 %v3012, 0.70710677
        %v3077 = vmul.f32 %v3017, 0.70710677
        %v3078 = vmul.f32 %v3020, 0.70710677
        %v3079 = vmul.f32 %v3025, 0.70710677
        %v3080 = vmul.f32 %v3028, 0.70710677
        %v3081 = vmul.f32 %v3033, 0.70710677
        %v3082 = vmul.f32 %v3036, 0.70710677
        %v3083 = vmul.f32 %v3041, 0.70710677
        %v3084 = vmul.f32 %v3044, 0.70710677
        %v3085 = vmul.f32 %v3049, 0.70710677
        %v3086 = vmul.f32 %v3052, 0.70710677
        %v3087 = vand.u32 2147483647, %v3071
        %v3088 = vand.u32 2147483647, %v3072
        %v3089 = vand.u32 2147483647, %v3073
        %v3090 = vand.u32 2147483647, %v3074
        %v3091 = vand.u32 2147483647, %v3075
        %v3092 = vand.u32 2147483647, %v3076
        %v3093 = vand.u32 2147483647, %v3077
        %v3094 = vand.u32 2147483647, %v3078
        %v3095 = vand.u32 2147483647, %v3079
        %v3096 = vand.u32 2147483647, %v3080
        %v3097 = vand.u32 2147483647, %v3081
        %v3098 = vand.u32 2147483647, %v3082
        %v3099 = vand.u32 2147483647, %v3083
        %v3100 = vand.u32 2147483647, %v3084
        %v3101 = vand.u32 2147483647, %v3085
        %v3102 = vand.u32 2147483647, %v3086
        %v3103 = vmul.f32 %v3087, 0.3275911
        %v3104 = vmul.f32 %v3088, 0.3275911
        %v3105 = vmul.f32 %v3089, 0.3275911
        %v3106 = vmul.f32 %v3090, 0.3275911
        %v3107 = vmul.f32 %v3091, 0.3275911
        %v3108 = vmul.f32 %v3092, 0.3275911
        %v3109 = vmul.f32 %v3093, 0.3275911
        %v3110 = vmul.f32 %v3094, 0.3275911
        %v3111 = vmul.f32 %v3095, 0.3275911
        %v3112 = vmul.f32 %v3096, 0.3275911
        %v3113 = vmul.f32 %v3097, 0.3275911
        %v3114 = vmul.f32 %v3098, 0.3275911
        %v3115 = vmul.f32 %v3099, 0.3275911
        %v3116 = vmul.f32 %v3100, 0.3275911
        %v3117 = vmul.f32 %v3101, 0.3275911
        %v3118 = vmul.f32 %v3102, 0.3275911
        %v3119 = vadd.f32 %v3103, 1.0
        %v3120 = vadd.f32 %v3104, 1.0
        %v3121 = vadd.f32 %v3105, 1.0
        %v3122 = vadd.f32 %v3106, 1.0
        %v3123 = vadd.f32 %v3107, 1.0
        %v3124 = vadd.f32 %v3108, 1.0
        %v3125 = vadd.f32 %v3109, 1.0
        %v3126 = vadd.f32 %v3110, 1.0
        %v3127 = vadd.f32 %v3111, 1.0
        %v3128 = vadd.f32 %v3112, 1.0
        %v3129 = vadd.f32 %v3113, 1.0
        %v3130 = vadd.f32 %v3114, 1.0
        %v3131 = vadd.f32 %v3115, 1.0
        %v3132 = vadd.f32 %v3116, 1.0
        %v3133 = vadd.f32 %v3117, 1.0
        %v3134 = vadd.f32 %v3118, 1.0
        %v3135 = vrcp.pop %v3119
        %v3136 = vmul.f32 1.0, %v3135
        %v3137 = vrcp.pop %v3120
        %v3138 = vmul.f32 1.0, %v3137
        %v3139 = vrcp.pop %v3121
        %v3140 = vmul.f32 1.0, %v3139
        %v3141 = vrcp.pop %v3122
        %v3142 = vmul.f32 1.0, %v3141
        %v3143 = vrcp.pop %v3123
        %v3144 = vmul.f32 1.0, %v3143
        %v3145 = vrcp.pop %v3124
        %v3146 = vmul.f32 1.0, %v3145
        %v3147 = vrcp.pop %v3125
        %v3148 = vmul.f32 1.0, %v3147
        %v3149 = vrcp.pop %v3126
        %v3150 = vmul.f32 1.0, %v3149
        %v3151 = vrcp.pop %v3127
        %v3152 = vmul.f32 1.0, %v3151
        %v3153 = vrcp.pop %v3128
        %v3154 = vmul.f32 1.0, %v3153
        %v3155 = vrcp.pop %v3129
        %v3156 = vmul.f32 1.0, %v3155
        %v3157 = vrcp.pop %v3130
        %v3158 = vmul.f32 1.0, %v3157
        %v3159 = vrcp.pop %v3131
        %v3160 = vmul.f32 1.0, %v3159
        %v3161 = vrcp.pop %v3132
        %v3162 = vmul.f32 1.0, %v3161
        %v3163 = vrcp.pop %v3133
        %v3164 = vmul.f32 1.0, %v3163
        %v3165 = vrcp.pop %v3134
        %v3166 = vmul.f32 1.0, %v3165
        %v3167 = vmul.f32 %v3136, 1.0614054
        %v3168 = vmul.f32 %v3138, 1.0614054
        %v3169 = vmul.f32 %v3140, 1.0614054
        %v3170 = vmul.f32 %v3142, 1.0614054
        %v3171 = vmul.f32 %v3144, 1.0614054
        %v3172 = vmul.f32 %v3146, 1.0614054
        %v3173 = vmul.f32 %v3148, 1.0614054
        %v3174 = vmul.f32 %v3150, 1.0614054
        %v3175 = vmul.f32 %v3152, 1.0614054
        %v3176 = vmul.f32 %v3154, 1.0614054
        %v3177 = vmul.f32 %v3156, 1.0614054
        %v3178 = vmul.f32 %v3158, 1.0614054
        %v3179 = vmul.f32 %v3160, 1.0614054
        %v3180 = vmul.f32 %v3162, 1.0614054
        %v3181 = vmul.f32 %v3164, 1.0614054
        %v3182 = vmul.f32 %v3166, 1.0614054
        %v3183 = vadd.f32 %v3167, -1.4531521
        %v3184 = vadd.f32 %v3168, -1.4531521
        %v3185 = vadd.f32 %v3169, -1.4531521
        %v3186 = vadd.f32 %v3170, -1.4531521
        %v3187 = vadd.f32 %v3171, -1.4531521
        %v3188 = vadd.f32 %v3172, -1.4531521
        %v3189 = vadd.f32 %v3173, -1.4531521
        %v3190 = vadd.f32 %v3174, -1.4531521
        %v3191 = vadd.f32 %v3175, -1.4531521
        %v3192 = vadd.f32 %v3176, -1.4531521
        %v3193 = vadd.f32 %v3177, -1.4531521
        %v3194 = vadd.f32 %v3178, -1.4531521
        %v3195 = vadd.f32 %v3179, -1.4531521
        %v3196 = vadd.f32 %v3180, -1.4531521
        %v3197 = vadd.f32 %v3181, -1.4531521
        %v3198 = vadd.f32 %v3182, -1.4531521
        %v3199 = vmul.f32 %v3183, %v3136
        %v3200 = vmul.f32 %v3184, %v3138
        %v3201 = vmul.f32 %v3185, %v3140
        %v3202 = vmul.f32 %v3186, %v3142
        %v3203 = vmul.f32 %v3187, %v3144
        %v3204 = vmul.f32 %v3188, %v3146
        %v3205 = vmul.f32 %v3189, %v3148
        %v3206 = vmul.f32 %v3190, %v3150
        %v3207 = vmul.f32 %v3191, %v3152
        %v3208 = vmul.f32 %v3192, %v3154
        %v3209 = vmul.f32 %v3193, %v3156
        %v3210 = vmul.f32 %v3194, %v3158
        %v3211 = vmul.f32 %v3195, %v3160
        %v3212 = vmul.f32 %v3196, %v3162
        %v3213 = vmul.f32 %v3197, %v3164
        %v3214 = vmul.f32 %v3198, %v3166
        %v3215 = vadd.f32 %v3199, 1.4214138
        %v3216 = vadd.f32 %v3200, 1.4214138
        %v3217 = vadd.f32 %v3201, 1.4214138
        %v3218 = vadd.f32 %v3202, 1.4214138
        %v3219 = vadd.f32 %v3203, 1.4214138
        %v3220 = vadd.f32 %v3204, 1.4214138
        %v3221 = vadd.f32 %v3205, 1.4214138
        %v3222 = vadd.f32 %v3206, 1.4214138
        %v3223 = vadd.f32 %v3207, 1.4214138
        %v3224 = vadd.f32 %v3208, 1.4214138
        %v3225 = vadd.f32 %v3209, 1.4214138
        %v3226 = vadd.f32 %v3210, 1.4214138
        %v3227 = vadd.f32 %v3211, 1.4214138
        %v3228 = vadd.f32 %v3212, 1.4214138
        %v3229 = vadd.f32 %v3213, 1.4214138
        %v3230 = vadd.f32 %v3214, 1.4214138
        %v3231 = vmul.f32 %v3215, %v3136
        %v3232 = vmul.f32 %v3216, %v3138
        %v3233 = vmul.f32 %v3217, %v3140
        %v3234 = vmul.f32 %v3218, %v3142
        %v3235 = vmul.f32 %v3219, %v3144
        %v3236 = vmul.f32 %v3220, %v3146
        %v3237 = vmul.f32 %v3221, %v3148
        %v3238 = vmul.f32 %v3222, %v3150
        %v3239 = vmul.f32 %v3223, %v3152
        %v3240 = vmul.f32 %v3224, %v3154
        %v3241 = vmul.f32 %v3225, %v3156
        %v3242 = vmul.f32 %v3226, %v3158
        %v3243 = vmul.f32 %v3227, %v3160
        %v3244 = vmul.f32 %v3228, %v3162
        %v3245 = vmul.f32 %v3229, %v3164
        %v3246 = vmul.f32 %v3230, %v3166
        %v3247 = vadd.f32 %v3231, -0.28449672
        %v3248 = vadd.f32 %v3232, -0.28449672
        %v3249 = vadd.f32 %v3233, -0.28449672
        %v3250 = vadd.f32 %v3234, -0.28449672
        %v3251 = vadd.f32 %v3235, -0.28449672
        %v3252 = vadd.f32 %v3236, -0.28449672
        %v3253 = vadd.f32 %v3237, -0.28449672
        %v3254 = vadd.f32 %v3238, -0.28449672
        %v3255 = vadd.f32 %v3239, -0.28449672
        %v3256 = vadd.f32 %v3240, -0.28449672
        %v3257 = vadd.f32 %v3241, -0.28449672
        %v3258 = vadd.f32 %v3242, -0.28449672
        %v3259 = vadd.f32 %v3243, -0.28449672
        %v3260 = vadd.f32 %v3244, -0.28449672
        %v3261 = vadd.f32 %v3245, -0.28449672
        %v3262 = vadd.f32 %v3246, -0.28449672
        %v3263 = vmul.f32 %v3247, %v3136
        %v3264 = vmul.f32 %v3248, %v3138
        %v3265 = vmul.f32 %v3249, %v3140
        %v3266 = vmul.f32 %v3250, %v3142
        %v3267 = vmul.f32 %v3251, %v3144
        %v3268 = vmul.f32 %v3252, %v3146
        %v3269 = vmul.f32 %v3253, %v3148
        %v3270 = vmul.f32 %v3254, %v3150
        %v3271 = vmul.f32 %v3255, %v3152
        %v3272 = vmul.f32 %v3256, %v3154
        %v3273 = vmul.f32 %v3257, %v3156
        %v3274 = vmul.f32 %v3258, %v3158
        %v3275 = vmul.f32 %v3259, %v3160
        %v3276 = vmul.f32 %v3260, %v3162
        %v3277 = vmul.f32 %v3261, %v3164
        %v3278 = vmul.f32 %v3262, %v3166
        %v3279 = vadd.f32 %v3263, 0.2548296
        %v3280 = vadd.f32 %v3264, 0.2548296
        %v3281 = vadd.f32 %v3265, 0.2548296
        %v3282 = vadd.f32 %v3266, 0.2548296
        %v3283 = vadd.f32 %v3267, 0.2548296
        %v3284 = vadd.f32 %v3268, 0.2548296
        %v3285 = vadd.f32 %v3269, 0.2548296
        %v3286 = vadd.f32 %v3270, 0.2548296
        %v3287 = vadd.f32 %v3271, 0.2548296
        %v3288 = vadd.f32 %v3272, 0.2548296
        %v3289 = vadd.f32 %v3273, 0.2548296
        %v3290 = vadd.f32 %v3274, 0.2548296
        %v3291 = vadd.f32 %v3275, 0.2548296
        %v3292 = vadd.f32 %v3276, 0.2548296
        %v3293 = vadd.f32 %v3277, 0.2548296
        %v3294 = vadd.f32 %v3278, 0.2548296
        %v3295 = vmul.f32 %v3279, %v3136
        %v3296 = vmul.f32 %v3280, %v3138
        %v3297 = vmul.f32 %v3281, %v3140
        %v3298 = vmul.f32 %v3282, %v3142
        %v3299 = vmul.f32 %v3283, %v3144
        %v3300 = vmul.f32 %v3284, %v3146
        %v3301 = vmul.f32 %v3285, %v3148
        %v3302 = vmul.f32 %v3286, %v3150
        %v3303 = vmul.f32 %v3287, %v3152
        %v3304 = vmul.f32 %v3288, %v3154
        %v3305 = vmul.f32 %v3289, %v3156
        %v3306 = vmul.f32 %v3290, %v3158
        %v3307 = vmul.f32 %v3291, %v3160
        %v3308 = vmul.f32 %v3292, %v3162
        %v3309 = vmul.f32 %v3293, %v3164
        %v3310 = vmul.f32 %v3294, %v3166
        %v3311 = vsub.f32 0.0, %v3087
        %v3312 = vsub.f32 0.0, %v3088
        %v3313 = vsub.f32 0.0, %v3089
        %v3314 = vsub.f32 0.0, %v3090
        %v3315 = vsub.f32 0.0, %v3091
        %v3316 = vsub.f32 0.0, %v3092
        %v3317 = vsub.f32 0.0, %v3093
        %v3318 = vsub.f32 0.0, %v3094
        %v3319 = vsub.f32 0.0, %v3095
        %v3320 = vsub.f32 0.0, %v3096
        %v3321 = vsub.f32 0.0, %v3097
        %v3322 = vsub.f32 0.0, %v3098
        %v3323 = vsub.f32 0.0, %v3099
        %v3324 = vsub.f32 0.0, %v3100
        %v3325 = vsub.f32 0.0, %v3101
        %v3326 = vsub.f32 0.0, %v3102
        %v3327 = vmul.f32 %v3311, %v3087
        %v3328 = vmul.f32 %v3312, %v3088
        %v3329 = vmul.f32 %v3313, %v3089
        %v3330 = vmul.f32 %v3314, %v3090
        %v3331 = vmul.f32 %v3315, %v3091
        %v3332 = vmul.f32 %v3316, %v3092
        %v3333 = vmul.f32 %v3317, %v3093
        %v3334 = vmul.f32 %v3318, %v3094
        %v3335 = vmul.f32 %v3319, %v3095
        %v3336 = vmul.f32 %v3320, %v3096
        %v3337 = vmul.f32 %v3321, %v3097
        %v3338 = vmul.f32 %v3322, %v3098
        %v3339 = vmul.f32 %v3323, %v3099
        %v3340 = vmul.f32 %v3324, %v3100
        %v3341 = vmul.f32 %v3325, %v3101
        %v3342 = vmul.f32 %v3326, %v3102
        %v3343 = vmul.f32 %v3327, 1.442695
        %v3344 = vpow.pop %v3343
        %v3345 = vmul.f32 %v3328, 1.442695
        %v3346 = vpow.pop %v3345
        %v3347 = vmul.f32 %v3329, 1.442695
        %v3348 = vpow.pop %v3347
        %v3349 = vmul.f32 %v3330, 1.442695
        %v3350 = vpow.pop %v3349
        %v3351 = vmul.f32 %v3331, 1.442695
        %v3352 = vpow.pop %v3351
        %v3353 = vmul.f32 %v3332, 1.442695
        %v3354 = vpow.pop %v3353
        %v3355 = vmul.f32 %v3333, 1.442695
        %v3356 = vpow.pop %v3355
        %v3357 = vmul.f32 %v3334, 1.442695
        %v3358 = vpow.pop %v3357
        %v3359 = vmul.f32 %v3335, 1.442695
        %v3360 = vpow.pop %v3359
        %v3361 = vmul.f32 %v3336, 1.442695
        %v3362 = vpow.pop %v3361
        %v3363 = vmul.f32 %v3337, 1.442695
        %v3364 = vpow.pop %v3363
        %v3365 = vmul.f32 %v3338, 1.442695
        %v3366 = vpow.pop %v3365
        %v3367 = vmul.f32 %v3339, 1.442695
        %v3368 = vpow.pop %v3367
        %v3369 = vmul.f32 %v3340, 1.442695
        %v3370 = vpow.pop %v3369
        %v3371 = vmul.f32 %v3341, 1.442695
        %v3372 = vpow.pop %v3371
        %v3373 = vmul.f32 %v3342, 1.442695
        %v3374 = vpow.pop %v3373
        %v3375 = vmul.f32 %v3295, %v3344
        %v3376 = vmul.f32 %v3296, %v3346
        %v3377 = vmul.f32 %v3297, %v3348
        %v3378 = vmul.f32 %v3298, %v3350
        %v3379 = vmul.f32 %v3299, %v3352
        %v3380 = vmul.f32 %v3300, %v3354
        %v3381 = vmul.f32 %v3301, %v3356
        %v3382 = vmul.f32 %v3302, %v3358
        %v3383 = vmul.f32 %v3303, %v3360
        %v3384 = vmul.f32 %v3304, %v3362
        %v3385 = vmul.f32 %v3305, %v3364
        %v3386 = vmul.f32 %v3306, %v3366
        %v3387 = vmul.f32 %v3307, %v3368
        %v3388 = vmul.f32 %v3308, %v3370
        %v3389 = vmul.f32 %v3309, %v3372
        %v3390 = vmul.f32 %v3310, %v3374
        %v3391 = vsub.f32 1.0, %v3375
        %v3392 = vsub.f32 1.0, %v3376
        %v3393 = vsub.f32 1.0, %v3377
        %v3394 = vsub.f32 1.0, %v3378
        %v3395 = vsub.f32 1.0, %v3379
        %v3396 = vsub.f32 1.0, %v3380
        %v3397 = vsub.f32 1.0, %v3381
        %v3398 = vsub.f32 1.0, %v3382
        %v3399 = vsub.f32 1.0, %v3383
        %v3400 = vsub.f32 1.0, %v3384
        %v3401 = vsub.f32 1.0, %v3385
        %v3402 = vsub.f32 1.0, %v3386
        %v3403 = vsub.f32 1.0, %v3387
        %v3404 = vsub.f32 1.0, %v3388
        %v3405 = vsub.f32 1.0, %v3389
        %v3406 = vsub.f32 1.0, %v3390
        %vm3407 = vcmp.ge.f32.partialorder %v3071, 0.0
        %vm3408 = vcmp.ge.f32.partialorder %v3072, 0.0
        %vm3409 = vcmp.ge.f32.partialorder %v3073, 0.0
        %vm3410 = vcmp.ge.f32.partialorder %v3074, 0.0
        %vm3411 = vcmp.ge.f32.partialorder %v3075, 0.0
        %vm3412 = vcmp.ge.f32.partialorder %v3076, 0.0
        %vm3413 = vcmp.ge.f32.partialorder %v3077, 0.0
        %vm3414 = vcmp.ge.f32.partialorder %v3078, 0.0
        %vm3415 = vcmp.ge.f32.partialorder %v3079, 0.0
        %vm3416 = vcmp.ge.f32.partialorder %v3080, 0.0
        %vm3417 = vcmp.ge.f32.partialorder %v3081, 0.0
        %vm3418 = vcmp.ge.f32.partialorder %v3082, 0.0
        %vm3419 = vcmp.ge.f32.partialorder %v3083, 0.0
        %vm3420 = vcmp.ge.f32.partialorder %v3084, 0.0
        %vm3421 = vcmp.ge.f32.partialorder %v3085, 0.0
        %vm3422 = vcmp.ge.f32.partialorder %v3086, 0.0
        %v3423 = vsub.f32 0.0, %v3391
        %v3424 = vsub.f32 0.0, %v3392
        %v3425 = vsub.f32 0.0, %v3393
        %v3426 = vsub.f32 0.0, %v3394
        %v3427 = vsub.f32 0.0, %v3395
        %v3428 = vsub.f32 0.0, %v3396
        %v3429 = vsub.f32 0.0, %v3397
        %v3430 = vsub.f32 0.0, %v3398
        %v3431 = vsub.f32 0.0, %v3399
        %v3432 = vsub.f32 0.0, %v3400
        %v3433 = vsub.f32 0.0, %v3401
        %v3434 = vsub.f32 0.0, %v3402
        %v3435 = vsub.f32 0.0, %v3403
        %v3436 = vsub.f32 0.0, %v3404
        %v3437 = vsub.f32 0.0, %v3405
        %v3438 = vsub.f32 0.0, %v3406
        %v3439 = vsel %vm3407, %v3391, %v3423
        %v3440 = vsel %vm3408, %v3392, %v3424
        %v3441 = vsel %vm3409, %v3393, %v3425
        %v3442 = vsel %vm3410, %v3394, %v3426
        %v3443 = vsel %vm3411, %v3395, %v3427
        %v3444 = vsel %vm3412, %v3396, %v3428
        %v3445 = vsel %vm3413, %v3397, %v3429
        %v3446 = vsel %vm3414, %v3398, %v3430
        %v3447 = vsel %vm3415, %v3399, %v3431
        %v3448 = vsel %vm3416, %v3400, %v3432
        %v3449 = vsel %vm3417, %v3401, %v3433
        %v3450 = vsel %vm3418, %v3402, %v3434
        %v3451 = vsel %vm3419, %v3403, %v3435
        %v3452 = vsel %vm3420, %v3404, %v3436
        %v3453 = vsel %vm3421, %v3405, %v3437
        %v3454 = vsel %vm3422, %v3406, %v3438
        %v3455 = vadd.f32 %v3439, 1.0
        %v3456 = vadd.f32 %v3440, 1.0
        %v3457 = vadd.f32 %v3441, 1.0
        %v3458 = vadd.f32 %v3442, 1.0
        %v3459 = vadd.f32 %v3443, 1.0
        %v3460 = vadd.f32 %v3444, 1.0
        %v3461 = vadd.f32 %v3445, 1.0
        %v3462 = vadd.f32 %v3446, 1.0
        %v3463 = vadd.f32 %v3447, 1.0
        %v3464 = vadd.f32 %v3448, 1.0
        %v3465 = vadd.f32 %v3449, 1.0
        %v3466 = vadd.f32 %v3450, 1.0
        %v3467 = vadd.f32 %v3451, 1.0
        %v3468 = vadd.f32 %v3452, 1.0
        %v3469 = vadd.f32 %v3453, 1.0
        %v3470 = vadd.f32 %v3454, 1.0
        %v3471 = vmul.f32 %v3055, %v3455
        %v3472 = vmul.f32 %v3056, %v3456
        %v3473 = vmul.f32 %v3057, %v3457
        %v3474 = vmul.f32 %v3058, %v3458
        %v3475 = vmul.f32 %v3059, %v3459
        %v3476 = vmul.f32 %v3060, %v3460
        %v3477 = vmul.f32 %v3061, %v3461
        %v3478 = vmul.f32 %v3062, %v3462
        %v3479 = vmul.f32 %v3063, %v3463
        %v3480 = vmul.f32 %v3064, %v3464
        %v3481 = vmul.f32 %v3065, %v3465
        %v3482 = vmul.f32 %v3066, %v3466
        %v3483 = vmul.f32 %v3067, %v3467
        %v3484 = vmul.f32 %v3068, %v3468
        %v3485 = vmul.f32 %v3069, %v3469
        %v3486 = vmul.f32 %v3070, %v3470
        %v3487 = vpack.c.bf16 %v3472, %v3471
        %v3488 = vpack.c.bf16 %v3474, %v3473
        %v3489 = vpack.c.bf16 %v3476, %v3475
        %v3490 = vpack.c.bf16 %v3478, %v3477
        %v3491 = vpack.c.bf16 %v3480, %v3479
        %v3492 = vpack.c.bf16 %v3482, %v3481
        %v3493 = vpack.c.bf16 %v3484, %v3483
        %v3494 = vpack.c.bf16 %v3486, %v3485
        %3495 = vset.pattern.permute.xlu0 5
        %3496 = vperm.xlu0 %3495, %v427
        %v3497 = vpop.permute.xlu0 %3496
        %3499 = vset.pattern.permute.xlu0 5
        %3500 = vperm.xlu0 %3499, %v428
        %v3501 = vpop.permute.xlu0 %3500
        %3503 = vset.pattern.permute.xlu0 5
        %3504 = vperm.xlu0 %3503, %v429
        %v3505 = vpop.permute.xlu0 %3504
        %3507 = vset.pattern.permute.xlu0 5
        %3508 = vperm.xlu0 %3507, %v430
        %v3509 = vpop.permute.xlu0 %3508
        %v3515 = vunpack.c.l.b16 %v499
        %v3516 = vunpack.c.l.b16 %v500
        %v3517 = vunpack.c.l.b16 %v501
        %v3518 = vunpack.c.l.b16 %v502
        %v3519 = vpack.c.b16 %v3516, %v3515
        %v3520 = vpack.c.b16 %v3518, %v3517
        %3523 = vmatprep.subr.bf16.mxu0 0
        %3524 = vmatpush1.bf16.msra.mxu0 %v3487
        %3525 = vmatprep.subr.bf16.mxu0 0
        %3526 = vmatpush1.bf16.msra.mxu0 %v3488
        %3527 = vmatprep.subr.bf16.mxu0 0
        %3528 = vmatpush1.bf16.msra.mxu0 %v3489
        %3529 = vmatprep.subr.bf16.mxu0 0
        %3530 = vmatpush1.bf16.msra.mxu0 %v3490
        %3531 = vmatprep.subr.bf16.mxu0 0
        %3532 = vmatpush1.bf16.msra.mxu0 %v3491
        %3533 = vmatprep.subr.bf16.mxu0 0
        %3534 = vmatpush1.bf16.msra.mxu0 %v3492
        %3535 = vmatprep.subr.bf16.mxu0 0
        %3536 = vmatpush1.bf16.msra.mxu0 %v3493
        %3537 = vmatprep.subr.bf16.mxu0 0
        %3538 = vmatpush1.bf16.msra.mxu0 %v3494
        %3539 = vmatprep.subr.bf16.mxu0 0
        %3540 = vmatpush1.bf16.msra.mxu0 0
        %3541 = vmatprep.subr.bf16.mxu0 0
        %3542 = vmatpush1.bf16.msra.mxu0 0
        %3543 = vmatprep.subr.bf16.mxu0 0
        %3544 = vmatpush1.bf16.msra.mxu0 0
        %3545 = vmatprep.subr.bf16.mxu0 0
        %3546 = vmatpush1.bf16.msra.mxu0 0
        %3547 = vmatprep.subr.bf16.mxu0 0
        %3548 = vmatpush1.bf16.msra.mxu0 0
        %3549 = vmatprep.subr.bf16.mxu0 0
        %3550 = vmatpush1.bf16.msra.mxu0 0
        %3551 = vmatprep.subr.bf16.mxu0 0
        %3552 = vmatpush1.bf16.msra.mxu0 0
        %3553 = vmatprep.subr.bf16.mxu0 0
        %3554 = vmatpush1.bf16.msra.mxu0 0
        %3555 = vmatprep.mubr.bf16.mxu0 0
        %3556 = vmatmul.mubr.bf16.gmra.mrb[0].mxu0 %v3519
        %v3557 = vpop.f32.mrb[0].mxu0
        %v3558 = vadd.f32 %v3497, %v3557
        %v3559 = vpop.f32.mrb[0].mxu0
        %v3560 = vpop.f32.mrb[0].mxu0
        %v3561 = vadd.f32 %v3501, %v3560
        %v3562 = vpop.f32.mrb[0].mxu0
        %3563 = vmatprep.mubr.bf16.mxu0 0
        %3564 = vmatmul.mubr.bf16.gmra.mrb[0].mxu0 %v3520
        %v3565 = vpop.f32.mrb[0].mxu0
        %v3566 = vadd.f32 %v3505, %v3565
        %v3567 = vpop.f32.mrb[0].mxu0
        %v3568 = vpop.f32.mrb[0].mxu0
        %v3569 = vadd.f32 %v3509, %v3568
        %v3570 = vpop.f32.mrb[0].mxu0
        %3571 = vdwg.mxu0
        %v3572 = vadd.f32 %v2738, %v3558
        %v3573 = vadd.f32 %v2739, %v3561
        %v3574 = vadd.f32 %v2740, %v3566
        %v3575 = vadd.f32 %v2741, %v3569
        %3576 = vst [vmem:[#allocation2] sm:$0xff] %v3572
        %3577 = vst [vmem:[#allocation2 + $0x8] sm:$0xff] %v3573
        %3578 = vst [vmem:[#allocation2 + $0x10] sm:$0xff] %v3574
        %3579 = vst [vmem:[#allocation2 + $0x18] sm:$0xff] %v3575
        %p3580 = scmp.eq.s32.totalorder %s26, 1
        // Predicated region
        $region53: #{tpu_custom_call.1} parent=47 // pred_check
          %p3581 = pneg %p3580
        $region54: #{tpu_custom_call.1} parent=47 // pred_check_branch
          %3583 = sbr.rel (%p3581) target = $region56
        $region55: #{tpu_custom_call.1} parent=47 // pred_region
          %3584 = vst [vmem:[%s373] sm:$0xff] %v3572
          %3585 = vst [vmem:[%s373 + $0x8] sm:$0xff] %v3573
          %3586 = vst [vmem:[%s373 + $0x10] sm:$0xff] %v3574
          %3587 = vst [vmem:[%s373 + $0x18] sm:$0xff] %v3575
        $region56: #{tpu_custom_call.1} parent=47 // pred_fallthru
          _
        %s3588 = sand.u32 %s223, 1
        %s3589 = scalar_lea.sflag [#allocation4], %s3588
        %s3590 = sand.u32 %s223, 1
        %s3591 = smul.addr %s3590, 32
        %s3592 = scalar_lea.vmem [#allocation3], %s3591
        // Predicated region
        $region57: #{tpu_custom_call.1} parent=47 // pred_check
          %p3593 = pneg %p233
        $region58: #{tpu_custom_call.1} parent=47 // pred_check_branch
          %3595 = sbr.rel (%p3593) target = $region60
        $region59: #{tpu_custom_call.1} parent=47 // pred_region
          %s3597 = ssub.s32 512, 512
          %3598 = vsyncadd %s3589, %s3597
          %s3599 = smul.addr %s25, 4
          %s3600 = smul.addr %s3599, 128
          %s3601 = scalar_lea.hbm %s7, %s3600
          %s3602 = sshll.u32 %s3592, 4
          %s3603 = int_to_ptr.vmem [resolvable:$true] %s3602
          %3608 = dma.vmem_to_hbm [thread:$0]  %s3603, 512, %s3601, %s3589, 128, 128, 8
        $region60: #{tpu_custom_call.1} parent=47 // pred_fallthru
          _
      $region48: #{tpu_custom_call.1} parent=5 // pred_fallthru
        _
      %p3609 = scmp.le.s32.totalorder 2, %s16
      // Predicated region
      $region61: #{tpu_custom_call.1} parent=5 // pred_check
        %p3610 = pneg %p3609
      $region62: #{tpu_custom_call.1} parent=5 // pred_check_branch
        %3612 = sbr.rel (%p3610) target = $region64
      $region63: #{tpu_custom_call.1} parent=5 // pred_region
        %s3613 = ssub.s32 %s16, 2
        // Predicated region
        $region65: #{tpu_custom_call.1} parent=63 // pred_check
          %p3614 = pneg %p239
        $region66: #{tpu_custom_call.1} parent=63 // pred_check_branch
          %3616 = sbr.rel (%p3614) target = $region68
        $region67: #{tpu_custom_call.1} parent=63 // pred_region
          %s3617 = sand.u32 %s224, 1
          %s3618 = scalar_lea.sflag [#allocation4], %s3617
          %s3619 = sand.u32 %s224, 1
          %s3620 = smul.addr %s3619, 32
          %s3621 = scalar_lea.vmem [#allocation3], %s3620
          %3622 = dma.done %s3618, 512
        $region68: #{tpu_custom_call.1} parent=63 // pred_fallthru
          _
      $region64: #{tpu_custom_call.1} parent=5 // pred_fallthru
        _
    $region6: #{tpu_custom_call.1} parent=1 // loop_footer
      %s20 = sadd.s32 1, %s16
    $region7: #{tpu_custom_call.1} parent=1 // loop_footer_branch
      %15 = sbr.rel target = $region3
    $region8: #{tpu_custom_call.1} parent=1 // loop_exit
      _
    %3623 = vsyncpa [#allocation4], 1
    %s3624 = scalar_lea.sflag [#allocation4], 1
    %3625 = vsyncpa %s3624, 1

</llo_original>
